<compile_context>
chip_gen: v7x
topology: tpu7x:2x2x1
jax: 0.10.0
libtpu: 0.0.40
codegen_flags: <defaults>
</compile_context>

<pallas_src>
import jax
import jax.numpy as jnp
from jax import lax
from jax.experimental import pallas as pl
from jax.experimental.pallas import tpu as pltpu


def _round_up(x, m):
    return ((x + m - 1) // m) * m


# ---------------------------------------------------------------------------
# Fused residual-block kernel (built per static configuration)
# ---------------------------------------------------------------------------

def _make_fused_block_kernel(*, stride, Wo, Wp, M1, G1, Cin, Cp,
                             has_projection, compute_dtype):
    """M1 = Ho * Wp rows (pitch Wp, columns >= Wo are throw-away)."""
    taps = [(dy, dx) for dy in range(3) for dx in range(3)]
    n_phase = stride * stride

    def kernel(*refs):
        phase_refs = refs[:n_phase]
        col_ref, w1_ref, b1_ref, w2_ref, b2_ref = refs[n_phase:n_phase + 5]
        k = n_phase + 5
        wsc_ref = None
        if has_projection:
            wsc_ref = refs[k]
            k += 1
        o_ref = refs[k]
        lhs1_scr, y1_scr, acc2_scr = refs[k + 1:k + 4]

        # ---- conv1 (bn1 scale folded): ONE GEMM with K = 9*Cin -----------
        # Build the (M1, 9*Cin) lhs once from the stride-phase slices.
        for t, (dy, dx) in enumerate(taps):
            ph = phase_refs[(dy % stride) * stride + (dx % stride)]
            shift = (dy // stride) * Wp + (dx // stride)
            lhs1_scr[:, t * Cin:(t + 1) * Cin] = ph[0, shift:shift + M1, :]
        acc1 = jnp.dot(lhs1_scr[...], w1_ref[...],
                       preferred_element_type=jnp.float32)
        y1 = jnp.maximum(acc1 + b1_ref[...], 0.0)             # (M1, Cp) f32
        # TODO(synk): dropout1 / dropout2 (rate 0.0) are identity.

        # Zero the junk columns (col >= Wo) ONCE; combined with the zero guard
        # rows this makes every conv2 border mask unnecessary.
        y1 = jnp.where(col_ref[...] < Wo, y1, 0.0)

        # Re-zero only the 2*G1 guard rows each step (interior fully rewritten;
        # doing it every step keeps it correct when the grid is core-sharded).
        zeros_g = jnp.zeros((G1, Cp), compute_dtype)
        y1_scr[0:G1, :] = zeros_g
        y1_scr[M1 + G1:M1 + 2 * G1, :] = zeros_g
        y1_scr[G1:G1 + M1, :] = y1.astype(compute_dtype)

        # ---- conv2 (bn2 scale folded): 9 K=Cp GEMMs, f32 VMEM accumulator --
        for t, (dy, dx) in enumerate(taps):
            d = (dy - 1) * Wp + (dx - 1)
            src = y1_scr[G1 + d:G1 + d + M1, :]                # (M1, Cp) bf16
            p = jnp.dot(src, w2_ref[t], preferred_element_type=jnp.float32)
            if t == 0:
                acc2_scr[...] = p
            else:
                acc2_scr[...] += p

        # ---- shortcut + bias + ReLU epilogue -------------------------------
        a_sc = 1 % stride
        off = (1 - a_sc) // stride
        shift_sc = off * Wp + off
        xs = phase_refs[a_sc * stride + a_sc][0, shift_sc:shift_sc + M1, :]
        z = acc2_scr[...] + b2_ref[...]                        # (M1, Cp) f32
        if has_projection:
            z = z + jnp.dot(xs, wsc_ref[...],
                            preferred_element_type=jnp.float32)
            o_ref[0] = jnp.maximum(z, 0.0).astype(o_ref.dtype)
        elif Cp == Cin:
            o_ref[0] = jnp.maximum(z + xs.astype(jnp.float32),
                                   0.0).astype(o_ref.dtype)
        else:
            # Identity shortcut with lane padding: no (M1, Cp) zero-padded
            # copy -- add the residual into the first Cin lanes only.
            o_ref[0] = jnp.maximum(z, 0.0).astype(o_ref.dtype)
            o_ref[0, :, :Cin] = jnp.maximum(
                z[:, :Cin] + xs.astype(jnp.float32), 0.0).astype(o_ref.dtype)

    return kernel


# ---------------------------------------------------------------------------
# Parameter folding helpers (plain JAX, done once per call)
# ---------------------------------------------------------------------------

def _fold_bn(bn, eps=1e-5):
    scale = (bn["gamma"] / jnp.sqrt(bn["var"] + eps)).astype(jnp.float32)
    bias = (bn["beta"] - bn["mean"] * scale).astype(jnp.float32)
    return scale, bias


def _conv3x3_taps(w_oihw, scale, c_in_pad, c_out_pad, dtype):
    """(O, I, 3, 3), per-O scale -> (9, c_in_pad, c_out_pad); tap t = dy*3+dx."""
    O, I, _, _ = w_oihw.shape
    w = w_oihw * scale[:, None, None, None]
    t = jnp.transpose(w, (2, 3, 1, 0)).reshape(9, I, O)
    t = jnp.pad(t, ((0, 0), (0, c_in_pad - I), (0, c_out_pad - O)))
    return t.astype(dtype)


# ---------------------------------------------------------------------------
# Wrapper
# ---------------------------------------------------------------------------

def iresidual_block_forward(x_nchw, params, stride, *,
                            compute_dtype=jnp.bfloat16,
                            out_dtype=jnp.float32):
    N, Cin, H, W = x_nchw.shape
    Cout = params["w1"].shape[0]

    # Cast to bf16 BEFORE layout change / phase materialization (halves the
    # wrapper-side HBM traffic).  Accumulation stays f32 inside the kernel.
    x = jnp.transpose(x_nchw.astype(compute_dtype), (0, 2, 3, 1))   # NHWC

    Ho = (H - 1) // stride + 1
    Wo = (W - 1) // stride + 1
    LANE = 128
    Cp = _round_up(Cout, LANE)                    # lane-dense output channels
    Hp = -((-(H + 2)) // stride)
    Wp = _round_up(-((-(W + 2)) // stride), 8)    # sublane-aligned row pitch
    M1 = Ho * Wp
    G1 = _round_up(Wp + 1, 8)                     # guard rows for conv2 halo
    # The mask-free conv2 relies on these (see kernel comments).
    assert Wp >= Wo + 1 and G1 >= Wp + 1, (Wp, Wo, G1)

    has_projection = "wsc" in params
    if not has_projection:
        assert stride == 1 and Cin == Cout, \
            "identity shortcut requires stride == 1 and Cin == Cout"

    # ---- space-to-batch (phase) decomposition of the zero-padded input -----
    # TODO(synk): move the phase selection into the kernel (strided pl.ds /
    # 4-D index_map) to avoid materializing stride^2 phase tensors in HBM.
    xp = jnp.pad(x, ((0, 0), (1, 1), (1, 1), (0, 0)))
    phases = []
    for a in range(stride):
        for b in range(stride):
            ph = xp[:, a::stride, b::stride, :]
            ph = jnp.pad(ph, ((0, 0), (0, Hp + 3 - ph.shape[1]),
                              (0, Wp - ph.shape[2]), (0, 0)))
            phases.append(ph.reshape(N, (Hp + 3) * Wp, Cin))
    Lp = (Hp + 3) * Wp

    # ---- fold BN scales into GEMM weights; biases stay in the f32 epilogue -
    s1, b1 = _fold_bn(params["bn1"])
    s2, b2 = _fold_bn(params["bn2"])
    # conv1 weight as a single (9*Cin, Cp) matrix: row index = tap*Cin + cin,
    # matching the lhs scratch built in the kernel.
    w1_flat = _conv3x3_taps(params["w1"], s1, Cin, Cp,
                            compute_dtype).reshape(9 * Cin, Cp)
    w2_taps = _conv3x3_taps(params["w2"], s2, Cp, Cp, compute_dtype)
    b1p = jnp.pad(b1, (0, Cp - Cout))[None, :]
    if has_projection:
        ssc, bsc = _fold_bn(params["bnsc"])
        wsc = (params["wsc"][:, :, 0, 0] * ssc[:, None]).T        # (Cin, Cout)
        wsc = jnp.pad(wsc, ((0, 0), (0, Cp - Cout))).astype(compute_dtype)
        b2p = jnp.pad(b2 + bsc, (0, Cp - Cout))[None, :]
    else:
        wsc = None
        b2p = jnp.pad(b2, (0, Cp - Cout))[None, :]

    # precomputed column indices (no integer div/mod inside the kernel)
    col_idx = (jnp.arange(M1, dtype=jnp.int32) % Wp)[:, None]     # (M1, 1)

    # ---- specs --------------------------------------------------------------
    phase_spec = pl.BlockSpec((1, Lp, Cin), lambda n: (n, 0, 0))
    res2 = lambda n: (0, 0)        # constant index maps -> operands stay resident
    res3 = lambda n: (0, 0, 0)

    in_specs = [phase_spec] * len(phases) + [
        pl.BlockSpec((M1, 1), res2),            # col indices
        pl.BlockSpec((9 * Cin, Cp), res2),      # conv1 weight (bn1 folded)
        pl.BlockSpec((1, Cp), res2),            # bn1 bias
        pl.BlockSpec((9, Cp, Cp), res3),        # conv2 weights (bn2 folded)
        pl.BlockSpec((1, Cp), res2),            # bn2 (+ shortcut bn) bias
    ]
    args = list(phases) + [col_idx, w1_flat, b1p, w2_taps, b2p]
    if has_projection:
        in_specs.append(pl.BlockSpec((Cin, Cp), res2))
        args.append(wsc)

    out_specs = pl.BlockSpec((1, M1, Cp), lambda n: (n, 0, 0))
    out_shape = jax.ShapeDtypeStruct((N, M1, Cp), out_dtype)

    scratch_shapes = [
        pltpu.VMEM((M1, 9 * Cin), compute_dtype),       # conv1 K=9*Cin lhs
        pltpu.VMEM((M1 + 2 * G1, Cp), compute_dtype),   # guard-padded y1
        pltpu.VMEM((M1, Cp), jnp.float32),              # conv2 accumulator
    ]

    # ---- VMEM budget / cost hint --------------------------------------------
    def _nbytes(a):
        return a.size * a.dtype.itemsize

    out_isize = jnp.dtype(out_dtype).itemsize
    resident_bytes = sum(_nbytes(a) for a in args[len(phases):])
    per_step_bytes = (sum(_nbytes(p) // N for p in phases)
                      + M1 * Cp * out_isize)
    scratch_bytes = (M1 * 9 * Cin * 2 + (M1 + 2 * G1) * Cp * 2 + M1 * Cp * 4)
    est = 2 * per_step_bytes + 2 * resident_bytes + scratch_bytes + (8 << 20)
    try:
        phys_vmem = int(pltpu.get_tpu_info().vmem_capacity_bytes)
    except Exception:
        phys_vmem = 64 * 1024 * 1024
    # leave ~25% headroom below physical VMEM (64 MiB/TC v7x, 128 MiB v5e/v6e)
    vmem_limit = int(min(max(est, 32 << 20), (phys_vmem * 3) // 4))

    flops = 2 * N * M1 * Cp * (9 * Cin + 9 * Cp
                               + (Cin if has_projection else 0))
    bytes_accessed = sum(_nbytes(a) for a in args) + N * M1 * Cp * out_isize
    cost = pl.CostEstimate(flops=int(flops), transcendentals=0,
                           bytes_accessed=int(bytes_accessed))

    kernel = _make_fused_block_kernel(
        stride=stride, Wo=Wo, Wp=Wp, M1=M1, G1=G1, Cin=Cin, Cp=Cp,
        has_projection=has_projection, compute_dtype=compute_dtype)

    out = pl.pallas_call(
        kernel,
        out_shape=out_shape,
        grid_spec=pltpu.PrefetchScalarGridSpec(
            num_scalar_prefetch=0,
            grid=(N,),
            in_specs=in_specs,
            out_specs=out_specs,
            scratch_shapes=scratch_shapes,
        ),
        compiler_params=pltpu.CompilerParams(
            dimension_semantics=("parallel",),
            vmem_limit_bytes=vmem_limit),
        cost_estimate=cost,
    )(*args)

    out = out.reshape(N, Ho, Wp, Cp)[:, :, :Wo, :Cout]
    return jnp.transpose(out, (0, 3, 1, 2)).astype(jnp.float32)   # NCHW


# ---------------------------------------------------------------------------
# Deterministic parameter init + pure-JAX reference
# ---------------------------------------------------------------------------

def _bn_init(key, c):
    k1, k2, k3, k4 = jax.random.split(key, 4)
    return {
        "gamma": 1.0 + 0.1 * jax.random.normal(k1, (c,), jnp.float32),
        "beta": 0.1 * jax.random.normal(k2, (c,), jnp.float32),
        "mean": 0.1 * jax.random.normal(k3, (c,), jnp.float32),
        "var": 1.0 + 0.1 * jax.random.uniform(k4, (c,), jnp.float32),
    }


def init_params(key, in_channels, out_channels, stride):
    k = jax.random.split(key, 6)
    params = {
        "w1": 0.1 * jax.random.normal(
            k[0], (out_channels, in_channels, 3, 3), jnp.float32),
        "bn1": _bn_init(k[1], out_channels),
        "w2": 0.1 * jax.random.normal(
            k[2], (out_channels, out_channels, 3, 3), jnp.float32),
        "bn2": _bn_init(k[3], out_channels),
    }
    if stride != 1 or in_channels != out_channels:
        params["wsc"] = 0.1 * jax.random.normal(
            k[4], (out_channels, in_channels, 1, 1), jnp.float32)
        params["bnsc"] = _bn_init(k[5], out_channels)
    return params


def _bn_ref(y, bn, eps=1e-5):
    s = bn["gamma"] / jnp.sqrt(bn["var"] + eps)
    b = bn["beta"] - bn["mean"] * s
    return y * s[None, :, None, None] + b[None, :, None, None]


def ref_forward(x, params, stride):
    dn = ("NCHW", "OIHW", "NCHW")
    y = lax.conv_general_dilated(x, params["w1"], (stride, stride),
                                 ((1, 1), (1, 1)), dimension_numbers=dn)
    y = jnp.maximum(_bn_ref(y, params["bn1"]), 0.0)
    y2 = lax.conv_general_dilated(y, params["w2"], (1, 1),
                                  ((1, 1), (1, 1)), dimension_numbers=dn)
    y2 = _bn_ref(y2, params["bn2"])
    if "wsc" in params:
        sc = lax.conv_general_dilated(x, params["wsc"], (stride, stride),
                                      ((0, 0), (0, 0)), dimension_numbers=dn)
        sc = _bn_ref(sc, params["bnsc"])
    else:
        sc = x
    return jnp.maximum(y2 + sc, 0.0)


if __name__ == "__main__":
    key = jax.random.PRNGKey(0)
    kx1, kp1, kx2, kp2 = jax.random.split(key, 4)

    fwd = jax.jit(iresidual_block_forward, static_argnums=2)

    # Case 1: projection shortcut (stride 2, channel expansion 4 -> 8)
    x1 = jax.random.normal(kx1, (2, 4, 16, 16), jnp.float32)       # NCHW
    p1 = init_params(kp1, 4, 8, 2)
    out1 = jax.block_until_ready(fwd(x1, p1, 2))
    ref1 = ref_forward(x1, p1, 2)
    assert out1.shape == ref1.shape == (2, 8, 8, 8), (out1.shape, ref1.shape)
    err1 = float(jnp.max(jnp.abs(out1 - ref1)))
    # bf16 GEMM operands + bf16 inter-conv activation (f32 accumulation)
    assert err1 < 6e-2, f"projection path: max abs error {err1}"

    # Case 2: identity shortcut (stride 1, 8 -> 8)
    x2 = jax.random.normal(kx2, (2, 8, 16, 16), jnp.float32)
    p2 = init_params(kp2, 8, 8, 1)
    out2 = jax.block_until_ready(fwd(x2, p2, 1))
    ref2 = ref_forward(x2, p2, 1)
    assert out2.shape == ref2.shape == (2, 8, 16, 16), (out2.shape, ref2.shape)
    err2 = float(jnp.max(jnp.abs(out2 - ref2)))
    assert err2 < 6e-2, f"identity path: max abs error {err2}"

    print("KERNEL_OK")
</pallas_src>

<mosaic_0001>
module attributes {stable_mosaic.version = 11 : i64} {
  func.func @kernel(%arg0: i32, %arg1: memref<1x192x4xbf16, #tpu.memory_space<vmem>>, %arg2: memref<1x192x4xbf16, #tpu.memory_space<vmem>>, %arg3: memref<1x192x4xbf16, #tpu.memory_space<vmem>>, %arg4: memref<1x192x4xbf16, #tpu.memory_space<vmem>>, %arg5: memref<128x1xi32, #tpu.memory_space<vmem>>, %arg6: memref<36x128xbf16, #tpu.memory_space<vmem>>, %arg7: memref<1x128xf32, #tpu.memory_space<vmem>>, %arg8: memref<9x128x128xbf16, #tpu.memory_space<vmem>>, %arg9: memref<1x128xf32, #tpu.memory_space<vmem>>, %arg10: memref<4x128xbf16, #tpu.memory_space<vmem>>, %arg11: memref<1x128x128xf32, #tpu.memory_space<vmem>>, %arg12: memref<128x36xbf16, #tpu.memory_space<vmem>>, %arg13: memref<176x128xbf16, #tpu.memory_space<vmem>>, %arg14: memref<128x128xf32, #tpu.memory_space<vmem>>) attributes {dimension_semantics = [#tpu.dimension_semantics<parallel>], iteration_bounds = array<i64: 2>, scalar_prefetch = 0 : i64, scratch_operands = 3 : i64, tpu.core_type = #tpu.core_type<tc>, window_params = [{transform_indices = @transform_0, window_bounds = array<i64: 1, 192, 4>}, {transform_indices = @transform_1, window_bounds = array<i64: 1, 192, 4>}, {transform_indices = @transform_2, window_bounds = array<i64: 1, 192, 4>}, {transform_indices = @transform_3, window_bounds = array<i64: 1, 192, 4>}, {pipeline_mode = #tpu.pipeline_mode<synchronous>, transform_indices = @transform_4, window_bounds = array<i64: 128, 1>}, {pipeline_mode = #tpu.pipeline_mode<synchronous>, transform_indices = @transform_5, window_bounds = array<i64: 36, 128>}, {pipeline_mode = #tpu.pipeline_mode<synchronous>, transform_indices = @transform_6, window_bounds = array<i64: 1, 128>}, {pipeline_mode = #tpu.pipeline_mode<synchronous>, transform_indices = @transform_7, window_bounds = array<i64: 9, 128, 128>}, {pipeline_mode = #tpu.pipeline_mode<synchronous>, transform_indices = @transform_8, window_bounds = array<i64: 1, 128>}, {pipeline_mode = #tpu.pipeline_mode<synchronous>, transform_indices = @transform_9, window_bounds = array<i64: 4, 128>}, {transform_indices = @transform_10, window_bounds = array<i64: 1, 128, 128>}]} {
    %c0 = arith.constant 0 : index
    %c0_0 = arith.constant 0 : index
    %c0_1 = arith.constant 0 : index
    %0 = vector.load %arg1[%c0, %c0_0, %c0_1] : memref<1x192x4xbf16, #tpu.memory_space<vmem>>, vector<1x128x4xbf16>
    %1 = vector.shape_cast %0 : vector<1x128x4xbf16> to vector<128x4xbf16>
    %c0_2 = arith.constant 0 : index
    %c0_3 = arith.constant 0 : index
    %2 = vector.load %arg12[%c0_2, %c0_3] : memref<128x36xbf16, #tpu.memory_space<vmem>>, vector<128x4xbf16>
    tpu.vector_store %arg12[%c0_2, %c0_3], %1 {strides = array<i32>} : memref<128x36xbf16, #tpu.memory_space<vmem>>, vector<128x4xbf16>,
    %c0_4 = arith.constant 0 : index
    %c0_5 = arith.constant 0 : index
    %c0_6 = arith.constant 0 : index
    %3 = vector.load %arg2[%c0_4, %c0_5, %c0_6] : memref<1x192x4xbf16, #tpu.memory_space<vmem>>, vector<1x128x4xbf16>
    %4 = vector.shape_cast %3 : vector<1x128x4xbf16> to vector<128x4xbf16>
    %c0_7 = arith.constant 0 : index
    %c4 = arith.constant 4 : index
    %5 = vector.load %arg12[%c0_7, %c4] : memref<128x36xbf16, #tpu.memory_space<vmem>>, vector<128x4xbf16>
    tpu.vector_store %arg12[%c0_7, %c4], %4 {strides = array<i32>} : memref<128x36xbf16, #tpu.memory_space<vmem>>, vector<128x4xbf16>,
    %c0_8 = arith.constant 0 : index
    %c1 = arith.constant 1 : index
    %c0_9 = arith.constant 0 : index
    %6 = vector.load %arg1[%c0_8, %c1, %c0_9] : memref<1x192x4xbf16, #tpu.memory_space<vmem>>, vector<1x128x4xbf16>
    %7 = vector.shape_cast %6 : vector<1x128x4xbf16> to vector<128x4xbf16>
    %c0_10 = arith.constant 0 : index
    %c8 = arith.constant 8 : index
    %8 = vector.load %arg12[%c0_10, %c8] : memref<128x36xbf16, #tpu.memory_space<vmem>>, vector<128x4xbf16>
    tpu.vector_store %arg12[%c0_10, %c8], %7 {strides = array<i32>} : memref<128x36xbf16, #tpu.memory_space<vmem>>, vector<128x4xbf16>,
    %c0_11 = arith.constant 0 : index
    %c0_12 = arith.constant 0 : index
    %c0_13 = arith.constant 0 : index
    %9 = vector.load %arg3[%c0_11, %c0_12, %c0_13] : memref<1x192x4xbf16, #tpu.memory_space<vmem>>, vector<1x128x4xbf16>
    %10 = vector.shape_cast %9 : vector<1x128x4xbf16> to vector<128x4xbf16>
    %c0_14 = arith.constant 0 : index
    %c12 = arith.constant 12 : index
    %11 = vector.load %arg12[%c0_14, %c12] : memref<128x36xbf16, #tpu.memory_space<vmem>>, vector<128x4xbf16>
    tpu.vector_store %arg12[%c0_14, %c12], %10 {strides = array<i32>} : memref<128x36xbf16, #tpu.memory_space<vmem>>, vector<128x4xbf16>,
    %c0_15 = arith.constant 0 : index
    %c0_16 = arith.constant 0 : index
    %c0_17 = arith.constant 0 : index
    %12 = vector.load %arg4[%c0_15, %c0_16, %c0_17] : memref<1x192x4xbf16, #tpu.memory_space<vmem>>, vector<1x128x4xbf16>
    %13 = vector.shape_cast %12 : vector<1x128x4xbf16> to vector<128x4xbf16>
    %c0_18 = arith.constant 0 : index
    %c16 = arith.constant 16 : index
    %14 = vector.load %arg12[%c0_18, %c16] : memref<128x36xbf16, #tpu.memory_space<vmem>>, vector<128x4xbf16>
    tpu.vector_store %arg12[%c0_18, %c16], %13 {strides = array<i32>} : memref<128x36xbf16, #tpu.memory_space<vmem>>, vector<128x4xbf16>,
    %c0_19 = arith.constant 0 : index
    %c1_20 = arith.constant 1 : index
    %c0_21 = arith.constant 0 : index
    %15 = vector.load %arg3[%c0_19, %c1_20, %c0_21] : memref<1x192x4xbf16, #tpu.memory_space<vmem>>, vector<1x128x4xbf16>
    %16 = vector.shape_cast %15 : vector<1x128x4xbf16> to vector<128x4xbf16>
    %c0_22 = arith.constant 0 : index
    %c20 = arith.constant 20 : index
    %17 = vector.load %arg12[%c0_22, %c20] : memref<128x36xbf16, #tpu.memory_space<vmem>>, vector<128x4xbf16>
    tpu.vector_store %arg12[%c0_22, %c20], %16 {strides = array<i32>} : memref<128x36xbf16, #tpu.memory_space<vmem>>, vector<128x4xbf16>,
    %c0_23 = arith.constant 0 : index
    %c16_24 = arith.constant 16 : index
    %c0_25 = arith.constant 0 : index
    %18 = vector.load %arg1[%c0_23, %c16_24, %c0_25] : memref<1x192x4xbf16, #tpu.memory_space<vmem>>, vector<1x128x4xbf16>
    %19 = vector.shape_cast %18 : vector<1x128x4xbf16> to vector<128x4xbf16>
    %c0_26 = arith.constant 0 : index
    %c24 = arith.constant 24 : index
    %20 = vector.load %arg12[%c0_26, %c24] : memref<128x36xbf16, #tpu.memory_space<vmem>>, vector<128x4xbf16>
    tpu.vector_store %arg12[%c0_26, %c24], %19 {strides = array<i32>} : memref<128x36xbf16, #tpu.memory_space<vmem>>, vector<128x4xbf16>,
    %c0_27 = arith.constant 0 : index
    %c16_28 = arith.constant 16 : index
    %c0_29 = arith.constant 0 : index
    %21 = vector.load %arg2[%c0_27, %c16_28, %c0_29] : memref<1x192x4xbf16, #tpu.memory_space<vmem>>, vector<1x128x4xbf16>
    %22 = vector.shape_cast %21 : vector<1x128x4xbf16> to vector<128x4xbf16>
    %c0_30 = arith.constant 0 : index
    %c28 = arith.constant 28 : index
    %23 = vector.load %arg12[%c0_30, %c28] : memref<128x36xbf16, #tpu.memory_space<vmem>>, vector<128x4xbf16>
    tpu.vector_store %arg12[%c0_30, %c28], %22 {strides = array<i32>} : memref<128x36xbf16, #tpu.memory_space<vmem>>, vector<128x4xbf16>,
    %c0_31 = arith.constant 0 : index
    %c17 = arith.constant 17 : index
    %c0_32 = arith.constant 0 : index
    %24 = vector.load %arg1[%c0_31, %c17, %c0_32] : memref<1x192x4xbf16, #tpu.memory_space<vmem>>, vector<1x128x4xbf16>
    %25 = vector.shape_cast %24 : vector<1x128x4xbf16> to vector<128x4xbf16>
    %c0_33 = arith.constant 0 : index
    %c32 = arith.constant 32 : index
    %26 = vector.load %arg12[%c0_33, %c32] : memref<128x36xbf16, #tpu.memory_space<vmem>>, vector<128x4xbf16>
    tpu.vector_store %arg12[%c0_33, %c32], %25 {strides = array<i32>} : memref<128x36xbf16, #tpu.memory_space<vmem>>, vector<128x4xbf16>,
    %c0_34 = arith.constant 0 : index
    %c0_35 = arith.constant 0 : index
    %27 = vector.load %arg12[%c0_34, %c0_35] : memref<128x36xbf16, #tpu.memory_space<vmem>>, vector<128x36xbf16>
    %c0_36 = arith.constant 0 : index
    %c0_37 = arith.constant 0 : index
    %28 = vector.load %arg6[%c0_36, %c0_37] : memref<36x128xbf16, #tpu.memory_space<vmem>>, vector<36x128xbf16>
    %cst = arith.constant dense<0.000000e+00> : vector<128x128xf32>
    %29 = tpu.matmul %27, %28, %cst {dimension_numbers = #tpu.dot_dimension_numbers<[1], [0], [0], [1], [0, 0, 1, 1], [], []>} : vector<128x36xbf16>, vector<36x128xbf16>, vector<128x128xf32> -> vector<128x128xf32>
    %c0_38 = arith.constant 0 : index
    %c0_39 = arith.constant 0 : index
    %30 = vector.load %arg7[%c0_38, %c0_39] : memref<1x128xf32, #tpu.memory_space<vmem>>, vector<1x128xf32>
    %31 = vector.broadcast %30 : vector<1x128xf32> to vector<128x128xf32>
    %32 = arith.addf %29, %31 : vector<128x128xf32>
    %cst_40 = arith.constant 0.000000e+00 : f32
    %33 = vector.broadcast %cst_40 : f32 to vector<128x128xf32>
    %34 = arith.maximumf %32, %33 : vector<128x128xf32>
    %c0_41 = arith.constant 0 : index
    %c0_42 = arith.constant 0 : index
    %35 = vector.load %arg5[%c0_41, %c0_42] : memref<128x1xi32, #tpu.memory_space<vmem>>, vector<128x1xi32>
    %c8_i32 = arith.constant 8 : i32
    %36 = vector.broadcast %c8_i32 : i32 to vector<128x1xi32>
    %37 = arith.cmpi slt, %35, %36 : vector<128x1xi32>
    %cst_43 = arith.constant 0.000000e+00 : f32
    %38 = vector.shape_cast %37 : vector<128x1xi1> to vector<128x1xi1>
    %39 = vector.broadcast %38 : vector<128x1xi1> to vector<128x128xi1>
    %40 = vector.broadcast %cst_43 : f32 to vector<128x128xf32>
    %41 = arith.select %39, %34, %40 : vector<128x128xi1>, vector<128x128xf32>
    %cst_44 = arith.constant 0.000000e+00 : bf16
    %42 = vector.broadcast %cst_44 : bf16 to vector<24x128xbf16>
    %c0_45 = arith.constant 0 : index
    %c0_46 = arith.constant 0 : index
    %43 = vector.load %arg13[%c0_45, %c0_46] : memref<176x128xbf16, #tpu.memory_space<vmem>>, vector<24x128xbf16>
    tpu.vector_store %arg13[%c0_45, %c0_46], %42 {strides = array<i32>} : memref<176x128xbf16, #tpu.memory_space<vmem>>, vector<24x128xbf16>,
    %c152 = arith.constant 152 : index
    %c0_47 = arith.constant 0 : index
    %44 = vector.load %arg13[%c152, %c0_47] : memref<176x128xbf16, #tpu.memory_space<vmem>>, vector<24x128xbf16>
    tpu.vector_store %arg13[%c152, %c0_47], %42 {strides = array<i32>} : memref<176x128xbf16, #tpu.memory_space<vmem>>, vector<24x128xbf16>,
    %45 = arith.truncf %41 : vector<128x128xf32> to vector<128x128xbf16>
    %c24_48 = arith.constant 24 : index
    %c0_49 = arith.constant 0 : index
    %46 = vector.load %arg13[%c24_48, %c0_49] : memref<176x128xbf16, #tpu.memory_space<vmem>>, vector<128x128xbf16>
    tpu.vector_store %arg13[%c24_48, %c0_49], %45 {strides = array<i32>} : memref<176x128xbf16, #tpu.memory_space<vmem>>, vector<128x128xbf16>,
    %c7 = arith.constant 7 : index
    %c0_50 = arith.constant 0 : index
    %47 = vector.load %arg13[%c7, %c0_50] : memref<176x128xbf16, #tpu.memory_space<vmem>>, vector<128x128xbf16>
    %c0_51 = arith.constant 0 : index
    %c0_52 = arith.constant 0 : index
    %c0_53 = arith.constant 0 : index
    %48 = vector.load %arg8[%c0_51, %c0_52, %c0_53] : memref<9x128x128xbf16, #tpu.memory_space<vmem>>, vector<1x128x128xbf16>
    %49 = vector.shape_cast %48 : vector<1x128x128xbf16> to vector<128x128xbf16>
    %cst_54 = arith.constant dense<0.000000e+00> : vector<128x128xf32>
    %50 = tpu.matmul %47, %49, %cst_54 {dimension_numbers = #tpu.dot_dimension_numbers<[1], [0], [0], [1], [0, 0, 1, 1], [], []>} : vector<128x128xbf16>, vector<128x128xbf16>, vector<128x128xf32> -> vector<128x128xf32>
    %c0_55 = arith.constant 0 : index
    %c0_56 = arith.constant 0 : index
    %51 = vector.load %arg14[%c0_55, %c0_56] : memref<128x128xf32, #tpu.memory_space<vmem>>, vector<128x128xf32>
    tpu.vector_store %arg14[%c0_55, %c0_56], %50 {strides = array<i32>} : memref<128x128xf32, #tpu.memory_space<vmem>>, vector<128x128xf32>,
    %c8_57 = arith.constant 8 : index
    %c0_58 = arith.constant 0 : index
    %52 = vector.load %arg13[%c8_57, %c0_58] : memref<176x128xbf16, #tpu.memory_space<vmem>>, vector<128x128xbf16>
    %c1_59 = arith.constant 1 : index
    %c0_60 = arith.constant 0 : index
    %c0_61 = arith.constant 0 : index
    %53 = vector.load %arg8[%c1_59, %c0_60, %c0_61] : memref<9x128x128xbf16, #tpu.memory_space<vmem>>, vector<1x128x128xbf16>
    %54 = vector.shape_cast %53 : vector<1x128x128xbf16> to vector<128x128xbf16>
    %cst_62 = arith.constant dense<0.000000e+00> : vector<128x128xf32>
    %55 = tpu.matmul %52, %54, %cst_62 {dimension_numbers = #tpu.dot_dimension_numbers<[1], [0], [0], [1], [0, 0, 1, 1], [], []>} : vector<128x128xbf16>, vector<128x128xbf16>, vector<128x128xf32> -> vector<128x128xf32>
    %c0_63 = arith.constant 0 : index
    %c0_64 = arith.constant 0 : index
    %56 = vector.load %arg14[%c0_63, %c0_64] : memref<128x128xf32, #tpu.memory_space<vmem>>, vector<128x128xf32>
    %57 = arith.addf %56, %55 : vector<128x128xf32>
    %c0_65 = arith.constant 0 : index
    %c0_66 = arith.constant 0 : index
    %58 = vector.load %arg14[%c0_65, %c0_66] : memref<128x128xf32, #tpu.memory_space<vmem>>, vector<128x128xf32>
    tpu.vector_store %arg14[%c0_65, %c0_66], %57 {strides = array<i32>} : memref<128x128xf32, #tpu.memory_space<vmem>>, vector<128x128xf32>,
    %c9 = arith.constant 9 : index
    %c0_67 = arith.constant 0 : index
    %59 = vector.load %arg13[%c9, %c0_67] : memref<176x128xbf16, #tpu.memory_space<vmem>>, vector<128x128xbf16>
    %c2 = arith.constant 2 : index
    %c0_68 = arith.constant 0 : index
    %c0_69 = arith.constant 0 : index
    %60 = vector.load %arg8[%c2, %c0_68, %c0_69] : memref<9x128x128xbf16, #tpu.memory_space<vmem>>, vector<1x128x128xbf16>
    %61 = vector.shape_cast %60 : vector<1x128x128xbf16> to vector<128x128xbf16>
    %cst_70 = arith.constant dense<0.000000e+00> : vector<128x128xf32>
    %62 = tpu.matmul %59, %61, %cst_70 {dimension_numbers = #tpu.dot_dimension_numbers<[1], [0], [0], [1], [0, 0, 1, 1], [], []>} : vector<128x128xbf16>, vector<128x128xbf16>, vector<128x128xf32> -> vector<128x128xf32>
    %c0_71 = arith.constant 0 : index
    %c0_72 = arith.constant 0 : index
    %63 = vector.load %arg14[%c0_71, %c0_72] : memref<128x128xf32, #tpu.memory_space<vmem>>, vector<128x128xf32>
    %64 = arith.addf %63, %62 : vector<128x128xf32>
    %c0_73 = arith.constant 0 : index
    %c0_74 = arith.constant 0 : index
    %65 = vector.load %arg14[%c0_73, %c0_74] : memref<128x128xf32, #tpu.memory_space<vmem>>, vector<128x128xf32>
    tpu.vector_store %arg14[%c0_73, %c0_74], %64 {strides = array<i32>} : memref<128x128xf32, #tpu.memory_space<vmem>>, vector<128x128xf32>,
    %c23 = arith.constant 23 : index
    %c0_75 = arith.constant 0 : index
    %66 = vector.load %arg13[%c23, %c0_75] : memref<176x128xbf16, #tpu.memory_space<vmem>>, vector<128x128xbf16>
    %c3 = arith.constant 3 : index
    %c0_76 = arith.constant 0 : index
    %c0_77 = arith.constant 0 : index
    %67 = vector.load %arg8[%c3, %c0_76, %c0_77] : memref<9x128x128xbf16, #tpu.memory_space<vmem>>, vector<1x128x128xbf16>
    %68 = vector.shape_cast %67 : vector<1x128x128xbf16> to vector<128x128xbf16>
    %cst_78 = arith.constant dense<0.000000e+00> : vector<128x128xf32>
    %69 = tpu.matmul %66, %68, %cst_78 {dimension_numbers = #tpu.dot_dimension_numbers<[1], [0], [0], [1], [0, 0, 1, 1], [], []>} : vector<128x128xbf16>, vector<128x128xbf16>, vector<128x128xf32> -> vector<128x128xf32>
    %c0_79 = arith.constant 0 : index
    %c0_80 = arith.constant 0 : index
    %70 = vector.load %arg14[%c0_79, %c0_80] : memref<128x128xf32, #tpu.memory_space<vmem>>, vector<128x128xf32>
    %71 = arith.addf %70, %69 : vector<128x128xf32>
    %c0_81 = arith.constant 0 : index
    %c0_82 = arith.constant 0 : index
    %72 = vector.load %arg14[%c0_81, %c0_82] : memref<128x128xf32, #tpu.memory_space<vmem>>, vector<128x128xf32>
    tpu.vector_store %arg14[%c0_81, %c0_82], %71 {strides = array<i32>} : memref<128x128xf32, #tpu.memory_space<vmem>>, vector<128x128xf32>,
    %c24_83 = arith.constant 24 : index
    %c0_84 = arith.constant 0 : index
    %73 = vector.load %arg13[%c24_83, %c0_84] : memref<176x128xbf16, #tpu.memory_space<vmem>>, vector<128x128xbf16>
    %c4_85 = arith.constant 4 : index
    %c0_86 = arith.constant 0 : index
    %c0_87 = arith.constant 0 : index
    %74 = vector.load %arg8[%c4_85, %c0_86, %c0_87] : memref<9x128x128xbf16, #tpu.memory_space<vmem>>, vector<1x128x128xbf16>
    %75 = vector.shape_cast %74 : vector<1x128x128xbf16> to vector<128x128xbf16>
    %cst_88 = arith.constant dense<0.000000e+00> : vector<128x128xf32>
    %76 = tpu.matmul %73, %75, %cst_88 {dimension_numbers = #tpu.dot_dimension_numbers<[1], [0], [0], [1], [0, 0, 1, 1], [], []>} : vector<128x128xbf16>, vector<128x128xbf16>, vector<128x128xf32> -> vector<128x128xf32>
    %c0_89 = arith.constant 0 : index
    %c0_90 = arith.constant 0 : index
    %77 = vector.load %arg14[%c0_89, %c0_90] : memref<128x128xf32, #tpu.memory_space<vmem>>, vector<128x128xf32>
    %78 = arith.addf %77, %76 : vector<128x128xf32>
    %c0_91 = arith.constant 0 : index
    %c0_92 = arith.constant 0 : index
    %79 = vector.load %arg14[%c0_91, %c0_92] : memref<128x128xf32, #tpu.memory_space<vmem>>, vector<128x128xf32>
    tpu.vector_store %arg14[%c0_91, %c0_92], %78 {strides = array<i32>} : memref<128x128xf32, #tpu.memory_space<vmem>>, vector<128x128xf32>,
    %c25 = arith.constant 25 : index
    %c0_93 = arith.constant 0 : index
    %80 = vector.load %arg13[%c25, %c0_93] : memref<176x128xbf16, #tpu.memory_space<vmem>>, vector<128x128xbf16>
    %c5 = arith.constant 5 : index
    %c0_94 = arith.constant 0 : index
    %c0_95 = arith.constant 0 : index
    %81 = vector.load %arg8[%c5, %c0_94, %c0_95] : memref<9x128x128xbf16, #tpu.memory_space<vmem>>, vector<1x128x128xbf16>
    %82 = vector.shape_cast %81 : vector<1x128x128xbf16> to vector<128x128xbf16>
    %cst_96 = arith.constant dense<0.000000e+00> : vector<128x128xf32>
    %83 = tpu.matmul %80, %82, %cst_96 {dimension_numbers = #tpu.dot_dimension_numbers<[1], [0], [0], [1], [0, 0, 1, 1], [], []>} : vector<128x128xbf16>, vector<128x128xbf16>, vector<128x128xf32> -> vector<128x128xf32>
    %c0_97 = arith.constant 0 : index
    %c0_98 = arith.constant 0 : index
    %84 = vector.load %arg14[%c0_97, %c0_98] : memref<128x128xf32, #tpu.memory_space<vmem>>, vector<128x128xf32>
    %85 = arith.addf %84, %83 : vector<128x128xf32>
    %c0_99 = arith.constant 0 : index
    %c0_100 = arith.constant 0 : index
    %86 = vector.load %arg14[%c0_99, %c0_100] : memref<128x128xf32, #tpu.memory_space<vmem>>, vector<128x128xf32>
    tpu.vector_store %arg14[%c0_99, %c0_100], %85 {strides = array<i32>} : memref<128x128xf32, #tpu.memory_space<vmem>>, vector<128x128xf32>,
    %c39 = arith.constant 39 : index
    %c0_101 = arith.constant 0 : index
    %87 = vector.load %arg13[%c39, %c0_101] : memref<176x128xbf16, #tpu.memory_space<vmem>>, vector<128x128xbf16>
    %c6 = arith.constant 6 : index
    %c0_102 = arith.constant 0 : index
    %c0_103 = arith.constant 0 : index
    %88 = vector.load %arg8[%c6, %c0_102, %c0_103] : memref<9x128x128xbf16, #tpu.memory_space<vmem>>, vector<1x128x128xbf16>
    %89 = vector.shape_cast %88 : vector<1x128x128xbf16> to vector<128x128xbf16>
    %cst_104 = arith.constant dense<0.000000e+00> : vector<128x128xf32>
    %90 = tpu.matmul %87, %89, %cst_104 {dimension_numbers = #tpu.dot_dimension_numbers<[1], [0], [0], [1], [0, 0, 1, 1], [], []>} : vector<128x128xbf16>, vector<128x128xbf16>, vector<128x128xf32> -> vector<128x128xf32>
    %c0_105 = arith.constant 0 : index
    %c0_106 = arith.constant 0 : index
    %91 = vector.load %arg14[%c0_105, %c0_106] : memref<128x128xf32, #tpu.memory_space<vmem>>, vector<128x128xf32>
    %92 = arith.addf %91, %90 : vector<128x128xf32>
    %c0_107 = arith.constant 0 : index
    %c0_108 = arith.constant 0 : index
    %93 = vector.load %arg14[%c0_107, %c0_108] : memref<128x128xf32, #tpu.memory_space<vmem>>, vector<128x128xf32>
    tpu.vector_store %arg14[%c0_107, %c0_108], %92 {strides = array<i32>} : memref<128x128xf32, #tpu.memory_space<vmem>>, vector<128x128xf32>,
    %c40 = arith.constant 40 : index
    %c0_109 = arith.constant 0 : index
    %94 = vector.load %arg13[%c40, %c0_109] : memref<176x128xbf16, #tpu.memory_space<vmem>>, vector<128x128xbf16>
    %c7_110 = arith.constant 7 : index
    %c0_111 = arith.constant 0 : index
    %c0_112 = arith.constant 0 : index
    %95 = vector.load %arg8[%c7_110, %c0_111, %c0_112] : memref<9x128x128xbf16, #tpu.memory_space<vmem>>, vector<1x128x128xbf16>
    %96 = vector.shape_cast %95 : vector<1x128x128xbf16> to vector<128x128xbf16>
    %cst_113 = arith.constant dense<0.000000e+00> : vector<128x128xf32>
    %97 = tpu.matmul %94, %96, %cst_113 {dimension_numbers = #tpu.dot_dimension_numbers<[1], [0], [0], [1], [0, 0, 1, 1], [], []>} : vector<128x128xbf16>, vector<128x128xbf16>, vector<128x128xf32> -> vector<128x128xf32>
    %c0_114 = arith.constant 0 : index
    %c0_115 = arith.constant 0 : index
    %98 = vector.load %arg14[%c0_114, %c0_115] : memref<128x128xf32, #tpu.memory_space<vmem>>, vector<128x128xf32>
    %99 = arith.addf %98, %97 : vector<128x128xf32>
    %c0_116 = arith.constant 0 : index
    %c0_117 = arith.constant 0 : index
    %100 = vector.load %arg14[%c0_116, %c0_117] : memref<128x128xf32, #tpu.memory_space<vmem>>, vector<128x128xf32>
    tpu.vector_store %arg14[%c0_116, %c0_117], %99 {strides = array<i32>} : memref<128x128xf32, #tpu.memory_space<vmem>>, vector<128x128xf32>,
    %c41 = arith.constant 41 : index
    %c0_118 = arith.constant 0 : index
    %101 = vector.load %arg13[%c41, %c0_118] : memref<176x128xbf16, #tpu.memory_space<vmem>>, vector<128x128xbf16>
    %c8_119 = arith.constant 8 : index
    %c0_120 = arith.constant 0 : index
    %c0_121 = arith.constant 0 : index
    %102 = vector.load %arg8[%c8_119, %c0_120, %c0_121] : memref<9x128x128xbf16, #tpu.memory_space<vmem>>, vector<1x128x128xbf16>
    %103 = vector.shape_cast %102 : vector<1x128x128xbf16> to vector<128x128xbf16>
    %cst_122 = arith.constant dense<0.000000e+00> : vector<128x128xf32>
    %104 = tpu.matmul %101, %103, %cst_122 {dimension_numbers = #tpu.dot_dimension_numbers<[1], [0], [0], [1], [0, 0, 1, 1], [], []>} : vector<128x128xbf16>, vector<128x128xbf16>, vector<128x128xf32> -> vector<128x128xf32>
    %c0_123 = arith.constant 0 : index
    %c0_124 = arith.constant 0 : index
    %105 = vector.load %arg14[%c0_123, %c0_124] : memref<128x128xf32, #tpu.memory_space<vmem>>, vector<128x128xf32>
    %106 = arith.addf %105, %104 : vector<128x128xf32>
    %c0_125 = arith.constant 0 : index
    %c0_126 = arith.constant 0 : index
    %107 = vector.load %arg14[%c0_125, %c0_126] : memref<128x128xf32, #tpu.memory_space<vmem>>, vector<128x128xf32>
    tpu.vector_store %arg14[%c0_125, %c0_126], %106 {strides = array<i32>} : memref<128x128xf32, #tpu.memory_space<vmem>>, vector<128x128xf32>,
    %c0_127 = arith.constant 0 : index
    %c0_128 = arith.constant 0 : index
    %c0_129 = arith.constant 0 : index
    %108 = vector.load %arg4[%c0_127, %c0_128, %c0_129] : memref<1x192x4xbf16, #tpu.memory_space<vmem>>, vector<1x128x4xbf16>
    %109 = vector.shape_cast %108 : vector<1x128x4xbf16> to vector<128x4xbf16>
    %c0_130 = arith.constant 0 : index
    %c0_131 = arith.constant 0 : index
    %110 = vector.load %arg14[%c0_130, %c0_131] : memref<128x128xf32, #tpu.memory_space<vmem>>, vector<128x128xf32>
    %c0_132 = arith.constant 0 : index
    %c0_133 = arith.constant 0 : index
    %111 = vector.load %arg9[%c0_132, %c0_133] : memref<1x128xf32, #tpu.memory_space<vmem>>, vector<1x128xf32>
    %112 = vector.broadcast %111 : vector<1x128xf32> to vector<128x128xf32>
    %113 = arith.addf %110, %112 : vector<128x128xf32>
    %c0_134 = arith.constant 0 : index
    %c0_135 = arith.constant 0 : index
    %114 = vector.load %arg10[%c0_134, %c0_135] : memref<4x128xbf16, #tpu.memory_space<vmem>>, vector<4x128xbf16>
    %cst_136 = arith.constant dense<0.000000e+00> : vector<128x128xf32>
    %115 = tpu.matmul %109, %114, %cst_136 {dimension_numbers = #tpu.dot_dimension_numbers<[1], [0], [0], [1], [0, 0, 1, 1], [], []>} : vector<128x4xbf16>, vector<4x128xbf16>, vector<128x128xf32> -> vector<128x128xf32>
    %116 = arith.addf %113, %115 : vector<128x128xf32>
    %cst_137 = arith.constant 0.000000e+00 : f32
    %117 = vector.broadcast %cst_137 : f32 to vector<128x128xf32>
    %118 = arith.maximumf %116, %117 : vector<128x128xf32>
    %c0_138 = arith.constant 0 : index
    %c0_139 = arith.constant 0 : index
    %c0_140 = arith.constant 0 : index
    %119 = vector.load %arg11[%c0_138, %c0_139, %c0_140] : memref<1x128x128xf32, #tpu.memory_space<vmem>>, vector<1x128x128xf32>
    %120 = vector.shape_cast %119 : vector<1x128x128xf32> to vector<128x128xf32>
    %121 = vector.shape_cast %118 : vector<128x128xf32> to vector<1x128x128xf32>
    tpu.vector_store %arg11[%c0_138, %c0_139, %c0_140], %121 {strides = array<i32>} : memref<1x128x128xf32, #tpu.memory_space<vmem>>, vector<1x128x128xf32>,
    return
  }
  func.func @transform_0(%arg0: i32) -> (i32, i32, i32) {
    %c0_i32 = arith.constant 0 : i32
    %c0_i32_0 = arith.constant 0 : i32
    %c0_i32_1 = arith.constant 0 : i32
    return %arg0, %c0_i32, %c0_i32_0 : i32, i32, i32
  }
  func.func @transform_1(%arg0: i32) -> (i32, i32, i32) {
    %c0_i32 = arith.constant 0 : i32
    %c0_i32_0 = arith.constant 0 : i32
    %c0_i32_1 = arith.constant 0 : i32
    return %arg0, %c0_i32, %c0_i32_0 : i32, i32, i32
  }
  func.func @transform_2(%arg0: i32) -> (i32, i32, i32) {
    %c0_i32 = arith.constant 0 : i32
    %c0_i32_0 = arith.constant 0 : i32
    %c0_i32_1 = arith.constant 0 : i32
    return %arg0, %c0_i32, %c0_i32_0 : i32, i32, i32
  }
  func.func @transform_3(%arg0: i32) -> (i32, i32, i32) {
    %c0_i32 = arith.constant 0 : i32
    %c0_i32_0 = arith.constant 0 : i32
    %c0_i32_1 = arith.constant 0 : i32
    return %arg0, %c0_i32, %c0_i32_0 : i32, i32, i32
  }
  func.func @transform_4(%arg0: i32) -> (i32, i32) {
    %c0_i32 = arith.constant 0 : i32
    %c0_i32_0 = arith.constant 0 : i32
    %c0_i32_1 = arith.constant 0 : i32
    return %c0_i32, %c0_i32_0 : i32, i32
  }
  func.func @transform_5(%arg0: i32) -> (i32, i32) {
    %c0_i32 = arith.constant 0 : i32
    %c0_i32_0 = arith.constant 0 : i32
    %c0_i32_1 = arith.constant 0 : i32
    return %c0_i32, %c0_i32_0 : i32, i32
  }
  func.func @transform_6(%arg0: i32) -> (i32, i32) {
    %c0_i32 = arith.constant 0 : i32
    %c0_i32_0 = arith.constant 0 : i32
    %c0_i32_1 = arith.constant 0 : i32
    return %c0_i32, %c0_i32_0 : i32, i32
  }
  func.func @transform_7(%arg0: i32) -> (i32, i32, i32) {
    %c0_i32 = arith.constant 0 : i32
    %c0_i32_0 = arith.constant 0 : i32
    %c0_i32_1 = arith.constant 0 : i32
    %c0_i32_2 = arith.constant 0 : i32
    return %c0_i32, %c0_i32_0, %c0_i32_1 : i32, i32, i32
  }
  func.func @transform_8(%arg0: i32) -> (i32, i32) {
    %c0_i32 = arith.constant 0 : i32
    %c0_i32_0 = arith.constant 0 : i32
    %c0_i32_1 = arith.constant 0 : i32
    return %c0_i32, %c0_i32_0 : i32, i32
  }
  func.func @transform_9(%arg0: i32) -> (i32, i32) {
    %c0_i32 = arith.constant 0 : i32
    %c0_i32_0 = arith.constant 0 : i32
    %c0_i32_1 = arith.constant 0 : i32
    return %c0_i32, %c0_i32_0 : i32, i32
  }
  func.func @transform_10(%arg0: i32) -> (i32, i32, i32) {
    %c0_i32 = arith.constant 0 : i32
    %c0_i32_0 = arith.constant 0 : i32
    %c0_i32_1 = arith.constant 0 : i32
    return %arg0, %c0_i32, %c0_i32_0 : i32, i32, i32
  }
}

</mosaic_0001>

<llo_original>
// kernel: iresidual_block_forward.1
$region0: #{iresidual_block_forward.1}
  #allocation0 [shape = 'u32[]', space=smem, size = 0x4, offset = 0x4, fixed_abs, tag = 'smem constant byte address 0x4 - core index']
  #allocation1 [shape = 'u32[144,128]{1,0:T(1,128)}', space=vmem, size = 0x12000, scoped, tag = 'internal scratch']
  #allocation2 [shape = 'bf16[128,36]{1,0:T(16,128)(2,1)}', space=vmem, size = 0x8000, scoped, tag = 'scratch operand']
  #allocation3 [shape = 'bf16[176,128]{1,0:T(16,128)(2,1)}', space=vmem, size = 0xb000, scoped, tag = 'scratch operand']
  #allocation4 [shape = 'f32[128,128]{1,0:T(8,128)}', space=vmem, size = 0x10000, scoped, tag = 'scratch operand']
  %s0 = inlined_call_operand.vmem [shape: bf16[2,192,4], index: 0, kind: input, shape index: {}]
  %s1 = inlined_call_operand.vmem [shape: bf16[2,192,4], index: 1, kind: input, shape index: {}]
  %s2 = inlined_call_operand.vmem [shape: bf16[2,192,4], index: 2, kind: input, shape index: {}]
  %s3 = inlined_call_operand.vmem [shape: bf16[2,192,4], index: 3, kind: input, shape index: {}]
  %s4 = inlined_call_operand.vmem [shape: s32[128,1], index: 4, kind: input, shape index: {}]
  %s5 = inlined_call_operand.vmem [shape: bf16[36,128], index: 5, kind: input, shape index: {}]
  %s6 = inlined_call_operand.vmem [shape: f32[1,128], index: 6, kind: input, shape index: {}]
  %s7 = inlined_call_operand.vmem [shape: bf16[9,128,128], index: 7, kind: input, shape index: {}]
  %s8 = inlined_call_operand.vmem [shape: f32[1,128], index: 8, kind: input, shape index: {}]
  %s9 = inlined_call_operand.vmem [shape: bf16[4,128], index: 9, kind: input, shape index: {}]
  %s10 = inlined_call_operand.vmem [shape: f32[2,128,128], index: 10, kind: output, shape index: {}]
  %s11 = sld [smem:[#allocation0]]
  $region73: #{iresidual_block_forward.1} parent=0
    _
  %s13 = ssub.s32 1, %s11
  %s14 = scalar_select 0, %s13, %s11
  loop: start=0, step=1, limit=4
  $region2: #{iresidual_block_forward.1} parent=0 // loop_pre_header
    _
  $region3: #{iresidual_block_forward.1} parent=0 // loop_header
    %s16 = sphi 0, %s20
    %p17 = scmp.ge.s32.totalorder %s16, 4
    %s26 = sphi 0, %s28
    %s29 = sphi 0, %s26
    %s30 = sphi 0, %s29
    %s46 = sphi 0, %s30
    %s52 = sphi 0, %s54
    %s55 = sphi 0, %s52
    %s56 = sphi 0, %s55
    %s72 = sphi 0, %s56
    %s78 = sphi 0, %s80
    %s81 = sphi 0, %s78
    %s82 = sphi 0, %s81
    %s98 = sphi 0, %s82
    %s104 = sphi 0, %s106
    %s107 = sphi 0, %s104
    %s108 = sphi 0, %s107
    %s124 = sphi 0, %s108
    %s128 = sphi 0, %s128
    %s130 = sphi 0, %s128
    %s131 = sphi 0, %s130
    %s145 = sphi 0, %s131
    %s149 = sphi 0, %s149
    %s151 = sphi 0, %s149
    %s152 = sphi 0, %s151
    %s166 = sphi 0, %s152
    %s170 = sphi 0, %s170
    %s172 = sphi 0, %s170
    %s173 = sphi 0, %s172
    %s187 = sphi 0, %s173
    %s191 = sphi 0, %s191
    %s193 = sphi 0, %s191
    %s194 = sphi 0, %s193
    %s208 = sphi 0, %s194
    %s212 = sphi 0, %s212
    %s214 = sphi 0, %s212
    %s215 = sphi 0, %s214
    %s229 = sphi 0, %s215
    %s233 = sphi 0, %s233
    %s235 = sphi 0, %s233
    %s236 = sphi 0, %s235
    %s250 = sphi 0, %s236
    %s256 = sphi 0, %s258
    %s259 = sphi 0, %s256
    %s260 = sphi 0, %s259
    %s276 = sphi 0, %s260
  $region4: #{iresidual_block_forward.1} parent=0 // loop_header_branch
    %19 = sbr.rel (%p17) target = $region8
  $region5: #{iresidual_block_forward.1} parent=0 // loop_body
    %s21 = ssub.s32 %s16, 1
    %s22 = ssub.s32 %s16, 2
    %s23 = sadd.s32 %s16, 1
    %s24 = ssub.s32 %s16, %s23
    %p25 = scmp.eq.s32.totalorder %s24, 0
    %s27 = sadd.s32 %s26, 1
    %s28 = scalar_select %p25, %s26, %s27
    %p31 = pneg %p25
    %p32 = scmp.eq.s32.totalorder %s16, 1
    %p33 = por %p31, %p32
    %p34 = scmp.ne.s32.totalorder %s26, %s29
    %p35 = scmp.eq.s32.totalorder %s16, 0
    %p36 = por %p34, %p35
    %p37 = scmp.ne.s32.totalorder %s26, %s29
    %p38 = scmp.eq.s32.totalorder %s21, 1
    %p39 = por %p37, %p38
    %p40 = scmp.ne.s32.totalorder %s29, %s30
    %p41 = scmp.eq.s32.totalorder %s21, 0
    %p42 = por %p40, %p41
    %p43 = scmp.ne.s32.totalorder %s29, %s30
    %p44 = scmp.eq.s32.totalorder %s22, 1
    %p45 = por %p43, %p44
    %p47 = scmp.ne.s32.totalorder %s30, %s46
    %p48 = scmp.eq.s32.totalorder %s22, 0
    %p49 = por %p47, %p48
    %s50 = ssub.s32 %s16, %s23
    %p51 = scmp.eq.s32.totalorder %s50, 0
    %s53 = sadd.s32 %s52, 1
    %s54 = scalar_select %p51, %s52, %s53
    %p57 = pneg %p51
    %p58 = scmp.eq.s32.totalorder %s16, 1
    %p59 = por %p57, %p58
    %p60 = scmp.ne.s32.totalorder %s52, %s55
    %p61 = scmp.eq.s32.totalorder %s16, 0
    %p62 = por %p60, %p61
    %p63 = scmp.ne.s32.totalorder %s52, %s55
    %p64 = scmp.eq.s32.totalorder %s21, 1
    %p65 = por %p63, %p64
    %p66 = scmp.ne.s32.totalorder %s55, %s56
    %p67 = scmp.eq.s32.totalorder %s21, 0
    %p68 = por %p66, %p67
    %p69 = scmp.ne.s32.totalorder %s55, %s56
    %p70 = scmp.eq.s32.totalorder %s22, 1
    %p71 = por %p69, %p70
    %p73 = scmp.ne.s32.totalorder %s56, %s72
    %p74 = scmp.eq.s32.totalorder %s22, 0
    %p75 = por %p73, %p74
    %s76 = ssub.s32 %s16, %s23
    %p77 = scmp.eq.s32.totalorder %s76, 0
    %s79 = sadd.s32 %s78, 1
    %s80 = scalar_select %p77, %s78, %s79
    %p83 = pneg %p77
    %p84 = scmp.eq.s32.totalorder %s16, 1
    %p85 = por %p83, %p84
    %p86 = scmp.ne.s32.totalorder %s78, %s81
    %p87 = scmp.eq.s32.totalorder %s16, 0
    %p88 = por %p86, %p87
    %p89 = scmp.ne.s32.totalorder %s78, %s81
    %p90 = scmp.eq.s32.totalorder %s21, 1
    %p91 = por %p89, %p90
    %p92 = scmp.ne.s32.totalorder %s81, %s82
    %p93 = scmp.eq.s32.totalorder %s21, 0
    %p94 = por %p92, %p93
    %p95 = scmp.ne.s32.totalorder %s81, %s82
    %p96 = scmp.eq.s32.totalorder %s22, 1
    %p97 = por %p95, %p96
    %p99 = scmp.ne.s32.totalorder %s82, %s98
    %p100 = scmp.eq.s32.totalorder %s22, 0
    %p101 = por %p99, %p100
    %s102 = ssub.s32 %s16, %s23
    %p103 = scmp.eq.s32.totalorder %s102, 0
    %s105 = sadd.s32 %s104, 1
    %s106 = scalar_select %p103, %s104, %s105
    %p109 = pneg %p103
    %p110 = scmp.eq.s32.totalorder %s16, 1
    %p111 = por %p109, %p110
    %p112 = scmp.ne.s32.totalorder %s104, %s107
    %p113 = scmp.eq.s32.totalorder %s16, 0
    %p114 = por %p112, %p113
    %p115 = scmp.ne.s32.totalorder %s104, %s107
    %p116 = scmp.eq.s32.totalorder %s21, 1
    %p117 = por %p115, %p116
    %p118 = scmp.ne.s32.totalorder %s107, %s108
    %p119 = scmp.eq.s32.totalorder %s21, 0
    %p120 = por %p118, %p119
    %p121 = scmp.ne.s32.totalorder %s107, %s108
    %p122 = scmp.eq.s32.totalorder %s22, 1
    %p123 = por %p121, %p122
    %p125 = scmp.ne.s32.totalorder %s108, %s124
    %p126 = scmp.eq.s32.totalorder %s22, 0
    %p127 = por %p125, %p126
    %s129 = sadd.s32 %s128, 1
    %p132 = scmp.eq.s32.totalorder %s16, 1
    %p133 = scmp.ne.s32.totalorder %s128, %s130
    %p134 = scmp.eq.s32.totalorder %s16, 0
    %p135 = por %p133, %p134
    %p136 = scmp.ne.s32.totalorder %s128, %s130
    %p137 = scmp.eq.s32.totalorder %s21, 1
    %p138 = por %p136, %p137
    %p139 = scmp.ne.s32.totalorder %s130, %s131
    %p140 = scmp.eq.s32.totalorder %s21, 0
    %p141 = por %p139, %p140
    %p142 = scmp.ne.s32.totalorder %s130, %s131
    %p143 = scmp.eq.s32.totalorder %s22, 1
    %p144 = por %p142, %p143
    %p146 = scmp.ne.s32.totalorder %s131, %s145
    %p147 = scmp.eq.s32.totalorder %s22, 0
    %p148 = por %p146, %p147
    %s150 = sadd.s32 %s149, 1
    %p153 = scmp.eq.s32.totalorder %s16, 1
    %p154 = scmp.ne.s32.totalorder %s149, %s151
    %p155 = scmp.eq.s32.totalorder %s16, 0
    %p156 = por %p154, %p155
    %p157 = scmp.ne.s32.totalorder %s149, %s151
    %p158 = scmp.eq.s32.totalorder %s21, 1
    %p159 = por %p157, %p158
    %p160 = scmp.ne.s32.totalorder %s151, %s152
    %p161 = scmp.eq.s32.totalorder %s21, 0
    %p162 = por %p160, %p161
    %p163 = scmp.ne.s32.totalorder %s151, %s152
    %p164 = scmp.eq.s32.totalorder %s22, 1
    %p165 = por %p163, %p164
    %p167 = scmp.ne.s32.totalorder %s152, %s166
    %p168 = scmp.eq.s32.totalorder %s22, 0
    %p169 = por %p167, %p168
    %s171 = sadd.s32 %s170, 1
    %p174 = scmp.eq.s32.totalorder %s16, 1
    %p175 = scmp.ne.s32.totalorder %s170, %s172
    %p176 = scmp.eq.s32.totalorder %s16, 0
    %p177 = por %p175, %p176
    %p178 = scmp.ne.s32.totalorder %s170, %s172
    %p179 = scmp.eq.s32.totalorder %s21, 1
    %p180 = por %p178, %p179
    %p181 = scmp.ne.s32.totalorder %s172, %s173
    %p182 = scmp.eq.s32.totalorder %s21, 0
    %p183 = por %p181, %p182
    %p184 = scmp.ne.s32.totalorder %s172, %s173
    %p185 = scmp.eq.s32.totalorder %s22, 1
    %p186 = por %p184, %p185
    %p188 = scmp.ne.s32.totalorder %s173, %s187
    %p189 = scmp.eq.s32.totalorder %s22, 0
    %p190 = por %p188, %p189
    %s192 = sadd.s32 %s191, 1
    %p195 = scmp.eq.s32.totalorder %s16, 1
    %p196 = scmp.ne.s32.totalorder %s191, %s193
    %p197 = scmp.eq.s32.totalorder %s16, 0
    %p198 = por %p196, %p197
    %p199 = scmp.ne.s32.totalorder %s191, %s193
    %p200 = scmp.eq.s32.totalorder %s21, 1
    %p201 = por %p199, %p200
    %p202 = scmp.ne.s32.totalorder %s193, %s194
    %p203 = scmp.eq.s32.totalorder %s21, 0
    %p204 = por %p202, %p203
    %p205 = scmp.ne.s32.totalorder %s193, %s194
    %p206 = scmp.eq.s32.totalorder %s22, 1
    %p207 = por %p205, %p206
    %p209 = scmp.ne.s32.totalorder %s194, %s208
    %p210 = scmp.eq.s32.totalorder %s22, 0
    %p211 = por %p209, %p210
    %s213 = sadd.s32 %s212, 1
    %p216 = scmp.eq.s32.totalorder %s16, 1
    %p217 = scmp.ne.s32.totalorder %s212, %s214
    %p218 = scmp.eq.s32.totalorder %s16, 0
    %p219 = por %p217, %p218
    %p220 = scmp.ne.s32.totalorder %s212, %s214
    %p221 = scmp.eq.s32.totalorder %s21, 1
    %p222 = por %p220, %p221
    %p223 = scmp.ne.s32.totalorder %s214, %s215
    %p224 = scmp.eq.s32.totalorder %s21, 0
    %p225 = por %p223, %p224
    %p226 = scmp.ne.s32.totalorder %s214, %s215
    %p227 = scmp.eq.s32.totalorder %s22, 1
    %p228 = por %p226, %p227
    %p230 = scmp.ne.s32.totalorder %s215, %s229
    %p231 = scmp.eq.s32.totalorder %s22, 0
    %p232 = por %p230, %p231
    %s234 = sadd.s32 %s233, 1
    %p237 = scmp.eq.s32.totalorder %s16, 1
    %p238 = scmp.ne.s32.totalorder %s233, %s235
    %p239 = scmp.eq.s32.totalorder %s16, 0
    %p240 = por %p238, %p239
    %p241 = scmp.ne.s32.totalorder %s233, %s235
    %p242 = scmp.eq.s32.totalorder %s21, 1
    %p243 = por %p241, %p242
    %p244 = scmp.ne.s32.totalorder %s235, %s236
    %p245 = scmp.eq.s32.totalorder %s21, 0
    %p246 = por %p244, %p245
    %p247 = scmp.ne.s32.totalorder %s235, %s236
    %p248 = scmp.eq.s32.totalorder %s22, 1
    %p249 = por %p247, %p248
    %p251 = scmp.ne.s32.totalorder %s236, %s250
    %p252 = scmp.eq.s32.totalorder %s22, 0
    %p253 = por %p251, %p252
    %s254 = ssub.s32 %s16, %s23
    %p255 = scmp.eq.s32.totalorder %s254, 0
    %s257 = sadd.s32 %s256, 1
    %s258 = scalar_select %p255, %s256, %s257
    %p261 = pneg %p255
    %p262 = scmp.eq.s32.totalorder %s16, 1
    %p263 = por %p261, %p262
    %p264 = scmp.ne.s32.totalorder %s256, %s259
    %p265 = scmp.eq.s32.totalorder %s16, 0
    %p266 = por %p264, %p265
    %p267 = scmp.ne.s32.totalorder %s256, %s259
    %p268 = scmp.eq.s32.totalorder %s21, 1
    %p269 = por %p267, %p268
    %p270 = scmp.ne.s32.totalorder %s259, %s260
    %p271 = scmp.eq.s32.totalorder %s21, 0
    %p272 = por %p270, %p271
    %p273 = scmp.ne.s32.totalorder %s259, %s260
    %p274 = scmp.eq.s32.totalorder %s22, 1
    %p275 = por %p273, %p274
    %p277 = scmp.ne.s32.totalorder %s260, %s276
    %p278 = scmp.eq.s32.totalorder %s22, 0
    %p279 = por %p277, %p278
    %p280 = scmp.le.s32.totalorder 1, %s16
    %p281 = scmp.lt.s32.totalorder %s16, 3
    %p282 = pnand %p280, %p281
    %p283 = pneg %p282
    // Predicated region
    $region9: #{iresidual_block_forward.1} parent=5 // pred_check
      _
    $region10: #{iresidual_block_forward.1} parent=5 // pred_check_branch
      %285 = sbr.rel (%p282) target = $region12
    $region11: #{iresidual_block_forward.1} parent=5 // pred_region
      %s286 = ssub.s32 %s16, 1
      // Predicated region
      $region13: #{iresidual_block_forward.1} parent=11 // pred_check
        %p287 = pneg %p141
      $region14: #{iresidual_block_forward.1} parent=11 // pred_check_branch
        %289 = sbr.rel (%p287) target = $region16
      $region15: #{iresidual_block_forward.1} parent=11 // pred_region
        _
      $region16: #{iresidual_block_forward.1} parent=11 // pred_fallthru
        _
      // Predicated region
      $region17: #{iresidual_block_forward.1} parent=11 // pred_check
        %p290 = pneg %p162
      $region18: #{iresidual_block_forward.1} parent=11 // pred_check_branch
        %292 = sbr.rel (%p290) target = $region20
      $region19: #{iresidual_block_forward.1} parent=11 // pred_region
        _
      $region20: #{iresidual_block_forward.1} parent=11 // pred_fallthru
        _
      // Predicated region
      $region21: #{iresidual_block_forward.1} parent=11 // pred_check
        %p293 = pneg %p183
      $region22: #{iresidual_block_forward.1} parent=11 // pred_check_branch
        %295 = sbr.rel (%p293) target = $region24
      $region23: #{iresidual_block_forward.1} parent=11 // pred_region
        _
      $region24: #{iresidual_block_forward.1} parent=11 // pred_fallthru
        _
      // Predicated region
      $region25: #{iresidual_block_forward.1} parent=11 // pred_check
        %p296 = pneg %p204
      $region26: #{iresidual_block_forward.1} parent=11 // pred_check_branch
        %298 = sbr.rel (%p296) target = $region28
      $region27: #{iresidual_block_forward.1} parent=11 // pred_region
        _
      $region28: #{iresidual_block_forward.1} parent=11 // pred_fallthru
        _
      // Predicated region
      $region29: #{iresidual_block_forward.1} parent=11 // pred_check
        %p299 = pneg %p225
      $region30: #{iresidual_block_forward.1} parent=11 // pred_check_branch
        %301 = sbr.rel (%p299) target = $region32
      $region31: #{iresidual_block_forward.1} parent=11 // pred_region
        _
      $region32: #{iresidual_block_forward.1} parent=11 // pred_fallthru
        _
      // Predicated region
      $region33: #{iresidual_block_forward.1} parent=11 // pred_check
        %p302 = pneg %p246
      $region34: #{iresidual_block_forward.1} parent=11 // pred_check_branch
        %304 = sbr.rel (%p302) target = $region36
      $region35: #{iresidual_block_forward.1} parent=11 // pred_region
        _
      $region36: #{iresidual_block_forward.1} parent=11 // pred_fallthru
        _
    $region12: #{iresidual_block_forward.1} parent=5 // pred_fallthru
      _
    %p305 = scmp.lt.s32.totalorder %s16, 2
    // Predicated region
    $region37: #{iresidual_block_forward.1} parent=5 // pred_check
      %p306 = pneg %p305
    $region38: #{iresidual_block_forward.1} parent=5 // pred_check_branch
      %308 = sbr.rel (%p306) target = $region40
    $region39: #{iresidual_block_forward.1} parent=5 // pred_region
      // Predicated region
      $region41: #{iresidual_block_forward.1} parent=39 // pred_check
        %p309 = pneg %p36
      $region42: #{iresidual_block_forward.1} parent=39 // pred_check_branch
        %311 = sbr.rel (%p309) target = $region44
      $region43: #{iresidual_block_forward.1} parent=39 // pred_region
        %p312 = scmp.lt.s32.totalorder %s16, 1
        %s313 = scalar_select %p312, %s16, 1
        %s314 = smul.addr %s313, 24
        %s315 = smul.addr %s314, 4
        %s316 = scalar_lea.vmem %s0, %s315
      $region44: #{iresidual_block_forward.1} parent=39 // pred_fallthru
        _
      // Predicated region
      $region45: #{iresidual_block_forward.1} parent=39 // pred_check
        %p317 = pneg %p62
      $region46: #{iresidual_block_forward.1} parent=39 // pred_check_branch
        %319 = sbr.rel (%p317) target = $region48
      $region47: #{iresidual_block_forward.1} parent=39 // pred_region
        %p320 = scmp.lt.s32.totalorder %s16, 1
        %s321 = scalar_select %p320, %s16, 1
        %s322 = smul.addr %s321, 24
        %s323 = smul.addr %s322, 4
        %s324 = scalar_lea.vmem %s1, %s323
      $region48: #{iresidual_block_forward.1} parent=39 // pred_fallthru
        _
      // Predicated region
      $region49: #{iresidual_block_forward.1} parent=39 // pred_check
        %p325 = pneg %p88
      $region50: #{iresidual_block_forward.1} parent=39 // pred_check_branch
        %327 = sbr.rel (%p325) target = $region52
      $region51: #{iresidual_block_forward.1} parent=39 // pred_region
        %p328 = scmp.lt.s32.totalorder %s16, 1
        %s329 = scalar_select %p328, %s16, 1
        %s330 = smul.addr %s329, 24
        %s331 = smul.addr %s330, 4
        %s332 = scalar_lea.vmem %s2, %s331
      $region52: #{iresidual_block_forward.1} parent=39 // pred_fallthru
        _
      // Predicated region
      $region53: #{iresidual_block_forward.1} parent=39 // pred_check
        %p333 = pneg %p114
      $region54: #{iresidual_block_forward.1} parent=39 // pred_check_branch
        %335 = sbr.rel (%p333) target = $region56
      $region55: #{iresidual_block_forward.1} parent=39 // pred_region
        %p336 = scmp.lt.s32.totalorder %s16, 1
        %s337 = scalar_select %p336, %s16, 1
        %s338 = smul.addr %s337, 24
        %s339 = smul.addr %s338, 4
        %s340 = scalar_lea.vmem %s3, %s339
      $region56: #{iresidual_block_forward.1} parent=39 // pred_fallthru
        _
    $region40: #{iresidual_block_forward.1} parent=5 // pred_fallthru
      _
    %p341 = scmp.le.s32.totalorder 1, %s16
    %p342 = scmp.lt.s32.totalorder %s16, 3
    %p343 = pnand %p341, %p342
    %p344 = pneg %p343
    // Predicated region
    $region57: #{iresidual_block_forward.1} parent=5 // pred_check
      _
    $region58: #{iresidual_block_forward.1} parent=5 // pred_check_branch
      %346 = sbr.rel (%p343) target = $region60
    $region59: #{iresidual_block_forward.1} parent=5 // pred_region
      %s347 = ssub.s32 %s16, 1
      %p348 = scmp.lt.s32.totalorder %s21, 1
      %s349 = scalar_select %p348, %s21, 1
      %s350 = smul.addr %s349, 24
      %s351 = smul.addr %s350, 4
      %s352 = scalar_lea.vmem %s0, %s351
      %p353 = pneg %p42
      %p354 = pneg %p39
      %p355 = scmp.lt.s32.totalorder %s21, 1
      %s356 = scalar_select %p355, %s21, 1
      %s357 = smul.addr %s356, 24
      %s358 = smul.addr %s357, 4
      %s359 = scalar_lea.vmem %s1, %s358
      %p360 = pneg %p68
      %p361 = pneg %p65
      %p362 = scmp.lt.s32.totalorder %s21, 1
      %s363 = scalar_select %p362, %s21, 1
      %s364 = smul.addr %s363, 24
      %s365 = smul.addr %s364, 4
      %s366 = scalar_lea.vmem %s2, %s365
      %p367 = pneg %p94
      %p368 = pneg %p91
      %p369 = scmp.lt.s32.totalorder %s21, 1
      %s370 = scalar_select %p369, %s21, 1
      %s371 = smul.addr %s370, 24
      %s372 = smul.addr %s371, 4
      %s373 = scalar_lea.vmem %s3, %s372
      %p374 = pneg %p120
      %p375 = pneg %p117
      %p376 = pneg %p141
      %p377 = pneg %p138
      %p378 = pneg %p162
      %p379 = pneg %p159
      %p380 = pneg %p183
      %p381 = pneg %p180
      %p382 = pneg %p204
      %p383 = pneg %p201
      %p384 = pneg %p225
      %p385 = pneg %p222
      %p386 = pneg %p246
      %p387 = pneg %p243
      %p388 = pneg %p272
      %p389 = pneg %p269
      %p390 = scmp.lt.s32.totalorder %s21, 1
      %s391 = scalar_select %p390, %s21, 1
      %s392 = smul.addr %s391, 16
      %s393 = smul.addr %s392, 8
      %s394 = scalar_lea.vmem %s10, %s393
      %p395 = scmp.lt.s32.totalorder %s21, 1
      %s396 = scalar_select %p395, %s21, 1
      %s397 = smul.addr %s396, 24
      %s398 = smul.addr %s397, 4
      %s399 = scalar_lea.vmem %s0, %s398
      %p400 = scmp.lt.s32.totalorder %s21, 1
      %s401 = scalar_select %p400, %s21, 1
      %s402 = smul.addr %s401, 24
      %s403 = smul.addr %s402, 4
      %s404 = scalar_lea.vmem %s1, %s403
      %p405 = scmp.lt.s32.totalorder %s21, 1
      %s406 = scalar_select %p405, %s21, 1
      %s407 = smul.addr %s406, 24
      %s408 = smul.addr %s407, 4
      %s409 = scalar_lea.vmem %s2, %s408
      %p410 = scmp.lt.s32.totalorder %s21, 1
      %s411 = scalar_select %p410, %s21, 1
      %s412 = smul.addr %s411, 24
      %s413 = smul.addr %s412, 4
      %s414 = scalar_lea.vmem %s3, %s413
      %p415 = scmp.lt.s32.totalorder %s21, 1
      %s416 = scalar_select %p415, %s21, 1
      %s417 = smul.addr %s416, 16
      %s418 = smul.addr %s417, 8
      %s419 = scalar_lea.vmem %s10, %s418
      %v421 = vld [vmem:[%s399] sm:$0xf]
      %v422 = vld [vmem:[%s399 + $0x4] sm:$0xf]
      %v423 = vld [vmem:[%s399 + $0x8] sm:$0xf]
      %v424 = vld [vmem:[%s399 + $0xc] sm:$0xf]
      %v425 = vld [vmem:[%s399 + $0x10] sm:$0xf]
      %v426 = vld [vmem:[%s399 + $0x14] sm:$0xf]
      %v427 = vld [vmem:[%s399 + $0x18] sm:$0xf]
      %v428 = vld [vmem:[%s399 + $0x1c] sm:$0xf]
      %v429 = vld [vmem:[%s399 + $0x20] sm:$0xf]
      %v430 = vld [vmem:[%s399 + $0x24] sm:$0xf]
      %v431 = vld [vmem:[%s399 + $0x28] sm:$0xf]
      %v432 = vld [vmem:[%s399 + $0x2c] sm:$0xf]
      %v433 = vld [vmem:[%s399 + $0x30] sm:$0xf]
      %v434 = vld [vmem:[%s399 + $0x34] sm:$0xf]
      %v435 = vld [vmem:[%s399 + $0x38] sm:$0xf]
      %v436 = vld [vmem:[%s399 + $0x3c] sm:$0xf]
      %v453 = vunpack.c.l.b16 %v421
      %v454 = vunpack.c.l.b16 %v422
      %v455 = vunpack.c.l.b16 %v423
      %v456 = vunpack.c.l.b16 %v424
      %v457 = vunpack.c.l.b16 %v425
      %v458 = vunpack.c.l.b16 %v426
      %v459 = vunpack.c.l.b16 %v427
      %v460 = vunpack.c.l.b16 %v428
      %v461 = vunpack.c.l.b16 %v429
      %v462 = vunpack.c.l.b16 %v430
      %v463 = vunpack.c.l.b16 %v431
      %v464 = vunpack.c.l.b16 %v432
      %v465 = vunpack.c.l.b16 %v433
      %v466 = vunpack.c.l.b16 %v434
      %v467 = vunpack.c.l.b16 %v435
      %v468 = vunpack.c.l.b16 %v436
      %v469 = vpack.c.b16 %v454, %v453
      %v470 = vpack.c.b16 %v456, %v455
      %v471 = vpack.c.b16 %v458, %v457
      %v472 = vpack.c.b16 %v460, %v459
      %v473 = vpack.c.b16 %v462, %v461
      %v474 = vpack.c.b16 %v464, %v463
      %v475 = vpack.c.b16 %v466, %v465
      %v476 = vpack.c.b16 %v468, %v467
      %vm485 = vcmask 31744
      %486 = vst.msk [vmem:[#allocation2] sm:$0xff] %vm485, %v469
      %487 = vst.msk [vmem:[#allocation2 + $0x8] sm:$0xff] %vm485, %v470
      %488 = vst.msk [vmem:[#allocation2 + $0x10] sm:$0xff] %vm485, %v471
      %489 = vst.msk [vmem:[#allocation2 + $0x18] sm:$0xff] %vm485, %v472
      %490 = vst.msk [vmem:[#allocation2 + $0x20] sm:$0xff] %vm485, %v473
      %491 = vst.msk [vmem:[#allocation2 + $0x28] sm:$0xff] %vm485, %v474
      %492 = vst.msk [vmem:[#allocation2 + $0x30] sm:$0xff] %vm485, %v475
      %493 = vst.msk [vmem:[#allocation2 + $0x38] sm:$0xff] %vm485, %v476
      %v494 = vld [vmem:[%s404] sm:$0xf]
      %v495 = vld [vmem:[%s404 + $0x4] sm:$0xf]
      %v496 = vld [vmem:[%s404 + $0x8] sm:$0xf]
      %v497 = vld [vmem:[%s404 + $0xc] sm:$0xf]
      %v498 = vld [vmem:[%s404 + $0x10] sm:$0xf]
      %v499 = vld [vmem:[%s404 + $0x14] sm:$0xf]
      %v500 = vld [vmem:[%s404 + $0x18] sm:$0xf]
      %v501 = vld [vmem:[%s404 + $0x1c] sm:$0xf]
      %v502 = vld [vmem:[%s404 + $0x20] sm:$0xf]
      %v503 = vld [vmem:[%s404 + $0x24] sm:$0xf]
      %v504 = vld [vmem:[%s404 + $0x28] sm:$0xf]
      %v505 = vld [vmem:[%s404 + $0x2c] sm:$0xf]
      %v506 = vld [vmem:[%s404 + $0x30] sm:$0xf]
      %v507 = vld [vmem:[%s404 + $0x34] sm:$0xf]
      %v508 = vld [vmem:[%s404 + $0x38] sm:$0xf]
      %v509 = vld [vmem:[%s404 + $0x3c] sm:$0xf]
      %v526 = vunpack.c.l.b16 %v494
      %v527 = vunpack.c.l.b16 %v495
      %v528 = vunpack.c.l.b16 %v496
      %v529 = vunpack.c.l.b16 %v497
      %v530 = vunpack.c.l.b16 %v498
      %v531 = vunpack.c.l.b16 %v499
      %v532 = vunpack.c.l.b16 %v500
      %v533 = vunpack.c.l.b16 %v501
      %v534 = vunpack.c.l.b16 %v502
      %v535 = vunpack.c.l.b16 %v503
      %v536 = vunpack.c.l.b16 %v504
      %v537 = vunpack.c.l.b16 %v505
      %v538 = vunpack.c.l.b16 %v506
      %v539 = vunpack.c.l.b16 %v507
      %v540 = vunpack.c.l.b16 %v508
      %v541 = vunpack.c.l.b16 %v509
      %v542 = vpack.c.b16 %v527, %v526
      %v543 = vpack.c.b16 %v529, %v528
      %v544 = vpack.c.b16 %v531, %v530
      %v545 = vpack.c.b16 %v533, %v532
      %v546 = vpack.c.b16 %v535, %v534
      %v547 = vpack.c.b16 %v537, %v536
      %v548 = vpack.c.b16 %v539, %v538
      %v549 = vpack.c.b16 %v541, %v540
      %550 = vrot.lane.b32.xlu0 %v542, 4
      %v551 = vpop.permute.xlu0 %550
      %552 = vrot.lane.b32.xlu0 %v543, 4
      %v553 = vpop.permute.xlu0 %552
      %554 = vrot.lane.b32.xlu0 %v544, 4
      %v555 = vpop.permute.xlu0 %554
      %556 = vrot.lane.b32.xlu0 %v545, 4
      %v557 = vpop.permute.xlu0 %556
      %558 = vrot.lane.b32.xlu0 %v546, 4
      %v559 = vpop.permute.xlu0 %558
      %560 = vrot.lane.b32.xlu0 %v547, 4
      %v561 = vpop.permute.xlu0 %560
      %562 = vrot.lane.b32.xlu0 %v548, 4
      %v563 = vpop.permute.xlu0 %562
      %564 = vrot.lane.b32.xlu0 %v549, 4
      %v565 = vpop.permute.xlu0 %564
      %vm574 = vcmask 64544
      %575 = vst.msk [vmem:[#allocation2] sm:$0xff] %vm574, %v551
      %576 = vst.msk [vmem:[#allocation2 + $0x8] sm:$0xff] %vm574, %v553
      %577 = vst.msk [vmem:[#allocation2 + $0x10] sm:$0xff] %vm574, %v555
      %578 = vst.msk [vmem:[#allocation2 + $0x18] sm:$0xff] %vm574, %v557
      %579 = vst.msk [vmem:[#allocation2 + $0x20] sm:$0xff] %vm574, %v559
      %580 = vst.msk [vmem:[#allocation2 + $0x28] sm:$0xff] %vm574, %v561
      %581 = vst.msk [vmem:[#allocation2 + $0x30] sm:$0xff] %vm574, %v563
      %582 = vst.msk [vmem:[#allocation2 + $0x38] sm:$0xff] %vm574, %v565
      %v583 = vld [vmem:[%s399] sm:$0xf]
      %v584 = vld [vmem:[%s399 + $0x4] sm:$0xf]
      %v585 = vld [vmem:[%s399 + $0x8] sm:$0xf]
      %v586 = vld [vmem:[%s399 + $0xc] sm:$0xf]
      %v587 = vld [vmem:[%s399 + $0x10] sm:$0xf]
      %v588 = vld [vmem:[%s399 + $0x14] sm:$0xf]
      %v589 = vld [vmem:[%s399 + $0x18] sm:$0xf]
      %v590 = vld [vmem:[%s399 + $0x1c] sm:$0xf]
      %v591 = vld [vmem:[%s399 + $0x20] sm:$0xf]
      %v592 = vld [vmem:[%s399 + $0x24] sm:$0xf]
      %v593 = vld [vmem:[%s399 + $0x28] sm:$0xf]
      %v594 = vld [vmem:[%s399 + $0x2c] sm:$0xf]
      %v595 = vld [vmem:[%s399 + $0x30] sm:$0xf]
      %v596 = vld [vmem:[%s399 + $0x34] sm:$0xf]
      %v597 = vld [vmem:[%s399 + $0x38] sm:$0xf]
      %v598 = vld [vmem:[%s399 + $0x3c] sm:$0xf]
      %v599 = vld [vmem:[%s399 + $0x40] sm:$0x1]
      %v617 = vunpack.c.l.b16 %v583
      %v618 = vunpack.c.l.b16 %v584
      %v619 = vunpack.c.l.b16 %v585
      %v620 = vunpack.c.l.b16 %v586
      %v621 = vunpack.c.l.b16 %v587
      %v622 = vunpack.c.l.b16 %v588
      %v623 = vunpack.c.l.b16 %v589
      %v624 = vunpack.c.l.b16 %v590
      %v625 = vunpack.c.l.b16 %v591
      %v626 = vunpack.c.l.b16 %v592
      %v627 = vunpack.c.l.b16 %v593
      %v628 = vunpack.c.l.b16 %v594
      %v629 = vunpack.c.l.b16 %v595
      %v630 = vunpack.c.l.b16 %v596
      %v631 = vunpack.c.l.b16 %v597
      %v632 = vunpack.c.l.b16 %v598
      %v633 = vunpack.c.l.b16 %v599
      %v634 = vpack.c.b16 %v618, %v617
      %v635 = vpack.c.b16 %v620, %v619
      %v636 = vpack.c.b16 %v622, %v621
      %v637 = vpack.c.b16 %v624, %v623
      %v638 = vpack.c.b16 %v626, %v625
      %v639 = vpack.c.b16 %v628, %v627
      %v640 = vpack.c.b16 %v630, %v629
      %v641 = vpack.c.b16 %v632, %v631
      %v642 = vpack.c.b16 %v633, %v633
      %vm643 = vsmask.f32 7424
      %v645 = vshrl.u32 %v634, 16
      %v647 = vshll.u32 %v634, 16
      %v649 = vrot.slane %v647, 1
      %v650 = vor.u32 %v645, %v649
      %v652 = vshll.u32 %v635, 16
      %v654 = vrot.slane %v652, 1
      %v655 = vsel %vm643, %v650, %v654
      %v656 = vshrl.u32 %v635, 16
      %v658 = vor.u32 %v656, %v654
      %v660 = vshll.u32 %v636, 16
      %v662 = vrot.slane %v660, 1
      %v663 = vsel %vm643, %v658, %v662
      %v664 = vshrl.u32 %v636, 16
      %v666 = vor.u32 %v664, %v662
      %v668 = vshll.u32 %v637, 16
      %v670 = vrot.slane %v668, 1
      %v671 = vsel %vm643, %v666, %v670
      %v672 = vshrl.u32 %v637, 16
      %v674 = vor.u32 %v672, %v670
      %v676 = vshll.u32 %v638, 16
      %v678 = vrot.slane %v676, 1
      %v679 = vsel %vm643, %v674, %v678
      %v680 = vshrl.u32 %v638, 16
      %v682 = vor.u32 %v680, %v678
      %v684 = vshll.u32 %v639, 16
      %v686 = vrot.slane %v684, 1
      %v687 = vsel %vm643, %v682, %v686
      %v688 = vshrl.u32 %v639, 16
      %v690 = vor.u32 %v688, %v686
      %v692 = vshll.u32 %v640, 16
      %v694 = vrot.slane %v692, 1
      %v695 = vsel %vm643, %v690, %v694
      %v696 = vshrl.u32 %v640, 16
      %v698 = vor.u32 %v696, %v694
      %v700 = vshll.u32 %v641, 16
      %v702 = vrot.slane %v700, 1
      %v703 = vsel %vm643, %v698, %v702
      %v704 = vshrl.u32 %v641, 16
      %v706 = vor.u32 %v704, %v702
      %v708 = vshll.u32 %v642, 16
      %v710 = vrot.slane %v708, 1
      %v711 = vsel %vm643, %v706, %v710
      %712 = vrot.lane.b32.xlu0 %v655, 8
      %v713 = vpop.permute.xlu0 %712
      %714 = vrot.lane.b32.xlu0 %v663, 8
      %v715 = vpop.permute.xlu0 %714
      %716 = vrot.lane.b32.xlu0 %v671, 8
      %v717 = vpop.permute.xlu0 %716
      %718 = vrot.lane.b32.xlu0 %v679, 8
      %v719 = vpop.permute.xlu0 %718
      %720 = vrot.lane.b32.xlu0 %v687, 8
      %v721 = vpop.permute.xlu0 %720
      %722 = vrot.lane.b32.xlu0 %v695, 8
      %v723 = vpop.permute.xlu0 %722
      %724 = vrot.lane.b32.xlu0 %v703, 8
      %v725 = vpop.permute.xlu0 %724
      %726 = vrot.lane.b32.xlu0 %v711, 8
      %v727 = vpop.permute.xlu0 %726
      %vm736 = vcmask 97344
      %737 = vst.msk [vmem:[#allocation2] sm:$0xff] %vm736, %v713
      %738 = vst.msk [vmem:[#allocation2 + $0x8] sm:$0xff] %vm736, %v715
      %739 = vst.msk [vmem:[#allocation2 + $0x10] sm:$0xff] %vm736, %v717
      %740 = vst.msk [vmem:[#allocation2 + $0x18] sm:$0xff] %vm736, %v719
      %741 = vst.msk [vmem:[#allocation2 + $0x20] sm:$0xff] %vm736, %v721
      %742 = vst.msk [vmem:[#allocation2 + $0x28] sm:$0xff] %vm736, %v723
      %743 = vst.msk [vmem:[#allocation2 + $0x30] sm:$0xff] %vm736, %v725
      %744 = vst.msk [vmem:[#allocation2 + $0x38] sm:$0xff] %vm736, %v727
      %v745 = vld [vmem:[%s409] sm:$0xf]
      %v746 = vld [vmem:[%s409 + $0x4] sm:$0xf]
      %v747 = vld [vmem:[%s409 + $0x8] sm:$0xf]
      %v748 = vld [vmem:[%s409 + $0xc] sm:$0xf]
      %v749 = vld [vmem:[%s409 + $0x10] sm:$0xf]
      %v750 = vld [vmem:[%s409 + $0x14] sm:$0xf]
      %v751 = vld [vmem:[%s409 + $0x18] sm:$0xf]
      %v752 = vld [vmem:[%s409 + $0x1c] sm:$0xf]
      %v753 = vld [vmem:[%s409 + $0x20] sm:$0xf]
      %v754 = vld [vmem:[%s409 + $0x24] sm:$0xf]
      %v755 = vld [vmem:[%s409 + $0x28] sm:$0xf]
      %v756 = vld [vmem:[%s409 + $0x2c] sm:$0xf]
      %v757 = vld [vmem:[%s409 + $0x30] sm:$0xf]
      %v758 = vld [vmem:[%s409 + $0x34] sm:$0xf]
      %v759 = vld [vmem:[%s409 + $0x38] sm:$0xf]
      %v760 = vld [vmem:[%s409 + $0x3c] sm:$0xf]
      %v777 = vunpack.c.l.b16 %v745
      %v778 = vunpack.c.l.b16 %v746
      %v779 = vunpack.c.l.b16 %v747
      %v780 = vunpack.c.l.b16 %v748
      %v781 = vunpack.c.l.b16 %v749
      %v782 = vunpack.c.l.b16 %v750
      %v783 = vunpack.c.l.b16 %v751
      %v784 = vunpack.c.l.b16 %v752
      %v785 = vunpack.c.l.b16 %v753
      %v786 = vunpack.c.l.b16 %v754
      %v787 = vunpack.c.l.b16 %v755
      %v788 = vunpack.c.l.b16 %v756
      %v789 = vunpack.c.l.b16 %v757
      %v790 = vunpack.c.l.b16 %v758
      %v791 = vunpack.c.l.b16 %v759
      %v792 = vunpack.c.l.b16 %v760
      %v793 = vpack.c.b16 %v778, %v777
      %v794 = vpack.c.b16 %v780, %v779
      %v795 = vpack.c.b16 %v782, %v781
      %v796 = vpack.c.b16 %v784, %v783
      %v797 = vpack.c.b16 %v786, %v785
      %v798 = vpack.c.b16 %v788, %v787
      %v799 = vpack.c.b16 %v790, %v789
      %v800 = vpack.c.b16 %v792, %v791
      %801 = vrot.lane.b32.xlu0 %v793, 12
      %v802 = vpop.permute.xlu0 %801
      %803 = vrot.lane.b32.xlu0 %v794, 12
      %v804 = vpop.permute.xlu0 %803
      %805 = vrot.lane.b32.xlu0 %v795, 12
      %v806 = vpop.permute.xlu0 %805
      %807 = vrot.lane.b32.xlu0 %v796, 12
      %v808 = vpop.permute.xlu0 %807
      %809 = vrot.lane.b32.xlu0 %v797, 12
      %v810 = vpop.permute.xlu0 %809
      %811 = vrot.lane.b32.xlu0 %v798, 12
      %v812 = vpop.permute.xlu0 %811
      %813 = vrot.lane.b32.xlu0 %v799, 12
      %v814 = vpop.permute.xlu0 %813
      %815 = vrot.lane.b32.xlu0 %v800, 12
      %v816 = vpop.permute.xlu0 %815
      %vm825 = vcmask 130144
      %826 = vst.msk [vmem:[#allocation2] sm:$0xff] %vm825, %v802
      %827 = vst.msk [vmem:[#allocation2 + $0x8] sm:$0xff] %vm825, %v804
      %828 = vst.msk [vmem:[#allocation2 + $0x10] sm:$0xff] %vm825, %v806
      %829 = vst.msk [vmem:[#allocation2 + $0x18] sm:$0xff] %vm825, %v808
      %830 = vst.msk [vmem:[#allocation2 + $0x20] sm:$0xff] %vm825, %v810
      %831 = vst.msk [vmem:[#allocation2 + $0x28] sm:$0xff] %vm825, %v812
      %832 = vst.msk [vmem:[#allocation2 + $0x30] sm:$0xff] %vm825, %v814
      %833 = vst.msk [vmem:[#allocation2 + $0x38] sm:$0xff] %vm825, %v816
      %v834 = vld [vmem:[%s414] sm:$0xf]
      %v835 = vld [vmem:[%s414 + $0x4] sm:$0xf]
      %v836 = vld [vmem:[%s414 + $0x8] sm:$0xf]
      %v837 = vld [vmem:[%s414 + $0xc] sm:$0xf]
      %v838 = vld [vmem:[%s414 + $0x10] sm:$0xf]
      %v839 = vld [vmem:[%s414 + $0x14] sm:$0xf]
      %v840 = vld [vmem:[%s414 + $0x18] sm:$0xf]
      %v841 = vld [vmem:[%s414 + $0x1c] sm:$0xf]
      %v842 = vld [vmem:[%s414 + $0x20] sm:$0xf]
      %v843 = vld [vmem:[%s414 + $0x24] sm:$0xf]
      %v844 = vld [vmem:[%s414 + $0x28] sm:$0xf]
      %v845 = vld [vmem:[%s414 + $0x2c] sm:$0xf]
      %v846 = vld [vmem:[%s414 + $0x30] sm:$0xf]
      %v847 = vld [vmem:[%s414 + $0x34] sm:$0xf]
      %v848 = vld [vmem:[%s414 + $0x38] sm:$0xf]
      %v849 = vld [vmem:[%s414 + $0x3c] sm:$0xf]
      %v866 = vunpack.c.l.b16 %v834
      %v867 = vunpack.c.l.b16 %v835
      %v868 = vunpack.c.l.b16 %v836
      %v869 = vunpack.c.l.b16 %v837
      %v870 = vunpack.c.l.b16 %v838
      %v871 = vunpack.c.l.b16 %v839
      %v872 = vunpack.c.l.b16 %v840
      %v873 = vunpack.c.l.b16 %v841
      %v874 = vunpack.c.l.b16 %v842
      %v875 = vunpack.c.l.b16 %v843
      %v876 = vunpack.c.l.b16 %v844
      %v877 = vunpack.c.l.b16 %v845
      %v878 = vunpack.c.l.b16 %v846
      %v879 = vunpack.c.l.b16 %v847
      %v880 = vunpack.c.l.b16 %v848
      %v881 = vunpack.c.l.b16 %v849
      %v882 = vpack.c.b16 %v867, %v866
      %v883 = vpack.c.b16 %v869, %v868
      %v884 = vpack.c.b16 %v871, %v870
      %v885 = vpack.c.b16 %v873, %v872
      %v886 = vpack.c.b16 %v875, %v874
      %v887 = vpack.c.b16 %v877, %v876
      %v888 = vpack.c.b16 %v879, %v878
      %v889 = vpack.c.b16 %v881, %v880
      %890 = vrot.lane.b32.xlu0 %v882, 16
      %v891 = vpop.permute.xlu0 %890
      %892 = vrot.lane.b32.xlu0 %v883, 16
      %v893 = vpop.permute.xlu0 %892
      %894 = vrot.lane.b32.xlu0 %v884, 16
      %v895 = vpop.permute.xlu0 %894
      %896 = vrot.lane.b32.xlu0 %v885, 16
      %v897 = vpop.permute.xlu0 %896
      %898 = vrot.lane.b32.xlu0 %v886, 16
      %v899 = vpop.permute.xlu0 %898
      %900 = vrot.lane.b32.xlu0 %v887, 16
      %v901 = vpop.permute.xlu0 %900
      %902 = vrot.lane.b32.xlu0 %v888, 16
      %v903 = vpop.permute.xlu0 %902
      %904 = vrot.lane.b32.xlu0 %v889, 16
      %v905 = vpop.permute.xlu0 %904
      %vm914 = vcmask 162944
      %915 = vst.msk [vmem:[#allocation2] sm:$0xff] %vm914, %v891
      %916 = vst.msk [vmem:[#allocation2 + $0x8] sm:$0xff] %vm914, %v893
      %917 = vst.msk [vmem:[#allocation2 + $0x10] sm:$0xff] %vm914, %v895
      %918 = vst.msk [vmem:[#allocation2 + $0x18] sm:$0xff] %vm914, %v897
      %919 = vst.msk [vmem:[#allocation2 + $0x20] sm:$0xff] %vm914, %v899
      %920 = vst.msk [vmem:[#allocation2 + $0x28] sm:$0xff] %vm914, %v901
      %921 = vst.msk [vmem:[#allocation2 + $0x30] sm:$0xff] %vm914, %v903
      %922 = vst.msk [vmem:[#allocation2 + $0x38] sm:$0xff] %vm914, %v905
      %v923 = vld [vmem:[%s409] sm:$0xf]
      %v924 = vld [vmem:[%s409 + $0x4] sm:$0xf]
      %v925 = vld [vmem:[%s409 + $0x8] sm:$0xf]
      %v926 = vld [vmem:[%s409 + $0xc] sm:$0xf]
      %v927 = vld [vmem:[%s409 + $0x10] sm:$0xf]
      %v928 = vld [vmem:[%s409 + $0x14] sm:$0xf]
      %v929 = vld [vmem:[%s409 + $0x18] sm:$0xf]
      %v930 = vld [vmem:[%s409 + $0x1c] sm:$0xf]
      %v931 = vld [vmem:[%s409 + $0x20] sm:$0xf]
      %v932 = vld [vmem:[%s409 + $0x24] sm:$0xf]
      %v933 = vld [vmem:[%s409 + $0x28] sm:$0xf]
      %v934 = vld [vmem:[%s409 + $0x2c] sm:$0xf]
      %v935 = vld [vmem:[%s409 + $0x30] sm:$0xf]
      %v936 = vld [vmem:[%s409 + $0x34] sm:$0xf]
      %v937 = vld [vmem:[%s409 + $0x38] sm:$0xf]
      %v938 = vld [vmem:[%s409 + $0x3c] sm:$0xf]
      %v939 = vld [vmem:[%s409 + $0x40] sm:$0x1]
      %v957 = vunpack.c.l.b16 %v923
      %v958 = vunpack.c.l.b16 %v924
      %v959 = vunpack.c.l.b16 %v925
      %v960 = vunpack.c.l.b16 %v926
      %v961 = vunpack.c.l.b16 %v927
      %v962 = vunpack.c.l.b16 %v928
      %v963 = vunpack.c.l.b16 %v929
      %v964 = vunpack.c.l.b16 %v930
      %v965 = vunpack.c.l.b16 %v931
      %v966 = vunpack.c.l.b16 %v932
      %v967 = vunpack.c.l.b16 %v933
      %v968 = vunpack.c.l.b16 %v934
      %v969 = vunpack.c.l.b16 %v935
      %v970 = vunpack.c.l.b16 %v936
      %v971 = vunpack.c.l.b16 %v937
      %v972 = vunpack.c.l.b16 %v938
      %v973 = vunpack.c.l.b16 %v939
      %v974 = vpack.c.b16 %v958, %v957
      %v975 = vpack.c.b16 %v960, %v959
      %v976 = vpack.c.b16 %v962, %v961
      %v977 = vpack.c.b16 %v964, %v963
      %v978 = vpack.c.b16 %v966, %v965
      %v979 = vpack.c.b16 %v968, %v967
      %v980 = vpack.c.b16 %v970, %v969
      %v981 = vpack.c.b16 %v972, %v971
      %v982 = vpack.c.b16 %v973, %v973
      %v984 = vshrl.u32 %v974, 16
      %v986 = vshll.u32 %v974, 16
      %v988 = vrot.slane %v986, 1
      %v989 = vor.u32 %v984, %v988
      %v991 = vshll.u32 %v975, 16
      %v993 = vrot.slane %v991, 1
      %v994 = vsel %vm643, %v989, %v993
      %v995 = vshrl.u32 %v975, 16
      %v997 = vor.u32 %v995, %v993
      %v999 = vshll.u32 %v976, 16
      %v1001 = vrot.slane %v999, 1
      %v1002 = vsel %vm643, %v997, %v1001
      %v1003 = vshrl.u32 %v976, 16
      %v1005 = vor.u32 %v1003, %v1001
      %v1007 = vshll.u32 %v977, 16
      %v1009 = vrot.slane %v1007, 1
      %v1010 = vsel %vm643, %v1005, %v1009
      %v1011 = vshrl.u32 %v977, 16
      %v1013 = vor.u32 %v1011, %v1009
      %v1015 = vshll.u32 %v978, 16
      %v1017 = vrot.slane %v1015, 1
      %v1018 = vsel %vm643, %v1013, %v1017
      %v1019 = vshrl.u32 %v978, 16
      %v1021 = vor.u32 %v1019, %v1017
      %v1023 = vshll.u32 %v979, 16
      %v1025 = vrot.slane %v1023, 1
      %v1026 = vsel %vm643, %v1021, %v1025
      %v1027 = vshrl.u32 %v979, 16
      %v1029 = vor.u32 %v1027, %v1025
      %v1031 = vshll.u32 %v980, 16
      %v1033 = vrot.slane %v1031, 1
      %v1034 = vsel %vm643, %v1029, %v1033
      %v1035 = vshrl.u32 %v980, 16
      %v1037 = vor.u32 %v1035, %v1033
      %v1039 = vshll.u32 %v981, 16
      %v1041 = vrot.slane %v1039, 1
      %v1042 = vsel %vm643, %v1037, %v1041
      %v1043 = vshrl.u32 %v981, 16
      %v1045 = vor.u32 %v1043, %v1041
      %v1047 = vshll.u32 %v982, 16
      %v1049 = vrot.slane %v1047, 1
      %v1050 = vsel %vm643, %v1045, %v1049
      %1051 = vrot.lane.b32.xlu0 %v994, 20
      %v1052 = vpop.permute.xlu0 %1051
      %1053 = vrot.lane.b32.xlu0 %v1002, 20
      %v1054 = vpop.permute.xlu0 %1053
      %1055 = vrot.lane.b32.xlu0 %v1010, 20
      %v1056 = vpop.permute.xlu0 %1055
      %1057 = vrot.lane.b32.xlu0 %v1018, 20
      %v1058 = vpop.permute.xlu0 %1057
      %1059 = vrot.lane.b32.xlu0 %v1026, 20
      %v1060 = vpop.permute.xlu0 %1059
      %1061 = vrot.lane.b32.xlu0 %v1034, 20
      %v1062 = vpop.permute.xlu0 %1061
      %1063 = vrot.lane.b32.xlu0 %v1042, 20
      %v1064 = vpop.permute.xlu0 %1063
      %1065 = vrot.lane.b32.xlu0 %v1050, 20
      %v1066 = vpop.permute.xlu0 %1065
      %vm1075 = vcmask 195744
      %1076 = vst.msk [vmem:[#allocation2] sm:$0xff] %vm1075, %v1052
      %1077 = vst.msk [vmem:[#allocation2 + $0x8] sm:$0xff] %vm1075, %v1054
      %1078 = vst.msk [vmem:[#allocation2 + $0x10] sm:$0xff] %vm1075, %v1056
      %1079 = vst.msk [vmem:[#allocation2 + $0x18] sm:$0xff] %vm1075, %v1058
      %1080 = vst.msk [vmem:[#allocation2 + $0x20] sm:$0xff] %vm1075, %v1060
      %1081 = vst.msk [vmem:[#allocation2 + $0x28] sm:$0xff] %vm1075, %v1062
      %1082 = vst.msk [vmem:[#allocation2 + $0x30] sm:$0xff] %vm1075, %v1064
      %1083 = vst.msk [vmem:[#allocation2 + $0x38] sm:$0xff] %vm1075, %v1066
      %v1084 = vld [vmem:[%s399 + $0x8] sm:$0xf]
      %v1085 = vld [vmem:[%s399 + $0xc] sm:$0xf]
      %v1086 = vld [vmem:[%s399 + $0x10] sm:$0xf]
      %v1087 = vld [vmem:[%s399 + $0x14] sm:$0xf]
      %v1088 = vld [vmem:[%s399 + $0x18] sm:$0xf]
      %v1089 = vld [vmem:[%s399 + $0x1c] sm:$0xf]
      %v1090 = vld [vmem:[%s399 + $0x20] sm:$0xf]
      %v1091 = vld [vmem:[%s399 + $0x24] sm:$0xf]
      %v1092 = vld [vmem:[%s399 + $0x28] sm:$0xf]
      %v1093 = vld [vmem:[%s399 + $0x2c] sm:$0xf]
      %v1094 = vld [vmem:[%s399 + $0x30] sm:$0xf]
      %v1095 = vld [vmem:[%s399 + $0x34] sm:$0xf]
      %v1096 = vld [vmem:[%s399 + $0x38] sm:$0xf]
      %v1097 = vld [vmem:[%s399 + $0x3c] sm:$0xf]
      %v1098 = vld [vmem:[%s399 + $0x40] sm:$0xf]
      %v1099 = vld [vmem:[%s399 + $0x44] sm:$0xf]
      %v1116 = vunpack.c.l.b16 %v1084
      %v1117 = vunpack.c.l.b16 %v1085
      %v1118 = vunpack.c.l.b16 %v1086
      %v1119 = vunpack.c.l.b16 %v1087
      %v1120 = vunpack.c.l.b16 %v1088
      %v1121 = vunpack.c.l.b16 %v1089
      %v1122 = vunpack.c.l.b16 %v1090
      %v1123 = vunpack.c.l.b16 %v1091
      %v1124 = vunpack.c.l.b16 %v1092
      %v1125 = vunpack.c.l.b16 %v1093
      %v1126 = vunpack.c.l.b16 %v1094
      %v1127 = vunpack.c.l.b16 %v1095
      %v1128 = vunpack.c.l.b16 %v1096
      %v1129 = vunpack.c.l.b16 %v1097
      %v1130 = vunpack.c.l.b16 %v1098
      %v1131 = vunpack.c.l.b16 %v1099
      %v1132 = vpack.c.b16 %v1117, %v1116
      %v1133 = vpack.c.b16 %v1119, %v1118
      %v1134 = vpack.c.b16 %v1121, %v1120
      %v1135 = vpack.c.b16 %v1123, %v1122
      %v1136 = vpack.c.b16 %v1125, %v1124
      %v1137 = vpack.c.b16 %v1127, %v1126
      %v1138 = vpack.c.b16 %v1129, %v1128
      %v1139 = vpack.c.b16 %v1131, %v1130
      %1140 = vrot.lane.b32.xlu0 %v1132, 24
      %v1141 = vpop.permute.xlu0 %1140
      %1142 = vrot.lane.b32.xlu0 %v1133, 24
      %v1143 = vpop.permute.xlu0 %1142
      %1144 = vrot.lane.b32.xlu0 %v1134, 24
      %v1145 = vpop.permute.xlu0 %1144
      %1146 = vrot.lane.b32.xlu0 %v1135, 24
      %v1147 = vpop.permute.xlu0 %1146
      %1148 = vrot.lane.b32.xlu0 %v1136, 24
      %v1149 = vpop.permute.xlu0 %1148
      %1150 = vrot.lane.b32.xlu0 %v1137, 24
      %v1151 = vpop.permute.xlu0 %1150
      %1152 = vrot.lane.b32.xlu0 %v1138, 24
      %v1153 = vpop.permute.xlu0 %1152
      %1154 = vrot.lane.b32.xlu0 %v1139, 24
      %v1155 = vpop.permute.xlu0 %1154
      %vm1164 = vcmask 228544
      %1165 = vst.msk [vmem:[#allocation2] sm:$0xff] %vm1164, %v1141
      %1166 = vst.msk [vmem:[#allocation2 + $0x8] sm:$0xff] %vm1164, %v1143
      %1167 = vst.msk [vmem:[#allocation2 + $0x10] sm:$0xff] %vm1164, %v1145
      %1168 = vst.msk [vmem:[#allocation2 + $0x18] sm:$0xff] %vm1164, %v1147
      %1169 = vst.msk [vmem:[#allocation2 + $0x20] sm:$0xff] %vm1164, %v1149
      %1170 = vst.msk [vmem:[#allocation2 + $0x28] sm:$0xff] %vm1164, %v1151
      %1171 = vst.msk [vmem:[#allocation2 + $0x30] sm:$0xff] %vm1164, %v1153
      %1172 = vst.msk [vmem:[#allocation2 + $0x38] sm:$0xff] %vm1164, %v1155
      %v1173 = vld [vmem:[%s404 + $0x8] sm:$0xf]
      %v1174 = vld [vmem:[%s404 + $0xc] sm:$0xf]
      %v1175 = vld [vmem:[%s404 + $0x10] sm:$0xf]
      %v1176 = vld [vmem:[%s404 + $0x14] sm:$0xf]
      %v1177 = vld [vmem:[%s404 + $0x18] sm:$0xf]
      %v1178 = vld [vmem:[%s404 + $0x1c] sm:$0xf]
      %v1179 = vld [vmem:[%s404 + $0x20] sm:$0xf]
      %v1180 = vld [vmem:[%s404 + $0x24] sm:$0xf]
      %v1181 = vld [vmem:[%s404 + $0x28] sm:$0xf]
      %v1182 = vld [vmem:[%s404 + $0x2c] sm:$0xf]
      %v1183 = vld [vmem:[%s404 + $0x30] sm:$0xf]
      %v1184 = vld [vmem:[%s404 + $0x34] sm:$0xf]
      %v1185 = vld [vmem:[%s404 + $0x38] sm:$0xf]
      %v1186 = vld [vmem:[%s404 + $0x3c] sm:$0xf]
      %v1187 = vld [vmem:[%s404 + $0x40] sm:$0xf]
      %v1188 = vld [vmem:[%s404 + $0x44] sm:$0xf]
      %v1205 = vunpack.c.l.b16 %v1173
      %v1206 = vunpack.c.l.b16 %v1174
      %v1207 = vunpack.c.l.b16 %v1175
      %v1208 = vunpack.c.l.b16 %v1176
      %v1209 = vunpack.c.l.b16 %v1177
      %v1210 = vunpack.c.l.b16 %v1178
      %v1211 = vunpack.c.l.b16 %v1179
      %v1212 = vunpack.c.l.b16 %v1180
      %v1213 = vunpack.c.l.b16 %v1181
      %v1214 = vunpack.c.l.b16 %v1182
      %v1215 = vunpack.c.l.b16 %v1183
      %v1216 = vunpack.c.l.b16 %v1184
      %v1217 = vunpack.c.l.b16 %v1185
      %v1218 = vunpack.c.l.b16 %v1186
      %v1219 = vunpack.c.l.b16 %v1187
      %v1220 = vunpack.c.l.b16 %v1188
      %v1221 = vpack.c.b16 %v1206, %v1205
      %v1222 = vpack.c.b16 %v1208, %v1207
      %v1223 = vpack.c.b16 %v1210, %v1209
      %v1224 = vpack.c.b16 %v1212, %v1211
      %v1225 = vpack.c.b16 %v1214, %v1213
      %v1226 = vpack.c.b16 %v1216, %v1215
      %v1227 = vpack.c.b16 %v1218, %v1217
      %v1228 = vpack.c.b16 %v1220, %v1219
      %1229 = vrot.lane.b32.xlu0 %v1221, 28
      %v1230 = vpop.permute.xlu0 %1229
      %1231 = vrot.lane.b32.xlu0 %v1222, 28
      %v1232 = vpop.permute.xlu0 %1231
      %1233 = vrot.lane.b32.xlu0 %v1223, 28
      %v1234 = vpop.permute.xlu0 %1233
      %1235 = vrot.lane.b32.xlu0 %v1224, 28
      %v1236 = vpop.permute.xlu0 %1235
      %1237 = vrot.lane.b32.xlu0 %v1225, 28
      %v1238 = vpop.permute.xlu0 %1237
      %1239 = vrot.lane.b32.xlu0 %v1226, 28
      %v1240 = vpop.permute.xlu0 %1239
      %1241 = vrot.lane.b32.xlu0 %v1227, 28
      %v1242 = vpop.permute.xlu0 %1241
      %1243 = vrot.lane.b32.xlu0 %v1228, 28
      %v1244 = vpop.permute.xlu0 %1243
      %vm1253 = vcmask 261344
      %1254 = vst.msk [vmem:[#allocation2] sm:$0xff] %vm1253, %v1230
      %1255 = vst.msk [vmem:[#allocation2 + $0x8] sm:$0xff] %vm1253, %v1232
      %1256 = vst.msk [vmem:[#allocation2 + $0x10] sm:$0xff] %vm1253, %v1234
      %1257 = vst.msk [vmem:[#allocation2 + $0x18] sm:$0xff] %vm1253, %v1236
      %1258 = vst.msk [vmem:[#allocation2 + $0x20] sm:$0xff] %vm1253, %v1238
      %1259 = vst.msk [vmem:[#allocation2 + $0x28] sm:$0xff] %vm1253, %v1240
      %1260 = vst.msk [vmem:[#allocation2 + $0x30] sm:$0xff] %vm1253, %v1242
      %1261 = vst.msk [vmem:[#allocation2 + $0x38] sm:$0xff] %vm1253, %v1244
      %v1262 = vld [vmem:[%s399 + $0x8] sm:$0xf]
      %v1263 = vld [vmem:[%s399 + $0xc] sm:$0xf]
      %v1264 = vld [vmem:[%s399 + $0x10] sm:$0xf]
      %v1265 = vld [vmem:[%s399 + $0x14] sm:$0xf]
      %v1266 = vld [vmem:[%s399 + $0x18] sm:$0xf]
      %v1267 = vld [vmem:[%s399 + $0x1c] sm:$0xf]
      %v1268 = vld [vmem:[%s399 + $0x20] sm:$0xf]
      %v1269 = vld [vmem:[%s399 + $0x24] sm:$0xf]
      %v1270 = vld [vmem:[%s399 + $0x28] sm:$0xf]
      %v1271 = vld [vmem:[%s399 + $0x2c] sm:$0xf]
      %v1272 = vld [vmem:[%s399 + $0x30] sm:$0xf]
      %v1273 = vld [vmem:[%s399 + $0x34] sm:$0xf]
      %v1274 = vld [vmem:[%s399 + $0x38] sm:$0xf]
      %v1275 = vld [vmem:[%s399 + $0x3c] sm:$0xf]
      %v1276 = vld [vmem:[%s399 + $0x40] sm:$0xf]
      %v1277 = vld [vmem:[%s399 + $0x44] sm:$0xf]
      %v1278 = vld [vmem:[%s399 + $0x48] sm:$0x1]
      %v1296 = vunpack.c.l.b16 %v1262
      %v1297 = vunpack.c.l.b16 %v1263
      %v1298 = vunpack.c.l.b16 %v1264
      %v1299 = vunpack.c.l.b16 %v1265
      %v1300 = vunpack.c.l.b16 %v1266
      %v1301 = vunpack.c.l.b16 %v1267
      %v1302 = vunpack.c.l.b16 %v1268
      %v1303 = vunpack.c.l.b16 %v1269
      %v1304 = vunpack.c.l.b16 %v1270
      %v1305 = vunpack.c.l.b16 %v1271
      %v1306 = vunpack.c.l.b16 %v1272
      %v1307 = vunpack.c.l.b16 %v1273
      %v1308 = vunpack.c.l.b16 %v1274
      %v1309 = vunpack.c.l.b16 %v1275
      %v1310 = vunpack.c.l.b16 %v1276
      %v1311 = vunpack.c.l.b16 %v1277
      %v1312 = vunpack.c.l.b16 %v1278
      %v1313 = vpack.c.b16 %v1297, %v1296
      %v1314 = vpack.c.b16 %v1299, %v1298
      %v1315 = vpack.c.b16 %v1301, %v1300
      %v1316 = vpack.c.b16 %v1303, %v1302
      %v1317 = vpack.c.b16 %v1305, %v1304
      %v1318 = vpack.c.b16 %v1307, %v1306
      %v1319 = vpack.c.b16 %v1309, %v1308
      %v1320 = vpack.c.b16 %v1311, %v1310
      %v1321 = vpack.c.b16 %v1312, %v1312
      %v1323 = vshrl.u32 %v1313, 16
      %v1325 = vshll.u32 %v1313, 16
      %v1327 = vrot.slane %v1325, 1
      %v1328 = vor.u32 %v1323, %v1327
      %v1330 = vshll.u32 %v1314, 16
      %v1332 = vrot.slane %v1330, 1
      %v1333 = vsel %vm643, %v1328, %v1332
      %v1334 = vshrl.u32 %v1314, 16
      %v1336 = vor.u32 %v1334, %v1332
      %v1338 = vshll.u32 %v1315, 16
      %v1340 = vrot.slane %v1338, 1
      %v1341 = vsel %vm643, %v1336, %v1340
      %v1342 = vshrl.u32 %v1315, 16
      %v1344 = vor.u32 %v1342, %v1340
      %v1346 = vshll.u32 %v1316, 16
      %v1348 = vrot.slane %v1346, 1
      %v1349 = vsel %vm643, %v1344, %v1348
      %v1350 = vshrl.u32 %v1316, 16
      %v1352 = vor.u32 %v1350, %v1348
      %v1354 = vshll.u32 %v1317, 16
      %v1356 = vrot.slane %v1354, 1
      %v1357 = vsel %vm643, %v1352, %v1356
      %v1358 = vshrl.u32 %v1317, 16
      %v1360 = vor.u32 %v1358, %v1356
      %v1362 = vshll.u32 %v1318, 16
      %v1364 = vrot.slane %v1362, 1
      %v1365 = vsel %vm643, %v1360, %v1364
      %v1366 = vshrl.u32 %v1318, 16
      %v1368 = vor.u32 %v1366, %v1364
      %v1370 = vshll.u32 %v1319, 16
      %v1372 = vrot.slane %v1370, 1
      %v1373 = vsel %vm643, %v1368, %v1372
      %v1374 = vshrl.u32 %v1319, 16
      %v1376 = vor.u32 %v1374, %v1372
      %v1378 = vshll.u32 %v1320, 16
      %v1380 = vrot.slane %v1378, 1
      %v1381 = vsel %vm643, %v1376, %v1380
      %v1382 = vshrl.u32 %v1320, 16
      %v1384 = vor.u32 %v1382, %v1380
      %v1386 = vshll.u32 %v1321, 16
      %v1388 = vrot.slane %v1386, 1
      %v1389 = vsel %vm643, %v1384, %v1388
      %1390 = vrot.lane.b32.xlu0 %v1333, 32
      %v1391 = vpop.permute.xlu0 %1390
      %1392 = vrot.lane.b32.xlu0 %v1341, 32
      %v1393 = vpop.permute.xlu0 %1392
      %1394 = vrot.lane.b32.xlu0 %v1349, 32
      %v1395 = vpop.permute.xlu0 %1394
      %1396 = vrot.lane.b32.xlu0 %v1357, 32
      %v1397 = vpop.permute.xlu0 %1396
      %1398 = vrot.lane.b32.xlu0 %v1365, 32
      %v1399 = vpop.permute.xlu0 %1398
      %1400 = vrot.lane.b32.xlu0 %v1373, 32
      %v1401 = vpop.permute.xlu0 %1400
      %1402 = vrot.lane.b32.xlu0 %v1381, 32
      %v1403 = vpop.permute.xlu0 %1402
      %1404 = vrot.lane.b32.xlu0 %v1389, 32
      %v1405 = vpop.permute.xlu0 %1404
      %vm1414 = vcmask 294144
      %1415 = vst.msk [vmem:[#allocation2] sm:$0xff] %vm1414, %v1391
      %1416 = vst.msk [vmem:[#allocation2 + $0x8] sm:$0xff] %vm1414, %v1393
      %1417 = vst.msk [vmem:[#allocation2 + $0x10] sm:$0xff] %vm1414, %v1395
      %1418 = vst.msk [vmem:[#allocation2 + $0x18] sm:$0xff] %vm1414, %v1397
      %1419 = vst.msk [vmem:[#allocation2 + $0x20] sm:$0xff] %vm1414, %v1399
      %1420 = vst.msk [vmem:[#allocation2 + $0x28] sm:$0xff] %vm1414, %v1401
      %1421 = vst.msk [vmem:[#allocation2 + $0x30] sm:$0xff] %vm1414, %v1403
      %1422 = vst.msk [vmem:[#allocation2 + $0x38] sm:$0xff] %vm1414, %v1405
      %v1423 = vld [vmem:[#allocation2] sm:$0xff]
      %v1424 = vld [vmem:[#allocation2 + $0x8] sm:$0xff]
      %v1425 = vld [vmem:[#allocation2 + $0x10] sm:$0xff]
      %v1426 = vld [vmem:[#allocation2 + $0x18] sm:$0xff]
      %v1427 = vld [vmem:[#allocation2 + $0x20] sm:$0xff]
      %v1428 = vld [vmem:[#allocation2 + $0x28] sm:$0xff]
      %v1429 = vld [vmem:[#allocation2 + $0x30] sm:$0xff]
      %v1430 = vld [vmem:[#allocation2 + $0x38] sm:$0xff]
      %v1431 = vld [vmem:[%s5] sm:$0xf]
      %v1432 = vld [vmem:[%s5 + $0x4] sm:$0xf]
      %v1433 = vld [vmem:[%s5 + $0x8] sm:$0xf]
      %v1434 = vld [vmem:[%s5 + $0xc] sm:$0xf]
      %v1435 = vld [vmem:[%s5 + $0x10] sm:$0x3]
      %v1436 = vld [vmem:[%s6] sm:$0x1]
      %v1438 = vlaneseq
      %v1439 = vshrl.u32 %v1438, 7
      %v1440 = vsub.s32 0, %v1439
      %v1441 = vrot.slane %v1436, %v1440
      %v1448 = vunpack.c.l.b16 %v1431
      %v1449 = vunpack.c.l.b16 %v1432
      %v1450 = vunpack.c.l.b16 %v1433
      %v1451 = vunpack.c.l.b16 %v1434
      %v1452 = vunpack.c.l.b16 %v1435
      %v1453 = vpack.c.b16 %v1449, %v1448
      %v1454 = vpack.c.b16 %v1451, %v1450
      %v1455 = vpack.c.b16 %v1452, %v1452
      %vm1458 = vcmask 293888
      %v1460 = vsel %vm1458, %v1423, 0
      %v1463 = vsel %vm1458, %v1424, 0
      %v1466 = vsel %vm1458, %v1425, 0
      %v1469 = vsel %vm1458, %v1426, 0
      %v1472 = vsel %vm1458, %v1427, 0
      %v1475 = vsel %vm1458, %v1428, 0
      %v1478 = vsel %vm1458, %v1429, 0
      %v1481 = vsel %vm1458, %v1430, 0
      %vm1483 = vcmask 1041408
      %v1485 = vsel %vm1483, %v1455, 0
      %1487 = vmatprep.subr.bf16.mxu0 0
      %1488 = vmatpush1.bf16.msra.mxu0 %v1453
      %1489 = vmatprep.subr.bf16.mxu0 0
      %1490 = vmatpush1.bf16.msra.mxu0 %v1454
      %1491 = vmatprep.subr.bf16.mxu0 0
      %1492 = vmatpush1.bf16.msra.mxu0 %v1485
      %1493 = vmatprep.subr.bf16.mxu0 0
      %1494 = vmatpush1.bf16.msra.mxu0 0
      %1495 = vmatprep.subr.bf16.mxu0 0
      %1496 = vmatpush1.bf16.msra.mxu0 0
      %1497 = vmatprep.subr.bf16.mxu0 0
      %1498 = vmatpush1.bf16.msra.mxu0 0
      %1499 = vmatprep.subr.bf16.mxu0 0
      %1500 = vmatpush1.bf16.msra.mxu0 0
      %1501 = vmatprep.subr.bf16.mxu0 0
      %1502 = vmatpush1.bf16.msra.mxu0 0
      %1503 = vmatprep.subr.bf16.mxu0 0
      %1504 = vmatpush1.bf16.msra.mxu0 0
      %1505 = vmatprep.subr.bf16.mxu0 0
      %1506 = vmatpush1.bf16.msra.mxu0 0
      %1507 = vmatprep.subr.bf16.mxu0 0
      %1508 = vmatpush1.bf16.msra.mxu0 0
      %1509 = vmatprep.subr.bf16.mxu0 0
      %1510 = vmatpush1.bf16.msra.mxu0 0
      %1511 = vmatprep.subr.bf16.mxu0 0
      %1512 = vmatpush1.bf16.msra.mxu0 0
      %1513 = vmatprep.subr.bf16.mxu0 0
      %1514 = vmatpush1.bf16.msra.mxu0 0
      %1515 = vmatprep.subr.bf16.mxu0 0
      %1516 = vmatpush1.bf16.msra.mxu0 0
      %1517 = vmatprep.subr.bf16.mxu0 0
      %1518 = vmatpush1.bf16.msra.mxu0 0
      %1519 = vmatprep.mubr.bf16.mxu0 0
      %1520 = vmatmul.mubr.bf16.gmra.mrb[0].mxu0 %v1460
      %v1521 = vpop.f32.mrb[0].mxu0
      %v1522 = vadd.f32 %v1441, %v1521
      %v1523 = vpop.f32.mrb[0].mxu0
      %v1524 = vpop.f32.mrb[0].mxu0
      %v1525 = vadd.f32 %v1441, %v1524
      %v1526 = vpop.f32.mrb[0].mxu0
      %1527 = vmatprep.mubr.bf16.mxu0 0
      %1528 = vmatmul.mubr.bf16.gmra.mrb[0].mxu0 %v1463
      %v1529 = vpop.f32.mrb[0].mxu0
      %v1530 = vadd.f32 %v1441, %v1529
      %v1531 = vpop.f32.mrb[0].mxu0
      %v1532 = vpop.f32.mrb[0].mxu0
      %v1533 = vadd.f32 %v1441, %v1532
      %v1534 = vpop.f32.mrb[0].mxu0
      %1535 = vmatprep.mubr.bf16.mxu0 0
      %1536 = vmatmul.mubr.bf16.gmra.mrb[0].mxu0 %v1466
      %v1537 = vpop.f32.mrb[0].mxu0
      %v1538 = vadd.f32 %v1441, %v1537
      %v1539 = vpop.f32.mrb[0].mxu0
      %v1540 = vpop.f32.mrb[0].mxu0
      %v1541 = vadd.f32 %v1441, %v1540
      %v1542 = vpop.f32.mrb[0].mxu0
      %1543 = vmatprep.mubr.bf16.mxu0 0
      %1544 = vmatmul.mubr.bf16.gmra.mrb[0].mxu0 %v1469
      %v1545 = vpop.f32.mrb[0].mxu0
      %v1546 = vadd.f32 %v1441, %v1545
      %v1547 = vpop.f32.mrb[0].mxu0
      %v1548 = vpop.f32.mrb[0].mxu0
      %v1549 = vadd.f32 %v1441, %v1548
      %v1550 = vpop.f32.mrb[0].mxu0
      %1551 = vmatprep.mubr.bf16.mxu0 0
      %1552 = vmatmul.mubr.bf16.gmra.mrb[0].mxu0 %v1472
      %v1553 = vpop.f32.mrb[0].mxu0
      %v1554 = vadd.f32 %v1441, %v1553
      %v1555 = vpop.f32.mrb[0].mxu0
      %v1556 = vpop.f32.mrb[0].mxu0
      %v1557 = vadd.f32 %v1441, %v1556
      %v1558 = vpop.f32.mrb[0].mxu0
      %1559 = vmatprep.mubr.bf16.mxu0 0
      %1560 = vmatmul.mubr.bf16.gmra.mrb[0].mxu0 %v1475
      %v1561 = vpop.f32.mrb[0].mxu0
      %v1562 = vadd.f32 %v1441, %v1561
      %v1563 = vpop.f32.mrb[0].mxu0
      %v1564 = vpop.f32.mrb[0].mxu0
      %v1565 = vadd.f32 %v1441, %v1564
      %v1566 = vpop.f32.mrb[0].mxu0
      %1567 = vmatprep.mubr.bf16.mxu0 0
      %1568 = vmatmul.mubr.bf16.gmra.mrb[0].mxu0 %v1478
      %v1569 = vpop.f32.mrb[0].mxu0
      %v1570 = vadd.f32 %v1441, %v1569
      %v1571 = vpop.f32.mrb[0].mxu0
      %v1572 = vpop.f32.mrb[0].mxu0
      %v1573 = vadd.f32 %v1441, %v1572
      %v1574 = vpop.f32.mrb[0].mxu0
      %1575 = vmatprep.mubr.bf16.mxu0 0
      %1576 = vmatmul.mubr.bf16.gmra.mrb[0].mxu0 %v1481
      %v1577 = vpop.f32.mrb[0].mxu0
      %v1578 = vadd.f32 %v1441, %v1577
      %v1579 = vpop.f32.mrb[0].mxu0
      %v1580 = vpop.f32.mrb[0].mxu0
      %v1581 = vadd.f32 %v1441, %v1580
      %v1582 = vpop.f32.mrb[0].mxu0
      %1583 = vdwg.mxu0
      %v1584 = vmax.f32 %v1522, 0.0
      %v1585 = vmax.f32 %v1525, 0.0
      %v1586 = vmax.f32 %v1530, 0.0
      %v1587 = vmax.f32 %v1533, 0.0
      %v1588 = vmax.f32 %v1538, 0.0
      %v1589 = vmax.f32 %v1541, 0.0
      %v1590 = vmax.f32 %v1546, 0.0
      %v1591 = vmax.f32 %v1549, 0.0
      %v1592 = vmax.f32 %v1554, 0.0
      %v1593 = vmax.f32 %v1557, 0.0
      %v1594 = vmax.f32 %v1562, 0.0
      %v1595 = vmax.f32 %v1565, 0.0
      %v1596 = vmax.f32 %v1570, 0.0
      %v1597 = vmax.f32 %v1573, 0.0
      %v1598 = vmax.f32 %v1578, 0.0
      %v1599 = vmax.f32 %v1581, 0.0
      %v1600 = vld [vmem:[%s4] sm:$0xff]
      %v1601 = vld [vmem:[%s4 + $0x8] sm:$0xff]
      %v1602 = vld [vmem:[%s4 + $0x10] sm:$0xff]
      %v1603 = vld [vmem:[%s4 + $0x18] sm:$0xff]
      %v1604 = vld [vmem:[%s4 + $0x20] sm:$0xff]
      %v1605 = vld [vmem:[%s4 + $0x28] sm:$0xff]
      %v1606 = vld [vmem:[%s4 + $0x30] sm:$0xff]
      %v1607 = vld [vmem:[%s4 + $0x38] sm:$0xff]
      %v1608 = vld [vmem:[%s4 + $0x40] sm:$0xff]
      %v1609 = vld [vmem:[%s4 + $0x48] sm:$0xff]
      %v1610 = vld [vmem:[%s4 + $0x50] sm:$0xff]
      %v1611 = vld [vmem:[%s4 + $0x58] sm:$0xff]
      %v1612 = vld [vmem:[%s4 + $0x60] sm:$0xff]
      %v1613 = vld [vmem:[%s4 + $0x68] sm:$0xff]
      %v1614 = vld [vmem:[%s4 + $0x70] sm:$0xff]
      %v1615 = vld [vmem:[%s4 + $0x78] sm:$0xff]
      %vm1616 = vcmp.lt.s32.totalorder %v1600, 8
      %vm1617 = vcmp.lt.s32.totalorder %v1601, 8
      %vm1618 = vcmp.lt.s32.totalorder %v1602, 8
      %vm1619 = vcmp.lt.s32.totalorder %v1603, 8
      %vm1620 = vcmp.lt.s32.totalorder %v1604, 8
      %vm1621 = vcmp.lt.s32.totalorder %v1605, 8
      %vm1622 = vcmp.lt.s32.totalorder %v1606, 8
      %vm1623 = vcmp.lt.s32.totalorder %v1607, 8
      %vm1624 = vcmp.lt.s32.totalorder %v1608, 8
      %vm1625 = vcmp.lt.s32.totalorder %v1609, 8
      %vm1626 = vcmp.lt.s32.totalorder %v1610, 8
      %vm1627 = vcmp.lt.s32.totalorder %v1611, 8
      %vm1628 = vcmp.lt.s32.totalorder %v1612, 8
      %vm1629 = vcmp.lt.s32.totalorder %v1613, 8
      %vm1630 = vcmp.lt.s32.totalorder %v1614, 8
      %vm1631 = vcmp.lt.s32.totalorder %v1615, 8
      %v1632 = vsel %vm1616, 1, 0
      %v1633 = vsel %vm1617, 1, 0
      %v1634 = vsel %vm1618, 1, 0
      %v1635 = vsel %vm1619, 1, 0
      %v1636 = vsel %vm1620, 1, 0
      %v1637 = vsel %vm1621, 1, 0
      %v1638 = vsel %vm1622, 1, 0
      %v1639 = vsel %vm1623, 1, 0
      %v1640 = vsel %vm1624, 1, 0
      %v1641 = vsel %vm1625, 1, 0
      %v1642 = vsel %vm1626, 1, 0
      %v1643 = vsel %vm1627, 1, 0
      %v1644 = vsel %vm1628, 1, 0
      %v1645 = vsel %vm1629, 1, 0
      %v1646 = vsel %vm1630, 1, 0
      %v1647 = vsel %vm1631, 1, 0
      %1648 = vset.pattern.permute.xlu0 0
      %1649 = vperm.xlu0 %1648, %v1632
      %v1650 = vpop.permute.xlu0 %1649
      %1651 = vset.pattern.permute.xlu0 0
      %1652 = vperm.xlu0 %1651, %v1633
      %v1653 = vpop.permute.xlu0 %1652
      %1654 = vset.pattern.permute.xlu0 0
      %1655 = vperm.xlu0 %1654, %v1634
      %v1656 = vpop.permute.xlu0 %1655
      %1657 = vset.pattern.permute.xlu0 0
      %1658 = vperm.xlu0 %1657, %v1635
      %v1659 = vpop.permute.xlu0 %1658
      %1660 = vset.pattern.permute.xlu0 0
      %1661 = vperm.xlu0 %1660, %v1636
      %v1662 = vpop.permute.xlu0 %1661
      %1663 = vset.pattern.permute.xlu0 0
      %1664 = vperm.xlu0 %1663, %v1637
      %v1665 = vpop.permute.xlu0 %1664
      %1666 = vset.pattern.permute.xlu0 0
      %1667 = vperm.xlu0 %1666, %v1638
      %v1668 = vpop.permute.xlu0 %1667
      %1669 = vset.pattern.permute.xlu0 0
      %1670 = vperm.xlu0 %1669, %v1639
      %v1671 = vpop.permute.xlu0 %1670
      %1672 = vset.pattern.permute.xlu0 0
      %1673 = vperm.xlu0 %1672, %v1640
      %v1674 = vpop.permute.xlu0 %1673
      %1675 = vset.pattern.permute.xlu0 0
      %1676 = vperm.xlu0 %1675, %v1641
      %v1677 = vpop.permute.xlu0 %1676
      %1678 = vset.pattern.permute.xlu0 0
      %1679 = vperm.xlu0 %1678, %v1642
      %v1680 = vpop.permute.xlu0 %1679
      %1681 = vset.pattern.permute.xlu0 0
      %1682 = vperm.xlu0 %1681, %v1643
      %v1683 = vpop.permute.xlu0 %1682
      %1684 = vset.pattern.permute.xlu0 0
      %1685 = vperm.xlu0 %1684, %v1644
      %v1686 = vpop.permute.xlu0 %1685
      %1687 = vset.pattern.permute.xlu0 0
      %1688 = vperm.xlu0 %1687, %v1645
      %v1689 = vpop.permute.xlu0 %1688
      %1690 = vset.pattern.permute.xlu0 0
      %1691 = vperm.xlu0 %1690, %v1646
      %v1692 = vpop.permute.xlu0 %1691
      %1693 = vset.pattern.permute.xlu0 0
      %1694 = vperm.xlu0 %1693, %v1647
      %v1695 = vpop.permute.xlu0 %1694
      %vm1696 = vcmp.eq.s32.totalorder %v1650, 1
      %vm1697 = vcmp.eq.s32.totalorder %v1653, 1
      %vm1698 = vcmp.eq.s32.totalorder %v1656, 1
      %vm1699 = vcmp.eq.s32.totalorder %v1659, 1
      %vm1700 = vcmp.eq.s32.totalorder %v1662, 1
      %vm1701 = vcmp.eq.s32.totalorder %v1665, 1
      %vm1702 = vcmp.eq.s32.totalorder %v1668, 1
      %vm1703 = vcmp.eq.s32.totalorder %v1671, 1
      %vm1704 = vcmp.eq.s32.totalorder %v1674, 1
      %vm1705 = vcmp.eq.s32.totalorder %v1677, 1
      %vm1706 = vcmp.eq.s32.totalorder %v1680, 1
      %vm1707 = vcmp.eq.s32.totalorder %v1683, 1
      %vm1708 = vcmp.eq.s32.totalorder %v1686, 1
      %vm1709 = vcmp.eq.s32.totalorder %v1689, 1
      %vm1710 = vcmp.eq.s32.totalorder %v1692, 1
      %vm1711 = vcmp.eq.s32.totalorder %v1695, 1
      %v1712 = vsel %vm1696, %v1584, 0.0
      %v1713 = vsel %vm1697, %v1585, 0.0
      %v1714 = vsel %vm1698, %v1586, 0.0
      %v1715 = vsel %vm1699, %v1587, 0.0
      %v1716 = vsel %vm1700, %v1588, 0.0
      %v1717 = vsel %vm1701, %v1589, 0.0
      %v1718 = vsel %vm1702, %v1590, 0.0
      %v1719 = vsel %vm1703, %v1591, 0.0
      %v1720 = vsel %vm1704, %v1592, 0.0
      %v1721 = vsel %vm1705, %v1593, 0.0
      %v1722 = vsel %vm1706, %v1594, 0.0
      %v1723 = vsel %vm1707, %v1595, 0.0
      %v1724 = vsel %vm1708, %v1596, 0.0
      %v1725 = vsel %vm1709, %v1597, 0.0
      %v1726 = vsel %vm1710, %v1598, 0.0
      %v1727 = vsel %vm1711, %v1599, 0.0
      %1728 = vst [vmem:[#allocation3] sm:$0xff] 0
      %1729 = vst [vmem:[#allocation3 + $0x8] sm:$0xf] 0
      %1730 = vst [vmem:[#allocation3 + $0x48] sm:$0xf0] 0
      %1731 = vst [vmem:[#allocation3 + $0x50] sm:$0xff] 0
      %v1732 = vpack.c.bf16 %v1713, %v1712
      %v1733 = vpack.c.bf16 %v1715, %v1714
      %v1734 = vpack.c.bf16 %v1717, %v1716
      %v1735 = vpack.c.bf16 %v1719, %v1718
      %v1736 = vpack.c.bf16 %v1721, %v1720
      %v1737 = vpack.c.bf16 %v1723, %v1722
      %v1738 = vpack.c.bf16 %v1725, %v1724
      %v1739 = vpack.c.bf16 %v1727, %v1726
      %vm1748 = vcmask 1043456
      %v1749 = vrot.slane %v1732, 4
      %v1750 = vrot.slane %v1733, 4
      %v1751 = vsel %vm1748, %v1749, %v1750
      %v1752 = vrot.slane %v1734, 4
      %v1753 = vsel %vm1748, %v1750, %v1752
      %v1754 = vrot.slane %v1735, 4
      %v1755 = vsel %vm1748, %v1752, %v1754
      %v1756 = vrot.slane %v1736, 4
      %v1757 = vsel %vm1748, %v1754, %v1756
      %v1758 = vrot.slane %v1737, 4
      %v1759 = vsel %vm1748, %v1756, %v1758
      %v1760 = vrot.slane %v1738, 4
      %v1761 = vsel %vm1748, %v1758, %v1760
      %v1762 = vrot.slane %v1739, 4
      %v1763 = vsel %vm1748, %v1760, %v1762
      %1773 = vst [vmem:[#allocation3 + $0x8] sm:$0xf0] %v1749
      %1774 = vst [vmem:[#allocation3 + $0x10] sm:$0xff] %v1751
      %1775 = vst [vmem:[#allocation3 + $0x18] sm:$0xff] %v1753
      %1776 = vst [vmem:[#allocation3 + $0x20] sm:$0xff] %v1755
      %1777 = vst [vmem:[#allocation3 + $0x28] sm:$0xff] %v1757
      %1778 = vst [vmem:[#allocation3 + $0x30] sm:$0xff] %v1759
      %1779 = vst [vmem:[#allocation3 + $0x38] sm:$0xff] %v1761
      %1780 = vst [vmem:[#allocation3 + $0x40] sm:$0xff] %v1763
      %1781 = vst [vmem:[#allocation3 + $0x48] sm:$0xf] %v1762
      %v1782 = vld [vmem:[#allocation3] sm:$0xf8]
      %v1783 = vld [vmem:[#allocation3 + $0x8] sm:$0xff]
      %v1784 = vld [vmem:[#allocation3 + $0x10] sm:$0xff]
      %v1785 = vld [vmem:[#allocation3 + $0x18] sm:$0xff]
      %v1786 = vld [vmem:[#allocation3 + $0x20] sm:$0xff]
      %v1787 = vld [vmem:[#allocation3 + $0x28] sm:$0xff]
      %v1788 = vld [vmem:[#allocation3 + $0x30] sm:$0xff]
      %v1789 = vld [vmem:[#allocation3 + $0x38] sm:$0xff]
      %v1790 = vld [vmem:[#allocation3 + $0x40] sm:$0xf]
      %v1791 = vld [vmem:[%s7] sm:$0xf]
      %v1792 = vld [vmem:[%s7 + $0x4] sm:$0xf]
      %v1793 = vld [vmem:[%s7 + $0x8] sm:$0xf]
      %v1794 = vld [vmem:[%s7 + $0xc] sm:$0xf]
      %v1795 = vld [vmem:[%s7 + $0x10] sm:$0xf]
      %v1796 = vld [vmem:[%s7 + $0x14] sm:$0xf]
      %v1797 = vld [vmem:[%s7 + $0x18] sm:$0xf]
      %v1798 = vld [vmem:[%s7 + $0x1c] sm:$0xf]
      %v1799 = vld [vmem:[%s7 + $0x20] sm:$0xf]
      %v1800 = vld [vmem:[%s7 + $0x24] sm:$0xf]
      %v1801 = vld [vmem:[%s7 + $0x28] sm:$0xf]
      %v1802 = vld [vmem:[%s7 + $0x2c] sm:$0xf]
      %v1803 = vld [vmem:[%s7 + $0x30] sm:$0xf]
      %v1804 = vld [vmem:[%s7 + $0x34] sm:$0xf]
      %v1805 = vld [vmem:[%s7 + $0x38] sm:$0xf]
      %v1806 = vld [vmem:[%s7 + $0x3c] sm:$0xf]
      %vm1807 = vsmask.f32 4352
      %v1809 = vshrl.u32 %v1782, 16
      %v1811 = vrot.slane %v1809, 3
      %v1812 = vshll.u32 %v1782, 16
      %v1814 = vrot.slane %v1812, 4
      %v1815 = vor.u32 %v1811, %v1814
      %v1817 = vshrl.u32 %v1783, 16
      %v1819 = vrot.slane %v1817, 3
      %v1820 = vshll.u32 %v1783, 16
      %v1822 = vrot.slane %v1820, 4
      %v1823 = vor.u32 %v1819, %v1822
      %v1824 = vsel %vm1807, %v1815, %v1823
      %v1826 = vshrl.u32 %v1784, 16
      %v1828 = vrot.slane %v1826, 3
      %v1829 = vshll.u32 %v1784, 16
      %v1831 = vrot.slane %v1829, 4
      %v1832 = vor.u32 %v1828, %v1831
      %v1833 = vsel %vm1807, %v1823, %v1832
      %v1835 = vshrl.u32 %v1785, 16
      %v1837 = vrot.slane %v1835, 3
      %v1838 = vshll.u32 %v1785, 16
      %v1840 = vrot.slane %v1838, 4
      %v1841 = vor.u32 %v1837, %v1840
      %v1842 = vsel %vm1807, %v1832, %v1841
      %v1844 = vshrl.u32 %v1786, 16
      %v1846 = vrot.slane %v1844, 3
      %v1847 = vshll.u32 %v1786, 16
      %v1849 = vrot.slane %v1847, 4
      %v1850 = vor.u32 %v1846, %v1849
      %v1851 = vsel %vm1807, %v1841, %v1850
      %v1853 = vshrl.u32 %v1787, 16
      %v1855 = vrot.slane %v1853, 3
      %v1856 = vshll.u32 %v1787, 16
      %v1858 = vrot.slane %v1856, 4
      %v1859 = vor.u32 %v1855, %v1858
      %v1860 = vsel %vm1807, %v1850, %v1859
      %v1862 = vshrl.u32 %v1788, 16
      %v1864 = vrot.slane %v1862, 3
      %v1865 = vshll.u32 %v1788, 16
      %v1867 = vrot.slane %v1865, 4
      %v1868 = vor.u32 %v1864, %v1867
      %v1869 = vsel %vm1807, %v1859, %v1868
      %v1871 = vshrl.u32 %v1789, 16
      %v1873 = vrot.slane %v1871, 3
      %v1874 = vshll.u32 %v1789, 16
      %v1876 = vrot.slane %v1874, 4
      %v1877 = vor.u32 %v1873, %v1876
      %v1878 = vsel %vm1807, %v1868, %v1877
      %v1880 = vshrl.u32 %v1790, 16
      %v1882 = vrot.slane %v1880, 3
      %v1883 = vshll.u32 %v1790, 16
      %v1885 = vrot.slane %v1883, 4
      %v1886 = vor.u32 %v1882, %v1885
      %v1887 = vsel %vm1807, %v1877, %v1886
      %v1912 = vunpack.c.l.b16 %v1791
      %v1913 = vunpack.c.l.b16 %v1792
      %v1914 = vunpack.c.l.b16 %v1793
      %v1915 = vunpack.c.l.b16 %v1794
      %v1916 = vunpack.c.l.b16 %v1795
      %v1917 = vunpack.c.l.b16 %v1796
      %v1918 = vunpack.c.l.b16 %v1797
      %v1919 = vunpack.c.l.b16 %v1798
      %v1920 = vunpack.c.l.b16 %v1799
      %v1921 = vunpack.c.l.b16 %v1800
      %v1922 = vunpack.c.l.b16 %v1801
      %v1923 = vunpack.c.l.b16 %v1802
      %v1924 = vunpack.c.l.b16 %v1803
      %v1925 = vunpack.c.l.b16 %v1804
      %v1926 = vunpack.c.l.b16 %v1805
      %v1927 = vunpack.c.l.b16 %v1806
      %v1928 = vpack.c.b16 %v1913, %v1912
      %v1929 = vpack.c.b16 %v1915, %v1914
      %v1930 = vpack.c.b16 %v1917, %v1916
      %v1931 = vpack.c.b16 %v1919, %v1918
      %v1932 = vpack.c.b16 %v1921, %v1920
      %v1933 = vpack.c.b16 %v1923, %v1922
      %v1934 = vpack.c.b16 %v1925, %v1924
      %v1935 = vpack.c.b16 %v1927, %v1926
      %1944 = vmatprep.subr.bf16.mxu0 0
      %1945 = vmatpush1.bf16.msra.mxu0 %v1928
      %1946 = vmatprep.subr.bf16.mxu0 0
      %1947 = vmatpush1.bf16.msra.mxu0 %v1929
      %1948 = vmatprep.subr.bf16.mxu0 0
      %1949 = vmatpush1.bf16.msra.mxu0 %v1930
      %1950 = vmatprep.subr.bf16.mxu0 0
      %1951 = vmatpush1.bf16.msra.mxu0 %v1931
      %1952 = vmatprep.subr.bf16.mxu0 0
      %1953 = vmatpush1.bf16.msra.mxu0 %v1932
      %1954 = vmatprep.subr.bf16.mxu0 0
      %1955 = vmatpush1.bf16.msra.mxu0 %v1933
      %1956 = vmatprep.subr.bf16.mxu0 0
      %1957 = vmatpush1.bf16.msra.mxu0 %v1934
      %1958 = vmatprep.subr.bf16.mxu0 0
      %1959 = vmatpush1.bf16.msra.mxu0 %v1935
      %1960 = vmatprep.subr.bf16.mxu0 0
      %1961 = vmatpush1.bf16.msra.mxu0 0
      %1962 = vmatprep.subr.bf16.mxu0 0
      %1963 = vmatpush1.bf16.msra.mxu0 0
      %1964 = vmatprep.subr.bf16.mxu0 0
      %1965 = vmatpush1.bf16.msra.mxu0 0
      %1966 = vmatprep.subr.bf16.mxu0 0
      %1967 = vmatpush1.bf16.msra.mxu0 0
      %1968 = vmatprep.subr.bf16.mxu0 0
      %1969 = vmatpush1.bf16.msra.mxu0 0
      %1970 = vmatprep.subr.bf16.mxu0 0
      %1971 = vmatpush1.bf16.msra.mxu0 0
      %1972 = vmatprep.subr.bf16.mxu0 0
      %1973 = vmatpush1.bf16.msra.mxu0 0
      %1974 = vmatprep.subr.bf16.mxu0 0
      %1975 = vmatpush1.bf16.msra.mxu0 0
      %1976 = vmatprep.mubr.bf16.mxu0 0
      %1977 = vmatmul.mubr.bf16.gmra.mrb[0].mxu0 %v1824
      %v1978 = vpop.f32.mrb[0].mxu0
      %v1979 = vadd.f32 0.0, %v1978
      %v1980 = vpop.f32.mrb[0].mxu0
      %v1981 = vpop.f32.mrb[0].mxu0
      %v1982 = vadd.f32 0.0, %v1981
      %v1983 = vpop.f32.mrb[0].mxu0
      %1984 = vmatprep.mubr.bf16.mxu0 0
      %1985 = vmatmul.mubr.bf16.gmra.mrb[0].mxu0 %v1833
      %v1986 = vpop.f32.mrb[0].mxu0
      %v1987 = vadd.f32 0.0, %v1986
      %v1988 = vpop.f32.mrb[0].mxu0
      %v1989 = vpop.f32.mrb[0].mxu0
      %v1990 = vadd.f32 0.0, %v1989
      %v1991 = vpop.f32.mrb[0].mxu0
      %1992 = vmatprep.mubr.bf16.mxu0 0
      %1993 = vmatmul.mubr.bf16.gmra.mrb[0].mxu0 %v1842
      %v1994 = vpop.f32.mrb[0].mxu0
      %v1995 = vadd.f32 0.0, %v1994
      %v1996 = vpop.f32.mrb[0].mxu0
      %v1997 = vpop.f32.mrb[0].mxu0
      %v1998 = vadd.f32 0.0, %v1997
      %v1999 = vpop.f32.mrb[0].mxu0
      %2000 = vmatprep.mubr.bf16.mxu0 0
      %2001 = vmatmul.mubr.bf16.gmra.mrb[0].mxu0 %v1851
      %v2002 = vpop.f32.mrb[0].mxu0
      %v2003 = vadd.f32 0.0, %v2002
      %v2004 = vpop.f32.mrb[0].mxu0
      %v2005 = vpop.f32.mrb[0].mxu0
      %v2006 = vadd.f32 0.0, %v2005
      %v2007 = vpop.f32.mrb[0].mxu0
      %2008 = vmatprep.mubr.bf16.mxu0 0
      %2009 = vmatmul.mubr.bf16.gmra.mrb[0].mxu0 %v1860
      %v2010 = vpop.f32.mrb[0].mxu0
      %v2011 = vadd.f32 0.0, %v2010
      %v2012 = vpop.f32.mrb[0].mxu0
      %v2013 = vpop.f32.mrb[0].mxu0
      %v2014 = vadd.f32 0.0, %v2013
      %v2015 = vpop.f32.mrb[0].mxu0
      %2016 = vmatprep.mubr.bf16.mxu0 0
      %2017 = vmatmul.mubr.bf16.gmra.mrb[0].mxu0 %v1869
      %v2018 = vpop.f32.mrb[0].mxu0
      %v2019 = vadd.f32 0.0, %v2018
      %v2020 = vpop.f32.mrb[0].mxu0
      %v2021 = vpop.f32.mrb[0].mxu0
      %v2022 = vadd.f32 0.0, %v2021
      %v2023 = vpop.f32.mrb[0].mxu0
      %2024 = vmatprep.mubr.bf16.mxu0 0
      %2025 = vmatmul.mubr.bf16.gmra.mrb[0].mxu0 %v1878
      %v2026 = vpop.f32.mrb[0].mxu0
      %v2027 = vadd.f32 0.0, %v2026
      %v2028 = vpop.f32.mrb[0].mxu0
      %v2029 = vpop.f32.mrb[0].mxu0
      %v2030 = vadd.f32 0.0, %v2029
      %v2031 = vpop.f32.mrb[0].mxu0
      %2032 = vmatprep.mubr.bf16.mxu0 0
      %2033 = vmatmul.mubr.bf16.gmra.mrb[0].mxu0 %v1887
      %v2034 = vpop.f32.mrb[0].mxu0
      %v2035 = vadd.f32 0.0, %v2034
      %v2036 = vpop.f32.mrb[0].mxu0
      %v2037 = vpop.f32.mrb[0].mxu0
      %v2038 = vadd.f32 0.0, %v2037
      %v2039 = vpop.f32.mrb[0].mxu0
      %2040 = vdwg.mxu0
      %2041 = vst [vmem:[#allocation4] sm:$0xff] %v1979
      %2042 = vst [vmem:[#allocation4 + $0x8] sm:$0xff] %v1982
      %2043 = vst [vmem:[#allocation4 + $0x10] sm:$0xff] %v1987
      %2044 = vst [vmem:[#allocation4 + $0x18] sm:$0xff] %v1990
      %2045 = vst [vmem:[#allocation4 + $0x20] sm:$0xff] %v1995
      %2046 = vst [vmem:[#allocation4 + $0x28] sm:$0xff] %v1998
      %2047 = vst [vmem:[#allocation4 + $0x30] sm:$0xff] %v2003
      %2048 = vst [vmem:[#allocation4 + $0x38] sm:$0xff] %v2006
      %2049 = vst [vmem:[#allocation4 + $0x40] sm:$0xff] %v2011
      %2050 = vst [vmem:[#allocation4 + $0x48] sm:$0xff] %v2014
      %2051 = vst [vmem:[#allocation4 + $0x50] sm:$0xff] %v2019
      %2052 = vst [vmem:[#allocation4 + $0x58] sm:$0xff] %v2022
      %2053 = vst [vmem:[#allocation4 + $0x60] sm:$0xff] %v2027
      %2054 = vst [vmem:[#allocation4 + $0x68] sm:$0xff] %v2030
      %2055 = vst [vmem:[#allocation4 + $0x70] sm:$0xff] %v2035
      %2056 = vst [vmem:[#allocation4 + $0x78] sm:$0xff] %v2038
      %v2057 = vld [vmem:[#allocation3] sm:$0xf0]
      %v2058 = vld [vmem:[#allocation3 + $0x8] sm:$0xff]
      %v2059 = vld [vmem:[#allocation3 + $0x10] sm:$0xff]
      %v2060 = vld [vmem:[#allocation3 + $0x18] sm:$0xff]
      %v2061 = vld [vmem:[#allocation3 + $0x20] sm:$0xff]
      %v2062 = vld [vmem:[#allocation3 + $0x28] sm:$0xff]
      %v2063 = vld [vmem:[#allocation3 + $0x30] sm:$0xff]
      %v2064 = vld [vmem:[#allocation3 + $0x38] sm:$0xff]
      %v2065 = vld [vmem:[#allocation3 + $0x40] sm:$0xf]
      %s2066 = scalar_lea.vmem %s7, 64
      %v2067 = vld [vmem:[%s2066] sm:$0xf]
      %v2068 = vld [vmem:[%s2066 + $0x4] sm:$0xf]
      %v2069 = vld [vmem:[%s2066 + $0x8] sm:$0xf]
      %v2070 = vld [vmem:[%s2066 + $0xc] sm:$0xf]
      %v2071 = vld [vmem:[%s2066 + $0x10] sm:$0xf]
      %v2072 = vld [vmem:[%s2066 + $0x14] sm:$0xf]
      %v2073 = vld [vmem:[%s2066 + $0x18] sm:$0xf]
      %v2074 = vld [vmem:[%s2066 + $0x1c] sm:$0xf]
      %v2075 = vld [vmem:[%s2066 + $0x20] sm:$0xf]
      %v2076 = vld [vmem:[%s2066 + $0x24] sm:$0xf]
      %v2077 = vld [vmem:[%s2066 + $0x28] sm:$0xf]
      %v2078 = vld [vmem:[%s2066 + $0x2c] sm:$0xf]
      %v2079 = vld [vmem:[%s2066 + $0x30] sm:$0xf]
      %v2080 = vld [vmem:[%s2066 + $0x34] sm:$0xf]
      %v2081 = vld [vmem:[%s2066 + $0x38] sm:$0xf]
      %v2082 = vld [vmem:[%s2066 + $0x3c] sm:$0xf]
      %v2092 = vrot.slane %v2057, 4
      %v2093 = vrot.slane %v2058, 4
      %v2094 = vsel %vm1748, %v2092, %v2093
      %v2095 = vrot.slane %v2059, 4
      %v2096 = vsel %vm1748, %v2093, %v2095
      %v2097 = vrot.slane %v2060, 4
      %v2098 = vsel %vm1748, %v2095, %v2097
      %v2099 = vrot.slane %v2061, 4
      %v2100 = vsel %vm1748, %v2097, %v2099
      %v2101 = vrot.slane %v2062, 4
      %v2102 = vsel %vm1748, %v2099, %v2101
      %v2103 = vrot.slane %v2063, 4
      %v2104 = vsel %vm1748, %v2101, %v2103
      %v2105 = vrot.slane %v2064, 4
      %v2106 = vsel %vm1748, %v2103, %v2105
      %v2107 = vrot.slane %v2065, 4
      %v2108 = vsel %vm1748, %v2105, %v2107
      %v2133 = vunpack.c.l.b16 %v2067
      %v2134 = vunpack.c.l.b16 %v2068
      %v2135 = vunpack.c.l.b16 %v2069
      %v2136 = vunpack.c.l.b16 %v2070
      %v2137 = vunpack.c.l.b16 %v2071
      %v2138 = vunpack.c.l.b16 %v2072
      %v2139 = vunpack.c.l.b16 %v2073
      %v2140 = vunpack.c.l.b16 %v2074
      %v2141 = vunpack.c.l.b16 %v2075
      %v2142 = vunpack.c.l.b16 %v2076
      %v2143 = vunpack.c.l.b16 %v2077
      %v2144 = vunpack.c.l.b16 %v2078
      %v2145 = vunpack.c.l.b16 %v2079
      %v2146 = vunpack.c.l.b16 %v2080
      %v2147 = vunpack.c.l.b16 %v2081
      %v2148 = vunpack.c.l.b16 %v2082
      %v2149 = vpack.c.b16 %v2134, %v2133
      %v2150 = vpack.c.b16 %v2136, %v2135
      %v2151 = vpack.c.b16 %v2138, %v2137
      %v2152 = vpack.c.b16 %v2140, %v2139
      %v2153 = vpack.c.b16 %v2142, %v2141
      %v2154 = vpack.c.b16 %v2144, %v2143
      %v2155 = vpack.c.b16 %v2146, %v2145
      %v2156 = vpack.c.b16 %v2148, %v2147
      %2165 = vmatprep.subr.bf16.mxu0 0
      %2166 = vmatpush1.bf16.msra.mxu0 %v2149
      %2167 = vmatprep.subr.bf16.mxu0 0
      %2168 = vmatpush1.bf16.msra.mxu0 %v2150
      %2169 = vmatprep.subr.bf16.mxu0 0
      %2170 = vmatpush1.bf16.msra.mxu0 %v2151
      %2171 = vmatprep.subr.bf16.mxu0 0
      %2172 = vmatpush1.bf16.msra.mxu0 %v2152
      %2173 = vmatprep.subr.bf16.mxu0 0
      %2174 = vmatpush1.bf16.msra.mxu0 %v2153
      %2175 = vmatprep.subr.bf16.mxu0 0
      %2176 = vmatpush1.bf16.msra.mxu0 %v2154
      %2177 = vmatprep.subr.bf16.mxu0 0
      %2178 = vmatpush1.bf16.msra.mxu0 %v2155
      %2179 = vmatprep.subr.bf16.mxu0 0
      %2180 = vmatpush1.bf16.msra.mxu0 %v2156
      %2181 = vmatprep.subr.bf16.mxu0 0
      %2182 = vmatpush1.bf16.msra.mxu0 0
      %2183 = vmatprep.subr.bf16.mxu0 0
      %2184 = vmatpush1.bf16.msra.mxu0 0
      %2185 = vmatprep.subr.bf16.mxu0 0
      %2186 = vmatpush1.bf16.msra.mxu0 0
      %2187 = vmatprep.subr.bf16.mxu0 0
      %2188 = vmatpush1.bf16.msra.mxu0 0
      %2189 = vmatprep.subr.bf16.mxu0 0
      %2190 = vmatpush1.bf16.msra.mxu0 0
      %2191 = vmatprep.subr.bf16.mxu0 0
      %2192 = vmatpush1.bf16.msra.mxu0 0
      %2193 = vmatprep.subr.bf16.mxu0 0
      %2194 = vmatpush1.bf16.msra.mxu0 0
      %2195 = vmatprep.subr.bf16.mxu0 0
      %2196 = vmatpush1.bf16.msra.mxu0 0
      %2197 = vmatprep.mubr.bf16.mxu0 0
      %2198 = vmatmul.mubr.bf16.gmra.mrb[0].mxu0 %v2094
      %v2199 = vpop.f32.mrb[0].mxu0
      %v2200 = vadd.f32 0.0, %v2199
      %v2201 = vpop.f32.mrb[0].mxu0
      %v2202 = vpop.f32.mrb[0].mxu0
      %v2203 = vadd.f32 0.0, %v2202
      %v2204 = vpop.f32.mrb[0].mxu0
      %2205 = vmatprep.mubr.bf16.mxu0 0
      %2206 = vmatmul.mubr.bf16.gmra.mrb[0].mxu0 %v2096
      %v2207 = vpop.f32.mrb[0].mxu0
      %v2208 = vadd.f32 0.0, %v2207
      %v2209 = vpop.f32.mrb[0].mxu0
      %v2210 = vpop.f32.mrb[0].mxu0
      %v2211 = vadd.f32 0.0, %v2210
      %v2212 = vpop.f32.mrb[0].mxu0
      %2213 = vmatprep.mubr.bf16.mxu0 0
      %2214 = vmatmul.mubr.bf16.gmra.mrb[0].mxu0 %v2098
      %v2215 = vpop.f32.mrb[0].mxu0
      %v2216 = vadd.f32 0.0, %v2215
      %v2217 = vpop.f32.mrb[0].mxu0
      %v2218 = vpop.f32.mrb[0].mxu0
      %v2219 = vadd.f32 0.0, %v2218
      %v2220 = vpop.f32.mrb[0].mxu0
      %2221 = vmatprep.mubr.bf16.mxu0 0
      %2222 = vmatmul.mubr.bf16.gmra.mrb[0].mxu0 %v2100
      %v2223 = vpop.f32.mrb[0].mxu0
      %v2224 = vadd.f32 0.0, %v2223
      %v2225 = vpop.f32.mrb[0].mxu0
      %v2226 = vpop.f32.mrb[0].mxu0
      %v2227 = vadd.f32 0.0, %v2226
      %v2228 = vpop.f32.mrb[0].mxu0
      %2229 = vmatprep.mubr.bf16.mxu0 0
      %2230 = vmatmul.mubr.bf16.gmra.mrb[0].mxu0 %v2102
      %v2231 = vpop.f32.mrb[0].mxu0
      %v2232 = vadd.f32 0.0, %v2231
      %v2233 = vpop.f32.mrb[0].mxu0
      %v2234 = vpop.f32.mrb[0].mxu0
      %v2235 = vadd.f32 0.0, %v2234
      %v2236 = vpop.f32.mrb[0].mxu0
      %2237 = vmatprep.mubr.bf16.mxu0 0
      %2238 = vmatmul.mubr.bf16.gmra.mrb[0].mxu0 %v2104
      %v2239 = vpop.f32.mrb[0].mxu0
      %v2240 = vadd.f32 0.0, %v2239
      %v2241 = vpop.f32.mrb[0].mxu0
      %v2242 = vpop.f32.mrb[0].mxu0
      %v2243 = vadd.f32 0.0, %v2242
      %v2244 = vpop.f32.mrb[0].mxu0
      %2245 = vmatprep.mubr.bf16.mxu0 0
      %2246 = vmatmul.mubr.bf16.gmra.mrb[0].mxu0 %v2106
      %v2247 = vpop.f32.mrb[0].mxu0
      %v2248 = vadd.f32 0.0, %v2247
      %v2249 = vpop.f32.mrb[0].mxu0
      %v2250 = vpop.f32.mrb[0].mxu0
      %v2251 = vadd.f32 0.0, %v2250
      %v2252 = vpop.f32.mrb[0].mxu0
      %2253 = vmatprep.mubr.bf16.mxu0 0
      %2254 = vmatmul.mubr.bf16.gmra.mrb[0].mxu0 %v2108
      %v2255 = vpop.f32.mrb[0].mxu0
      %v2256 = vadd.f32 0.0, %v2255
      %v2257 = vpop.f32.mrb[0].mxu0
      %v2258 = vpop.f32.mrb[0].mxu0
      %v2259 = vadd.f32 0.0, %v2258
      %v2260 = vpop.f32.mrb[0].mxu0
      %2261 = vdwg.mxu0
      %v2262 = vld [vmem:[#allocation4] sm:$0xff]
      %v2263 = vld [vmem:[#allocation4 + $0x8] sm:$0xff]
      %v2264 = vld [vmem:[#allocation4 + $0x10] sm:$0xff]
      %v2265 = vld [vmem:[#allocation4 + $0x18] sm:$0xff]
      %v2266 = vld [vmem:[#allocation4 + $0x20] sm:$0xff]
      %v2267 = vld [vmem:[#allocation4 + $0x28] sm:$0xff]
      %v2268 = vld [vmem:[#allocation4 + $0x30] sm:$0xff]
      %v2269 = vld [vmem:[#allocation4 + $0x38] sm:$0xff]
      %v2270 = vld [vmem:[#allocation4 + $0x40] sm:$0xff]
      %v2271 = vld [vmem:[#allocation4 + $0x48] sm:$0xff]
      %v2272 = vld [vmem:[#allocation4 + $0x50] sm:$0xff]
      %v2273 = vld [vmem:[#allocation4 + $0x58] sm:$0xff]
      %v2274 = vld [vmem:[#allocation4 + $0x60] sm:$0xff]
      %v2275 = vld [vmem:[#allocation4 + $0x68] sm:$0xff]
      %v2276 = vld [vmem:[#allocation4 + $0x70] sm:$0xff]
      %v2277 = vld [vmem:[#allocation4 + $0x78] sm:$0xff]
      %v2278 = vadd.f32 %v2262, %v2200
      %v2279 = vadd.f32 %v2263, %v2203
      %v2280 = vadd.f32 %v2264, %v2208
      %v2281 = vadd.f32 %v2265, %v2211
      %v2282 = vadd.f32 %v2266, %v2216
      %v2283 = vadd.f32 %v2267, %v2219
      %v2284 = vadd.f32 %v2268, %v2224
      %v2285 = vadd.f32 %v2269, %v2227
      %v2286 = vadd.f32 %v2270, %v2232
      %v2287 = vadd.f32 %v2271, %v2235
      %v2288 = vadd.f32 %v2272, %v2240
      %v2289 = vadd.f32 %v2273, %v2243
      %v2290 = vadd.f32 %v2274, %v2248
      %v2291 = vadd.f32 %v2275, %v2251
      %v2292 = vadd.f32 %v2276, %v2256
      %v2293 = vadd.f32 %v2277, %v2259
      %2294 = vst [vmem:[#allocation4] sm:$0xff] %v2278
      %2295 = vst [vmem:[#allocation4 + $0x8] sm:$0xff] %v2279
      %2296 = vst [vmem:[#allocation4 + $0x10] sm:$0xff] %v2280
      %2297 = vst [vmem:[#allocation4 + $0x18] sm:$0xff] %v2281
      %2298 = vst [vmem:[#allocation4 + $0x20] sm:$0xff] %v2282
      %2299 = vst [vmem:[#allocation4 + $0x28] sm:$0xff] %v2283
      %2300 = vst [vmem:[#allocation4 + $0x30] sm:$0xff] %v2284
      %2301 = vst [vmem:[#allocation4 + $0x38] sm:$0xff] %v2285
      %2302 = vst [vmem:[#allocation4 + $0x40] sm:$0xff] %v2286
      %2303 = vst [vmem:[#allocation4 + $0x48] sm:$0xff] %v2287
      %2304 = vst [vmem:[#allocation4 + $0x50] sm:$0xff] %v2288
      %2305 = vst [vmem:[#allocation4 + $0x58] sm:$0xff] %v2289
      %2306 = vst [vmem:[#allocation4 + $0x60] sm:$0xff] %v2290
      %2307 = vst [vmem:[#allocation4 + $0x68] sm:$0xff] %v2291
      %2308 = vst [vmem:[#allocation4 + $0x70] sm:$0xff] %v2292
      %2309 = vst [vmem:[#allocation4 + $0x78] sm:$0xff] %v2293
      %v2310 = vld [vmem:[#allocation3] sm:$0xf0]
      %v2311 = vld [vmem:[#allocation3 + $0x8] sm:$0xff]
      %v2312 = vld [vmem:[#allocation3 + $0x10] sm:$0xff]
      %v2313 = vld [vmem:[#allocation3 + $0x18] sm:$0xff]
      %v2314 = vld [vmem:[#allocation3 + $0x20] sm:$0xff]
      %v2315 = vld [vmem:[#allocation3 + $0x28] sm:$0xff]
      %v2316 = vld [vmem:[#allocation3 + $0x30] sm:$0xff]
      %v2317 = vld [vmem:[#allocation3 + $0x38] sm:$0xff]
      %v2318 = vld [vmem:[#allocation3 + $0x40] sm:$0x1f]
      %s2319 = scalar_lea.vmem %s7, 128
      %v2320 = vld [vmem:[%s2319] sm:$0xf]
      %v2321 = vld [vmem:[%s2319 + $0x4] sm:$0xf]
      %v2322 = vld [vmem:[%s2319 + $0x8] sm:$0xf]
      %v2323 = vld [vmem:[%s2319 + $0xc] sm:$0xf]
      %v2324 = vld [vmem:[%s2319 + $0x10] sm:$0xf]
      %v2325 = vld [vmem:[%s2319 + $0x14] sm:$0xf]
      %v2326 = vld [vmem:[%s2319 + $0x18] sm:$0xf]
      %v2327 = vld [vmem:[%s2319 + $0x1c] sm:$0xf]
      %v2328 = vld [vmem:[%s2319 + $0x20] sm:$0xf]
      %v2329 = vld [vmem:[%s2319 + $0x24] sm:$0xf]
      %v2330 = vld [vmem:[%s2319 + $0x28] sm:$0xf]
      %v2331 = vld [vmem:[%s2319 + $0x2c] sm:$0xf]
      %v2332 = vld [vmem:[%s2319 + $0x30] sm:$0xf]
      %v2333 = vld [vmem:[%s2319 + $0x34] sm:$0xf]
      %v2334 = vld [vmem:[%s2319 + $0x38] sm:$0xf]
      %v2335 = vld [vmem:[%s2319 + $0x3c] sm:$0xf]
      %vm2336 = vsmask.f32 3328
      %v2338 = vshrl.u32 %v2310, 16
      %v2340 = vrot.slane %v2338, 4
      %v2341 = vshll.u32 %v2310, 16
      %v2343 = vrot.slane %v2341, 5
      %v2344 = vor.u32 %v2340, %v2343
      %v2346 = vshrl.u32 %v2311, 16
      %v2348 = vrot.slane %v2346, 4
      %v2349 = vshll.u32 %v2311, 16
      %v2351 = vrot.slane %v2349, 5
      %v2352 = vor.u32 %v2348, %v2351
      %v2353 = vsel %vm2336, %v2344, %v2352
      %v2355 = vshrl.u32 %v2312, 16
      %v2357 = vrot.slane %v2355, 4
      %v2358 = vshll.u32 %v2312, 16
      %v2360 = vrot.slane %v2358, 5
      %v2361 = vor.u32 %v2357, %v2360
      %v2362 = vsel %vm2336, %v2352, %v2361
      %v2364 = vshrl.u32 %v2313, 16
      %v2366 = vrot.slane %v2364, 4
      %v2367 = vshll.u32 %v2313, 16
      %v2369 = vrot.slane %v2367, 5
      %v2370 = vor.u32 %v2366, %v2369
      %v2371 = vsel %vm2336, %v2361, %v2370
      %v2373 = vshrl.u32 %v2314, 16
      %v2375 = vrot.slane %v2373, 4
      %v2376 = vshll.u32 %v2314, 16
      %v2378 = vrot.slane %v2376, 5
      %v2379 = vor.u32 %v2375, %v2378
      %v2380 = vsel %vm2336, %v2370, %v2379
      %v2382 = vshrl.u32 %v2315, 16
      %v2384 = vrot.slane %v2382, 4
      %v2385 = vshll.u32 %v2315, 16
      %v2387 = vrot.slane %v2385, 5
      %v2388 = vor.u32 %v2384, %v2387
      %v2389 = vsel %vm2336, %v2379, %v2388
      %v2391 = vshrl.u32 %v2316, 16
      %v2393 = vrot.slane %v2391, 4
      %v2394 = vshll.u32 %v2316, 16
      %v2396 = vrot.slane %v2394, 5
      %v2397 = vor.u32 %v2393, %v2396
      %v2398 = vsel %vm2336, %v2388, %v2397
      %v2400 = vshrl.u32 %v2317, 16
      %v2402 = vrot.slane %v2400, 4
      %v2403 = vshll.u32 %v2317, 16
      %v2405 = vrot.slane %v2403, 5
      %v2406 = vor.u32 %v2402, %v2405
      %v2407 = vsel %vm2336, %v2397, %v2406
      %v2409 = vshrl.u32 %v2318, 16
      %v2411 = vrot.slane %v2409, 4
      %v2412 = vshll.u32 %v2318, 16
      %v2414 = vrot.slane %v2412, 5
      %v2415 = vor.u32 %v2411, %v2414
      %v2416 = vsel %vm2336, %v2406, %v2415
      %v2441 = vunpack.c.l.b16 %v2320
      %v2442 = vunpack.c.l.b16 %v2321
      %v2443 = vunpack.c.l.b16 %v2322
      %v2444 = vunpack.c.l.b16 %v2323
      %v2445 = vunpack.c.l.b16 %v2324
      %v2446 = vunpack.c.l.b16 %v2325
      %v2447 = vunpack.c.l.b16 %v2326
      %v2448 = vunpack.c.l.b16 %v2327
      %v2449 = vunpack.c.l.b16 %v2328
      %v2450 = vunpack.c.l.b16 %v2329
      %v2451 = vunpack.c.l.b16 %v2330
      %v2452 = vunpack.c.l.b16 %v2331
      %v2453 = vunpack.c.l.b16 %v2332
      %v2454 = vunpack.c.l.b16 %v2333
      %v2455 = vunpack.c.l.b16 %v2334
      %v2456 = vunpack.c.l.b16 %v2335
      %v2457 = vpack.c.b16 %v2442, %v2441
      %v2458 = vpack.c.b16 %v2444, %v2443
      %v2459 = vpack.c.b16 %v2446, %v2445
      %v2460 = vpack.c.b16 %v2448, %v2447
      %v2461 = vpack.c.b16 %v2450, %v2449
      %v2462 = vpack.c.b16 %v2452, %v2451
      %v2463 = vpack.c.b16 %v2454, %v2453
      %v2464 = vpack.c.b16 %v2456, %v2455
      %2473 = vmatprep.subr.bf16.mxu0 0
      %2474 = vmatpush1.bf16.msra.mxu0 %v2457
      %2475 = vmatprep.subr.bf16.mxu0 0
      %2476 = vmatpush1.bf16.msra.mxu0 %v2458
      %2477 = vmatprep.subr.bf16.mxu0 0
      %2478 = vmatpush1.bf16.msra.mxu0 %v2459
      %2479 = vmatprep.subr.bf16.mxu0 0
      %2480 = vmatpush1.bf16.msra.mxu0 %v2460
      %2481 = vmatprep.subr.bf16.mxu0 0
      %2482 = vmatpush1.bf16.msra.mxu0 %v2461
      %2483 = vmatprep.subr.bf16.mxu0 0
      %2484 = vmatpush1.bf16.msra.mxu0 %v2462
      %2485 = vmatprep.subr.bf16.mxu0 0
      %2486 = vmatpush1.bf16.msra.mxu0 %v2463
      %2487 = vmatprep.subr.bf16.mxu0 0
      %2488 = vmatpush1.bf16.msra.mxu0 %v2464
      %2489 = vmatprep.subr.bf16.mxu0 0
      %2490 = vmatpush1.bf16.msra.mxu0 0
      %2491 = vmatprep.subr.bf16.mxu0 0
      %2492 = vmatpush1.bf16.msra.mxu0 0
      %2493 = vmatprep.subr.bf16.mxu0 0
      %2494 = vmatpush1.bf16.msra.mxu0 0
      %2495 = vmatprep.subr.bf16.mxu0 0
      %2496 = vmatpush1.bf16.msra.mxu0 0
      %2497 = vmatprep.subr.bf16.mxu0 0
      %2498 = vmatpush1.bf16.msra.mxu0 0
      %2499 = vmatprep.subr.bf16.mxu0 0
      %2500 = vmatpush1.bf16.msra.mxu0 0
      %2501 = vmatprep.subr.bf16.mxu0 0
      %2502 = vmatpush1.bf16.msra.mxu0 0
      %2503 = vmatprep.subr.bf16.mxu0 0
      %2504 = vmatpush1.bf16.msra.mxu0 0
      %2505 = vmatprep.mubr.bf16.mxu0 0
      %2506 = vmatmul.mubr.bf16.gmra.mrb[0].mxu0 %v2353
      %v2507 = vpop.f32.mrb[0].mxu0
      %v2508 = vadd.f32 0.0, %v2507
      %v2509 = vpop.f32.mrb[0].mxu0
      %v2510 = vpop.f32.mrb[0].mxu0
      %v2511 = vadd.f32 0.0, %v2510
      %v2512 = vpop.f32.mrb[0].mxu0
      %2513 = vmatprep.mubr.bf16.mxu0 0
      %2514 = vmatmul.mubr.bf16.gmra.mrb[0].mxu0 %v2362
      %v2515 = vpop.f32.mrb[0].mxu0
      %v2516 = vadd.f32 0.0, %v2515
      %v2517 = vpop.f32.mrb[0].mxu0
      %v2518 = vpop.f32.mrb[0].mxu0
      %v2519 = vadd.f32 0.0, %v2518
      %v2520 = vpop.f32.mrb[0].mxu0
      %2521 = vmatprep.mubr.bf16.mxu0 0
      %2522 = vmatmul.mubr.bf16.gmra.mrb[0].mxu0 %v2371
      %v2523 = vpop.f32.mrb[0].mxu0
      %v2524 = vadd.f32 0.0, %v2523
      %v2525 = vpop.f32.mrb[0].mxu0
      %v2526 = vpop.f32.mrb[0].mxu0
      %v2527 = vadd.f32 0.0, %v2526
      %v2528 = vpop.f32.mrb[0].mxu0
      %2529 = vmatprep.mubr.bf16.mxu0 0
      %2530 = vmatmul.mubr.bf16.gmra.mrb[0].mxu0 %v2380
      %v2531 = vpop.f32.mrb[0].mxu0
      %v2532 = vadd.f32 0.0, %v2531
      %v2533 = vpop.f32.mrb[0].mxu0
      %v2534 = vpop.f32.mrb[0].mxu0
      %v2535 = vadd.f32 0.0, %v2534
      %v2536 = vpop.f32.mrb[0].mxu0
      %2537 = vmatprep.mubr.bf16.mxu0 0
      %2538 = vmatmul.mubr.bf16.gmra.mrb[0].mxu0 %v2389
      %v2539 = vpop.f32.mrb[0].mxu0
      %v2540 = vadd.f32 0.0, %v2539
      %v2541 = vpop.f32.mrb[0].mxu0
      %v2542 = vpop.f32.mrb[0].mxu0
      %v2543 = vadd.f32 0.0, %v2542
      %v2544 = vpop.f32.mrb[0].mxu0
      %2545 = vmatprep.mubr.bf16.mxu0 0
      %2546 = vmatmul.mubr.bf16.gmra.mrb[0].mxu0 %v2398
      %v2547 = vpop.f32.mrb[0].mxu0
      %v2548 = vadd.f32 0.0, %v2547
      %v2549 = vpop.f32.mrb[0].mxu0
      %v2550 = vpop.f32.mrb[0].mxu0
      %v2551 = vadd.f32 0.0, %v2550
      %v2552 = vpop.f32.mrb[0].mxu0
      %2553 = vmatprep.mubr.bf16.mxu0 0
      %2554 = vmatmul.mubr.bf16.gmra.mrb[0].mxu0 %v2407
      %v2555 = vpop.f32.mrb[0].mxu0
      %v2556 = vadd.f32 0.0, %v2555
      %v2557 = vpop.f32.mrb[0].mxu0
      %v2558 = vpop.f32.mrb[0].mxu0
      %v2559 = vadd.f32 0.0, %v2558
      %v2560 = vpop.f32.mrb[0].mxu0
      %2561 = vmatprep.mubr.bf16.mxu0 0
      %2562 = vmatmul.mubr.bf16.gmra.mrb[0].mxu0 %v2416
      %v2563 = vpop.f32.mrb[0].mxu0
      %v2564 = vadd.f32 0.0, %v2563
      %v2565 = vpop.f32.mrb[0].mxu0
      %v2566 = vpop.f32.mrb[0].mxu0
      %v2567 = vadd.f32 0.0, %v2566
      %v2568 = vpop.f32.mrb[0].mxu0
      %2569 = vdwg.mxu0
      %v2570 = vld [vmem:[#allocation4] sm:$0xff]
      %v2571 = vld [vmem:[#allocation4 + $0x8] sm:$0xff]
      %v2572 = vld [vmem:[#allocation4 + $0x10] sm:$0xff]
      %v2573 = vld [vmem:[#allocation4 + $0x18] sm:$0xff]
      %v2574 = vld [vmem:[#allocation4 + $0x20] sm:$0xff]
      %v2575 = vld [vmem:[#allocation4 + $0x28] sm:$0xff]
      %v2576 = vld [vmem:[#allocation4 + $0x30] sm:$0xff]
      %v2577 = vld [vmem:[#allocation4 + $0x38] sm:$0xff]
      %v2578 = vld [vmem:[#allocation4 + $0x40] sm:$0xff]
      %v2579 = vld [vmem:[#allocation4 + $0x48] sm:$0xff]
      %v2580 = vld [vmem:[#allocation4 + $0x50] sm:$0xff]
      %v2581 = vld [vmem:[#allocation4 + $0x58] sm:$0xff]
      %v2582 = vld [vmem:[#allocation4 + $0x60] sm:$0xff]
      %v2583 = vld [vmem:[#allocation4 + $0x68] sm:$0xff]
      %v2584 = vld [vmem:[#allocation4 + $0x70] sm:$0xff]
      %v2585 = vld [vmem:[#allocation4 + $0x78] sm:$0xff]
      %v2586 = vadd.f32 %v2570, %v2508
      %v2587 = vadd.f32 %v2571, %v2511
      %v2588 = vadd.f32 %v2572, %v2516
      %v2589 = vadd.f32 %v2573, %v2519
      %v2590 = vadd.f32 %v2574, %v2524
      %v2591 = vadd.f32 %v2575, %v2527
      %v2592 = vadd.f32 %v2576, %v2532
      %v2593 = vadd.f32 %v2577, %v2535
      %v2594 = vadd.f32 %v2578, %v2540
      %v2595 = vadd.f32 %v2579, %v2543
      %v2596 = vadd.f32 %v2580, %v2548
      %v2597 = vadd.f32 %v2581, %v2551
      %v2598 = vadd.f32 %v2582, %v2556
      %v2599 = vadd.f32 %v2583, %v2559
      %v2600 = vadd.f32 %v2584, %v2564
      %v2601 = vadd.f32 %v2585, %v2567
      %2602 = vst [vmem:[#allocation4] sm:$0xff] %v2586
      %2603 = vst [vmem:[#allocation4 + $0x8] sm:$0xff] %v2587
      %2604 = vst [vmem:[#allocation4 + $0x10] sm:$0xff] %v2588
      %2605 = vst [vmem:[#allocation4 + $0x18] sm:$0xff] %v2589
      %2606 = vst [vmem:[#allocation4 + $0x20] sm:$0xff] %v2590
      %2607 = vst [vmem:[#allocation4 + $0x28] sm:$0xff] %v2591
      %2608 = vst [vmem:[#allocation4 + $0x30] sm:$0xff] %v2592
      %2609 = vst [vmem:[#allocation4 + $0x38] sm:$0xff] %v2593
      %2610 = vst [vmem:[#allocation4 + $0x40] sm:$0xff] %v2594
      %2611 = vst [vmem:[#allocation4 + $0x48] sm:$0xff] %v2595
      %2612 = vst [vmem:[#allocation4 + $0x50] sm:$0xff] %v2596
      %2613 = vst [vmem:[#allocation4 + $0x58] sm:$0xff] %v2597
      %2614 = vst [vmem:[#allocation4 + $0x60] sm:$0xff] %v2598
      %2615 = vst [vmem:[#allocation4 + $0x68] sm:$0xff] %v2599
      %2616 = vst [vmem:[#allocation4 + $0x70] sm:$0xff] %v2600
      %2617 = vst [vmem:[#allocation4 + $0x78] sm:$0xff] %v2601
      %v2618 = vld [vmem:[#allocation3 + $0x8] sm:$0xf8]
      %v2619 = vld [vmem:[#allocation3 + $0x10] sm:$0xff]
      %v2620 = vld [vmem:[#allocation3 + $0x18] sm:$0xff]
      %v2621 = vld [vmem:[#allocation3 + $0x20] sm:$0xff]
      %v2622 = vld [vmem:[#allocation3 + $0x28] sm:$0xff]
      %v2623 = vld [vmem:[#allocation3 + $0x30] sm:$0xff]
      %v2624 = vld [vmem:[#allocation3 + $0x38] sm:$0xff]
      %v2625 = vld [vmem:[#allocation3 + $0x40] sm:$0xff]
      %v2626 = vld [vmem:[#allocation3 + $0x48] sm:$0xf]
      %s2627 = scalar_lea.vmem %s7, 192
      %v2628 = vld [vmem:[%s2627] sm:$0xf]
      %v2629 = vld [vmem:[%s2627 + $0x4] sm:$0xf]
      %v2630 = vld [vmem:[%s2627 + $0x8] sm:$0xf]
      %v2631 = vld [vmem:[%s2627 + $0xc] sm:$0xf]
      %v2632 = vld [vmem:[%s2627 + $0x10] sm:$0xf]
      %v2633 = vld [vmem:[%s2627 + $0x14] sm:$0xf]
      %v2634 = vld [vmem:[%s2627 + $0x18] sm:$0xf]
      %v2635 = vld [vmem:[%s2627 + $0x1c] sm:$0xf]
      %v2636 = vld [vmem:[%s2627 + $0x20] sm:$0xf]
      %v2637 = vld [vmem:[%s2627 + $0x24] sm:$0xf]
      %v2638 = vld [vmem:[%s2627 + $0x28] sm:$0xf]
      %v2639 = vld [vmem:[%s2627 + $0x2c] sm:$0xf]
      %v2640 = vld [vmem:[%s2627 + $0x30] sm:$0xf]
      %v2641 = vld [vmem:[%s2627 + $0x34] sm:$0xf]
      %v2642 = vld [vmem:[%s2627 + $0x38] sm:$0xf]
      %v2643 = vld [vmem:[%s2627 + $0x3c] sm:$0xf]
      %v2645 = vshrl.u32 %v2618, 16
      %v2647 = vrot.slane %v2645, 3
      %v2648 = vshll.u32 %v2618, 16
      %v2650 = vrot.slane %v2648, 4
      %v2651 = vor.u32 %v2647, %v2650
      %v2653 = vshrl.u32 %v2619, 16
      %v2655 = vrot.slane %v2653, 3
      %v2656 = vshll.u32 %v2619, 16
      %v2658 = vrot.slane %v2656, 4
      %v2659 = vor.u32 %v2655, %v2658
      %v2660 = vsel %vm1807, %v2651, %v2659
      %v2662 = vshrl.u32 %v2620, 16
      %v2664 = vrot.slane %v2662, 3
      %v2665 = vshll.u32 %v2620, 16
      %v2667 = vrot.slane %v2665, 4
      %v2668 = vor.u32 %v2664, %v2667
      %v2669 = vsel %vm1807, %v2659, %v2668
      %v2671 = vshrl.u32 %v2621, 16
      %v2673 = vrot.slane %v2671, 3
      %v2674 = vshll.u32 %v2621, 16
      %v2676 = vrot.slane %v2674, 4
      %v2677 = vor.u32 %v2673, %v2676
      %v2678 = vsel %vm1807, %v2668, %v2677
      %v2680 = vshrl.u32 %v2622, 16
      %v2682 = vrot.slane %v2680, 3
      %v2683 = vshll.u32 %v2622, 16
      %v2685 = vrot.slane %v2683, 4
      %v2686 = vor.u32 %v2682, %v2685
      %v2687 = vsel %vm1807, %v2677, %v2686
      %v2689 = vshrl.u32 %v2623, 16
      %v2691 = vrot.slane %v2689, 3
      %v2692 = vshll.u32 %v2623, 16
      %v2694 = vrot.slane %v2692, 4
      %v2695 = vor.u32 %v2691, %v2694
      %v2696 = vsel %vm1807, %v2686, %v2695
      %v2698 = vshrl.u32 %v2624, 16
      %v2700 = vrot.slane %v2698, 3
      %v2701 = vshll.u32 %v2624, 16
      %v2703 = vrot.slane %v2701, 4
      %v2704 = vor.u32 %v2700, %v2703
      %v2705 = vsel %vm1807, %v2695, %v2704
      %v2707 = vshrl.u32 %v2625, 16
      %v2709 = vrot.slane %v2707, 3
      %v2710 = vshll.u32 %v2625, 16
      %v2712 = vrot.slane %v2710, 4
      %v2713 = vor.u32 %v2709, %v2712
      %v2714 = vsel %vm1807, %v2704, %v2713
      %v2716 = vshrl.u32 %v2626, 16
      %v2718 = vrot.slane %v2716, 3
      %v2719 = vshll.u32 %v2626, 16
      %v2721 = vrot.slane %v2719, 4
      %v2722 = vor.u32 %v2718, %v2721
      %v2723 = vsel %vm1807, %v2713, %v2722
      %v2748 = vunpack.c.l.b16 %v2628
      %v2749 = vunpack.c.l.b16 %v2629
      %v2750 = vunpack.c.l.b16 %v2630
      %v2751 = vunpack.c.l.b16 %v2631
      %v2752 = vunpack.c.l.b16 %v2632
      %v2753 = vunpack.c.l.b16 %v2633
      %v2754 = vunpack.c.l.b16 %v2634
      %v2755 = vunpack.c.l.b16 %v2635
      %v2756 = vunpack.c.l.b16 %v2636
      %v2757 = vunpack.c.l.b16 %v2637
      %v2758 = vunpack.c.l.b16 %v2638
      %v2759 = vunpack.c.l.b16 %v2639
      %v2760 = vunpack.c.l.b16 %v2640
      %v2761 = vunpack.c.l.b16 %v2641
      %v2762 = vunpack.c.l.b16 %v2642
      %v2763 = vunpack.c.l.b16 %v2643
      %v2764 = vpack.c.b16 %v2749, %v2748
      %v2765 = vpack.c.b16 %v2751, %v2750
      %v2766 = vpack.c.b16 %v2753, %v2752
      %v2767 = vpack.c.b16 %v2755, %v2754
      %v2768 = vpack.c.b16 %v2757, %v2756
      %v2769 = vpack.c.b16 %v2759, %v2758
      %v2770 = vpack.c.b16 %v2761, %v2760
      %v2771 = vpack.c.b16 %v2763, %v2762
      %2780 = vmatprep.subr.bf16.mxu0 0
      %2781 = vmatpush1.bf16.msra.mxu0 %v2764
      %2782 = vmatprep.subr.bf16.mxu0 0
      %2783 = vmatpush1.bf16.msra.mxu0 %v2765
      %2784 = vmatprep.subr.bf16.mxu0 0
      %2785 = vmatpush1.bf16.msra.mxu0 %v2766
      %2786 = vmatprep.subr.bf16.mxu0 0
      %2787 = vmatpush1.bf16.msra.mxu0 %v2767
      %2788 = vmatprep.subr.bf16.mxu0 0
      %2789 = vmatpush1.bf16.msra.mxu0 %v2768
      %2790 = vmatprep.subr.bf16.mxu0 0
      %2791 = vmatpush1.bf16.msra.mxu0 %v2769
      %2792 = vmatprep.subr.bf16.mxu0 0
      %2793 = vmatpush1.bf16.msra.mxu0 %v2770
      %2794 = vmatprep.subr.bf16.mxu0 0
      %2795 = vmatpush1.bf16.msra.mxu0 %v2771
      %2796 = vmatprep.subr.bf16.mxu0 0
      %2797 = vmatpush1.bf16.msra.mxu0 0
      %2798 = vmatprep.subr.bf16.mxu0 0
      %2799 = vmatpush1.bf16.msra.mxu0 0
      %2800 = vmatprep.subr.bf16.mxu0 0
      %2801 = vmatpush1.bf16.msra.mxu0 0
      %2802 = vmatprep.subr.bf16.mxu0 0
      %2803 = vmatpush1.bf16.msra.mxu0 0
      %2804 = vmatprep.subr.bf16.mxu0 0
      %2805 = vmatpush1.bf16.msra.mxu0 0
      %2806 = vmatprep.subr.bf16.mxu0 0
      %2807 = vmatpush1.bf16.msra.mxu0 0
      %2808 = vmatprep.subr.bf16.mxu0 0
      %2809 = vmatpush1.bf16.msra.mxu0 0
      %2810 = vmatprep.subr.bf16.mxu0 0
      %2811 = vmatpush1.bf16.msra.mxu0 0
      %2812 = vmatprep.mubr.bf16.mxu0 0
      %2813 = vmatmul.mubr.bf16.gmra.mrb[0].mxu0 %v2660
      %v2814 = vpop.f32.mrb[0].mxu0
      %v2815 = vadd.f32 0.0, %v2814
      %v2816 = vpop.f32.mrb[0].mxu0
      %v2817 = vpop.f32.mrb[0].mxu0
      %v2818 = vadd.f32 0.0, %v2817
      %v2819 = vpop.f32.mrb[0].mxu0
      %2820 = vmatprep.mubr.bf16.mxu0 0
      %2821 = vmatmul.mubr.bf16.gmra.mrb[0].mxu0 %v2669
      %v2822 = vpop.f32.mrb[0].mxu0
      %v2823 = vadd.f32 0.0, %v2822
      %v2824 = vpop.f32.mrb[0].mxu0
      %v2825 = vpop.f32.mrb[0].mxu0
      %v2826 = vadd.f32 0.0, %v2825
      %v2827 = vpop.f32.mrb[0].mxu0
      %2828 = vmatprep.mubr.bf16.mxu0 0
      %2829 = vmatmul.mubr.bf16.gmra.mrb[0].mxu0 %v2678
      %v2830 = vpop.f32.mrb[0].mxu0
      %v2831 = vadd.f32 0.0, %v2830
      %v2832 = vpop.f32.mrb[0].mxu0
      %v2833 = vpop.f32.mrb[0].mxu0
      %v2834 = vadd.f32 0.0, %v2833
      %v2835 = vpop.f32.mrb[0].mxu0
      %2836 = vmatprep.mubr.bf16.mxu0 0
      %2837 = vmatmul.mubr.bf16.gmra.mrb[0].mxu0 %v2687
      %v2838 = vpop.f32.mrb[0].mxu0
      %v2839 = vadd.f32 0.0, %v2838
      %v2840 = vpop.f32.mrb[0].mxu0
      %v2841 = vpop.f32.mrb[0].mxu0
      %v2842 = vadd.f32 0.0, %v2841
      %v2843 = vpop.f32.mrb[0].mxu0
      %2844 = vmatprep.mubr.bf16.mxu0 0
      %2845 = vmatmul.mubr.bf16.gmra.mrb[0].mxu0 %v2696
      %v2846 = vpop.f32.mrb[0].mxu0
      %v2847 = vadd.f32 0.0, %v2846
      %v2848 = vpop.f32.mrb[0].mxu0
      %v2849 = vpop.f32.mrb[0].mxu0
      %v2850 = vadd.f32 0.0, %v2849
      %v2851 = vpop.f32.mrb[0].mxu0
      %2852 = vmatprep.mubr.bf16.mxu0 0
      %2853 = vmatmul.mubr.bf16.gmra.mrb[0].mxu0 %v2705
      %v2854 = vpop.f32.mrb[0].mxu0
      %v2855 = vadd.f32 0.0, %v2854
      %v2856 = vpop.f32.mrb[0].mxu0
      %v2857 = vpop.f32.mrb[0].mxu0
      %v2858 = vadd.f32 0.0, %v2857
      %v2859 = vpop.f32.mrb[0].mxu0
      %2860 = vmatprep.mubr.bf16.mxu0 0
      %2861 = vmatmul.mubr.bf16.gmra.mrb[0].mxu0 %v2714
      %v2862 = vpop.f32.mrb[0].mxu0
      %v2863 = vadd.f32 0.0, %v2862
      %v2864 = vpop.f32.mrb[0].mxu0
      %v2865 = vpop.f32.mrb[0].mxu0
      %v2866 = vadd.f32 0.0, %v2865
      %v2867 = vpop.f32.mrb[0].mxu0
      %2868 = vmatprep.mubr.bf16.mxu0 0
      %2869 = vmatmul.mubr.bf16.gmra.mrb[0].mxu0 %v2723
      %v2870 = vpop.f32.mrb[0].mxu0
      %v2871 = vadd.f32 0.0, %v2870
      %v2872 = vpop.f32.mrb[0].mxu0
      %v2873 = vpop.f32.mrb[0].mxu0
      %v2874 = vadd.f32 0.0, %v2873
      %v2875 = vpop.f32.mrb[0].mxu0
      %2876 = vdwg.mxu0
      %v2877 = vld [vmem:[#allocation4] sm:$0xff]
      %v2878 = vld [vmem:[#allocation4 + $0x8] sm:$0xff]
      %v2879 = vld [vmem:[#allocation4 + $0x10] sm:$0xff]
      %v2880 = vld [vmem:[#allocation4 + $0x18] sm:$0xff]
      %v2881 = vld [vmem:[#allocation4 + $0x20] sm:$0xff]
      %v2882 = vld [vmem:[#allocation4 + $0x28] sm:$0xff]
      %v2883 = vld [vmem:[#allocation4 + $0x30] sm:$0xff]
      %v2884 = vld [vmem:[#allocation4 + $0x38] sm:$0xff]
      %v2885 = vld [vmem:[#allocation4 + $0x40] sm:$0xff]
      %v2886 = vld [vmem:[#allocation4 + $0x48] sm:$0xff]
      %v2887 = vld [vmem:[#allocation4 + $0x50] sm:$0xff]
      %v2888 = vld [vmem:[#allocation4 + $0x58] sm:$0xff]
      %v2889 = vld [vmem:[#allocation4 + $0x60] sm:$0xff]
      %v2890 = vld [vmem:[#allocation4 + $0x68] sm:$0xff]
      %v2891 = vld [vmem:[#allocation4 + $0x70] sm:$0xff]
      %v2892 = vld [vmem:[#allocation4 + $0x78] sm:$0xff]
      %v2893 = vadd.f32 %v2877, %v2815
      %v2894 = vadd.f32 %v2878, %v2818
      %v2895 = vadd.f32 %v2879, %v2823
      %v2896 = vadd.f32 %v2880, %v2826
      %v2897 = vadd.f32 %v2881, %v2831
      %v2898 = vadd.f32 %v2882, %v2834
      %v2899 = vadd.f32 %v2883, %v2839
      %v2900 = vadd.f32 %v2884, %v2842
      %v2901 = vadd.f32 %v2885, %v2847
      %v2902 = vadd.f32 %v2886, %v2850
      %v2903 = vadd.f32 %v2887, %v2855
      %v2904 = vadd.f32 %v2888, %v2858
      %v2905 = vadd.f32 %v2889, %v2863
      %v2906 = vadd.f32 %v2890, %v2866
      %v2907 = vadd.f32 %v2891, %v2871
      %v2908 = vadd.f32 %v2892, %v2874
      %2909 = vst [vmem:[#allocation4] sm:$0xff] %v2893
      %2910 = vst [vmem:[#allocation4 + $0x8] sm:$0xff] %v2894
      %2911 = vst [vmem:[#allocation4 + $0x10] sm:$0xff] %v2895
      %2912 = vst [vmem:[#allocation4 + $0x18] sm:$0xff] %v2896
      %2913 = vst [vmem:[#allocation4 + $0x20] sm:$0xff] %v2897
      %2914 = vst [vmem:[#allocation4 + $0x28] sm:$0xff] %v2898
      %2915 = vst [vmem:[#allocation4 + $0x30] sm:$0xff] %v2899
      %2916 = vst [vmem:[#allocation4 + $0x38] sm:$0xff] %v2900
      %2917 = vst [vmem:[#allocation4 + $0x40] sm:$0xff] %v2901
      %2918 = vst [vmem:[#allocation4 + $0x48] sm:$0xff] %v2902
      %2919 = vst [vmem:[#allocation4 + $0x50] sm:$0xff] %v2903
      %2920 = vst [vmem:[#allocation4 + $0x58] sm:$0xff] %v2904
      %2921 = vst [vmem:[#allocation4 + $0x60] sm:$0xff] %v2905
      %2922 = vst [vmem:[#allocation4 + $0x68] sm:$0xff] %v2906
      %2923 = vst [vmem:[#allocation4 + $0x70] sm:$0xff] %v2907
      %2924 = vst [vmem:[#allocation4 + $0x78] sm:$0xff] %v2908
      %v2925 = vld [vmem:[#allocation3 + $0x8] sm:$0xf0]
      %v2926 = vld [vmem:[#allocation3 + $0x10] sm:$0xff]
      %v2927 = vld [vmem:[#allocation3 + $0x18] sm:$0xff]
      %v2928 = vld [vmem:[#allocation3 + $0x20] sm:$0xff]
      %v2929 = vld [vmem:[#allocation3 + $0x28] sm:$0xff]
      %v2930 = vld [vmem:[#allocation3 + $0x30] sm:$0xff]
      %v2931 = vld [vmem:[#allocation3 + $0x38] sm:$0xff]
      %v2932 = vld [vmem:[#allocation3 + $0x40] sm:$0xff]
      %v2933 = vld [vmem:[#allocation3 + $0x48] sm:$0xf]
      %s2934 = scalar_lea.vmem %s7, 256
      %v2935 = vld [vmem:[%s2934] sm:$0xf]
      %v2936 = vld [vmem:[%s2934 + $0x4] sm:$0xf]
      %v2937 = vld [vmem:[%s2934 + $0x8] sm:$0xf]
      %v2938 = vld [vmem:[%s2934 + $0xc] sm:$0xf]
      %v2939 = vld [vmem:[%s2934 + $0x10] sm:$0xf]
      %v2940 = vld [vmem:[%s2934 + $0x14] sm:$0xf]
      %v2941 = vld [vmem:[%s2934 + $0x18] sm:$0xf]
      %v2942 = vld [vmem:[%s2934 + $0x1c] sm:$0xf]
      %v2943 = vld [vmem:[%s2934 + $0x20] sm:$0xf]
      %v2944 = vld [vmem:[%s2934 + $0x24] sm:$0xf]
      %v2945 = vld [vmem:[%s2934 + $0x28] sm:$0xf]
      %v2946 = vld [vmem:[%s2934 + $0x2c] sm:$0xf]
      %v2947 = vld [vmem:[%s2934 + $0x30] sm:$0xf]
      %v2948 = vld [vmem:[%s2934 + $0x34] sm:$0xf]
      %v2949 = vld [vmem:[%s2934 + $0x38] sm:$0xf]
      %v2950 = vld [vmem:[%s2934 + $0x3c] sm:$0xf]
      %v2960 = vrot.slane %v2925, 4
      %v2961 = vrot.slane %v2926, 4
      %v2962 = vsel %vm1748, %v2960, %v2961
      %v2963 = vrot.slane %v2927, 4
      %v2964 = vsel %vm1748, %v2961, %v2963
      %v2965 = vrot.slane %v2928, 4
      %v2966 = vsel %vm1748, %v2963, %v2965
      %v2967 = vrot.slane %v2929, 4
      %v2968 = vsel %vm1748, %v2965, %v2967
      %v2969 = vrot.slane %v2930, 4
      %v2970 = vsel %vm1748, %v2967, %v2969
      %v2971 = vrot.slane %v2931, 4
      %v2972 = vsel %vm1748, %v2969, %v2971
      %v2973 = vrot.slane %v2932, 4
      %v2974 = vsel %vm1748, %v2971, %v2973
      %v2975 = vrot.slane %v2933, 4
      %v2976 = vsel %vm1748, %v2973, %v2975
      %v3001 = vunpack.c.l.b16 %v2935
      %v3002 = vunpack.c.l.b16 %v2936
      %v3003 = vunpack.c.l.b16 %v2937
      %v3004 = vunpack.c.l.b16 %v2938
      %v3005 = vunpack.c.l.b16 %v2939
      %v3006 = vunpack.c.l.b16 %v2940
      %v3007 = vunpack.c.l.b16 %v2941
      %v3008 = vunpack.c.l.b16 %v2942
      %v3009 = vunpack.c.l.b16 %v2943
      %v3010 = vunpack.c.l.b16 %v2944
      %v3011 = vunpack.c.l.b16 %v2945
      %v3012 = vunpack.c.l.b16 %v2946
      %v3013 = vunpack.c.l.b16 %v2947
      %v3014 = vunpack.c.l.b16 %v2948
      %v3015 = vunpack.c.l.b16 %v2949
      %v3016 = vunpack.c.l.b16 %v2950
      %v3017 = vpack.c.b16 %v3002, %v3001
      %v3018 = vpack.c.b16 %v3004, %v3003
      %v3019 = vpack.c.b16 %v3006, %v3005
      %v3020 = vpack.c.b16 %v3008, %v3007
      %v3021 = vpack.c.b16 %v3010, %v3009
      %v3022 = vpack.c.b16 %v3012, %v3011
      %v3023 = vpack.c.b16 %v3014, %v3013
      %v3024 = vpack.c.b16 %v3016, %v3015
      %3033 = vmatprep.subr.bf16.mxu0 0
      %3034 = vmatpush1.bf16.msra.mxu0 %v3017
      %3035 = vmatprep.subr.bf16.mxu0 0
      %3036 = vmatpush1.bf16.msra.mxu0 %v3018
      %3037 = vmatprep.subr.bf16.mxu0 0
      %3038 = vmatpush1.bf16.msra.mxu0 %v3019
      %3039 = vmatprep.subr.bf16.mxu0 0
      %3040 = vmatpush1.bf16.msra.mxu0 %v3020
      %3041 = vmatprep.subr.bf16.mxu0 0
      %3042 = vmatpush1.bf16.msra.mxu0 %v3021
      %3043 = vmatprep.subr.bf16.mxu0 0
      %3044 = vmatpush1.bf16.msra.mxu0 %v3022
      %3045 = vmatprep.subr.bf16.mxu0 0
      %3046 = vmatpush1.bf16.msra.mxu0 %v3023
      %3047 = vmatprep.subr.bf16.mxu0 0
      %3048 = vmatpush1.bf16.msra.mxu0 %v3024
      %3049 = vmatprep.subr.bf16.mxu0 0
      %3050 = vmatpush1.bf16.msra.mxu0 0
      %3051 = vmatprep.subr.bf16.mxu0 0
      %3052 = vmatpush1.bf16.msra.mxu0 0
      %3053 = vmatprep.subr.bf16.mxu0 0
      %3054 = vmatpush1.bf16.msra.mxu0 0
      %3055 = vmatprep.subr.bf16.mxu0 0
      %3056 = vmatpush1.bf16.msra.mxu0 0
      %3057 = vmatprep.subr.bf16.mxu0 0
      %3058 = vmatpush1.bf16.msra.mxu0 0
      %3059 = vmatprep.subr.bf16.mxu0 0
      %3060 = vmatpush1.bf16.msra.mxu0 0
      %3061 = vmatprep.subr.bf16.mxu0 0
      %3062 = vmatpush1.bf16.msra.mxu0 0
      %3063 = vmatprep.subr.bf16.mxu0 0
      %3064 = vmatpush1.bf16.msra.mxu0 0
      %3065 = vmatprep.mubr.bf16.mxu0 0
      %3066 = vmatmul.mubr.bf16.gmra.mrb[0].mxu0 %v2962
      %v3067 = vpop.f32.mrb[0].mxu0
      %v3068 = vadd.f32 0.0, %v3067
      %v3069 = vpop.f32.mrb[0].mxu0
      %v3070 = vpop.f32.mrb[0].mxu0
      %v3071 = vadd.f32 0.0, %v3070
      %v3072 = vpop.f32.mrb[0].mxu0
      %3073 = vmatprep.mubr.bf16.mxu0 0
      %3074 = vmatmul.mubr.bf16.gmra.mrb[0].mxu0 %v2964
      %v3075 = vpop.f32.mrb[0].mxu0
      %v3076 = vadd.f32 0.0, %v3075
      %v3077 = vpop.f32.mrb[0].mxu0
      %v3078 = vpop.f32.mrb[0].mxu0
      %v3079 = vadd.f32 0.0, %v3078
      %v3080 = vpop.f32.mrb[0].mxu0
      %3081 = vmatprep.mubr.bf16.mxu0 0
      %3082 = vmatmul.mubr.bf16.gmra.mrb[0].mxu0 %v2966
      %v3083 = vpop.f32.mrb[0].mxu0
      %v3084 = vadd.f32 0.0, %v3083
      %v3085 = vpop.f32.mrb[0].mxu0
      %v3086 = vpop.f32.mrb[0].mxu0
      %v3087 = vadd.f32 0.0, %v3086
      %v3088 = vpop.f32.mrb[0].mxu0
      %3089 = vmatprep.mubr.bf16.mxu0 0
      %3090 = vmatmul.mubr.bf16.gmra.mrb[0].mxu0 %v2968
      %v3091 = vpop.f32.mrb[0].mxu0
      %v3092 = vadd.f32 0.0, %v3091
      %v3093 = vpop.f32.mrb[0].mxu0
      %v3094 = vpop.f32.mrb[0].mxu0
      %v3095 = vadd.f32 0.0, %v3094
      %v3096 = vpop.f32.mrb[0].mxu0
      %3097 = vmatprep.mubr.bf16.mxu0 0
      %3098 = vmatmul.mubr.bf16.gmra.mrb[0].mxu0 %v2970
      %v3099 = vpop.f32.mrb[0].mxu0
      %v3100 = vadd.f32 0.0, %v3099
      %v3101 = vpop.f32.mrb[0].mxu0
      %v3102 = vpop.f32.mrb[0].mxu0
      %v3103 = vadd.f32 0.0, %v3102
      %v3104 = vpop.f32.mrb[0].mxu0
      %3105 = vmatprep.mubr.bf16.mxu0 0
      %3106 = vmatmul.mubr.bf16.gmra.mrb[0].mxu0 %v2972
      %v3107 = vpop.f32.mrb[0].mxu0
      %v3108 = vadd.f32 0.0, %v3107
      %v3109 = vpop.f32.mrb[0].mxu0
      %v3110 = vpop.f32.mrb[0].mxu0
      %v3111 = vadd.f32 0.0, %v3110
      %v3112 = vpop.f32.mrb[0].mxu0
      %3113 = vmatprep.mubr.bf16.mxu0 0
      %3114 = vmatmul.mubr.bf16.gmra.mrb[0].mxu0 %v2974
      %v3115 = vpop.f32.mrb[0].mxu0
      %v3116 = vadd.f32 0.0, %v3115
      %v3117 = vpop.f32.mrb[0].mxu0
      %v3118 = vpop.f32.mrb[0].mxu0
      %v3119 = vadd.f32 0.0, %v3118
      %v3120 = vpop.f32.mrb[0].mxu0
      %3121 = vmatprep.mubr.bf16.mxu0 0
      %3122 = vmatmul.mubr.bf16.gmra.mrb[0].mxu0 %v2976
      %v3123 = vpop.f32.mrb[0].mxu0
      %v3124 = vadd.f32 0.0, %v3123
      %v3125 = vpop.f32.mrb[0].mxu0
      %v3126 = vpop.f32.mrb[0].mxu0
      %v3127 = vadd.f32 0.0, %v3126
      %v3128 = vpop.f32.mrb[0].mxu0
      %3129 = vdwg.mxu0
      %v3130 = vld [vmem:[#allocation4] sm:$0xff]
      %v3131 = vld [vmem:[#allocation4 + $0x8] sm:$0xff]
      %v3132 = vld [vmem:[#allocation4 + $0x10] sm:$0xff]
      %v3133 = vld [vmem:[#allocation4 + $0x18] sm:$0xff]
      %v3134 = vld [vmem:[#allocation4 + $0x20] sm:$0xff]
      %v3135 = vld [vmem:[#allocation4 + $0x28] sm:$0xff]
      %v3136 = vld [vmem:[#allocation4 + $0x30] sm:$0xff]
      %v3137 = vld [vmem:[#allocation4 + $0x38] sm:$0xff]
      %v3138 = vld [vmem:[#allocation4 + $0x40] sm:$0xff]
      %v3139 = vld [vmem:[#allocation4 + $0x48] sm:$0xff]
      %v3140 = vld [vmem:[#allocation4 + $0x50] sm:$0xff]
      %v3141 = vld [vmem:[#allocation4 + $0x58] sm:$0xff]
      %v3142 = vld [vmem:[#allocation4 + $0x60] sm:$0xff]
      %v3143 = vld [vmem:[#allocation4 + $0x68] sm:$0xff]
      %v3144 = vld [vmem:[#allocation4 + $0x70] sm:$0xff]
      %v3145 = vld [vmem:[#allocation4 + $0x78] sm:$0xff]
      %v3146 = vadd.f32 %v3130, %v3068
      %v3147 = vadd.f32 %v3131, %v3071
      %v3148 = vadd.f32 %v3132, %v3076
      %v3149 = vadd.f32 %v3133, %v3079
      %v3150 = vadd.f32 %v3134, %v3084
      %v3151 = vadd.f32 %v3135, %v3087
      %v3152 = vadd.f32 %v3136, %v3092
      %v3153 = vadd.f32 %v3137, %v3095
      %v3154 = vadd.f32 %v3138, %v3100
      %v3155 = vadd.f32 %v3139, %v3103
      %v3156 = vadd.f32 %v3140, %v3108
      %v3157 = vadd.f32 %v3141, %v3111
      %v3158 = vadd.f32 %v3142, %v3116
      %v3159 = vadd.f32 %v3143, %v3119
      %v3160 = vadd.f32 %v3144, %v3124
      %v3161 = vadd.f32 %v3145, %v3127
      %3162 = vst [vmem:[#allocation4] sm:$0xff] %v3146
      %3163 = vst [vmem:[#allocation4 + $0x8] sm:$0xff] %v3147
      %3164 = vst [vmem:[#allocation4 + $0x10] sm:$0xff] %v3148
      %3165 = vst [vmem:[#allocation4 + $0x18] sm:$0xff] %v3149
      %3166 = vst [vmem:[#allocation4 + $0x20] sm:$0xff] %v3150
      %3167 = vst [vmem:[#allocation4 + $0x28] sm:$0xff] %v3151
      %3168 = vst [vmem:[#allocation4 + $0x30] sm:$0xff] %v3152
      %3169 = vst [vmem:[#allocation4 + $0x38] sm:$0xff] %v3153
      %3170 = vst [vmem:[#allocation4 + $0x40] sm:$0xff] %v3154
      %3171 = vst [vmem:[#allocation4 + $0x48] sm:$0xff] %v3155
      %3172 = vst [vmem:[#allocation4 + $0x50] sm:$0xff] %v3156
      %3173 = vst [vmem:[#allocation4 + $0x58] sm:$0xff] %v3157
      %3174 = vst [vmem:[#allocation4 + $0x60] sm:$0xff] %v3158
      %3175 = vst [vmem:[#allocation4 + $0x68] sm:$0xff] %v3159
      %3176 = vst [vmem:[#allocation4 + $0x70] sm:$0xff] %v3160
      %3177 = vst [vmem:[#allocation4 + $0x78] sm:$0xff] %v3161
      %v3178 = vld [vmem:[#allocation3 + $0x8] sm:$0xf0]
      %v3179 = vld [vmem:[#allocation3 + $0x10] sm:$0xff]
      %v3180 = vld [vmem:[#allocation3 + $0x18] sm:$0xff]
      %v3181 = vld [vmem:[#allocation3 + $0x20] sm:$0xff]
      %v3182 = vld [vmem:[#allocation3 + $0x28] sm:$0xff]
      %v3183 = vld [vmem:[#allocation3 + $0x30] sm:$0xff]
      %v3184 = vld [vmem:[#allocation3 + $0x38] sm:$0xff]
      %v3185 = vld [vmem:[#allocation3 + $0x40] sm:$0xff]
      %v3186 = vld [vmem:[#allocation3 + $0x48] sm:$0x1f]
      %s3187 = scalar_lea.vmem %s7, 320
      %v3188 = vld [vmem:[%s3187] sm:$0xf]
      %v3189 = vld [vmem:[%s3187 + $0x4] sm:$0xf]
      %v3190 = vld [vmem:[%s3187 + $0x8] sm:$0xf]
      %v3191 = vld [vmem:[%s3187 + $0xc] sm:$0xf]
      %v3192 = vld [vmem:[%s3187 + $0x10] sm:$0xf]
      %v3193 = vld [vmem:[%s3187 + $0x14] sm:$0xf]
      %v3194 = vld [vmem:[%s3187 + $0x18] sm:$0xf]
      %v3195 = vld [vmem:[%s3187 + $0x1c] sm:$0xf]
      %v3196 = vld [vmem:[%s3187 + $0x20] sm:$0xf]
      %v3197 = vld [vmem:[%s3187 + $0x24] sm:$0xf]
      %v3198 = vld [vmem:[%s3187 + $0x28] sm:$0xf]
      %v3199 = vld [vmem:[%s3187 + $0x2c] sm:$0xf]
      %v3200 = vld [vmem:[%s3187 + $0x30] sm:$0xf]
      %v3201 = vld [vmem:[%s3187 + $0x34] sm:$0xf]
      %v3202 = vld [vmem:[%s3187 + $0x38] sm:$0xf]
      %v3203 = vld [vmem:[%s3187 + $0x3c] sm:$0xf]
      %v3205 = vshrl.u32 %v3178, 16
      %v3207 = vrot.slane %v3205, 4
      %v3208 = vshll.u32 %v3178, 16
      %v3210 = vrot.slane %v3208, 5
      %v3211 = vor.u32 %v3207, %v3210
      %v3213 = vshrl.u32 %v3179, 16
      %v3215 = vrot.slane %v3213, 4
      %v3216 = vshll.u32 %v3179, 16
      %v3218 = vrot.slane %v3216, 5
      %v3219 = vor.u32 %v3215, %v3218
      %v3220 = vsel %vm2336, %v3211, %v3219
      %v3222 = vshrl.u32 %v3180, 16
      %v3224 = vrot.slane %v3222, 4
      %v3225 = vshll.u32 %v3180, 16
      %v3227 = vrot.slane %v3225, 5
      %v3228 = vor.u32 %v3224, %v3227
      %v3229 = vsel %vm2336, %v3219, %v3228
      %v3231 = vshrl.u32 %v3181, 16
      %v3233 = vrot.slane %v3231, 4
      %v3234 = vshll.u32 %v3181, 16
      %v3236 = vrot.slane %v3234, 5
      %v3237 = vor.u32 %v3233, %v3236
      %v3238 = vsel %vm2336, %v3228, %v3237
      %v3240 = vshrl.u32 %v3182, 16
      %v3242 = vrot.slane %v3240, 4
      %v3243 = vshll.u32 %v3182, 16
      %v3245 = vrot.slane %v3243, 5
      %v3246 = vor.u32 %v3242, %v3245
      %v3247 = vsel %vm2336, %v3237, %v3246
      %v3249 = vshrl.u32 %v3183, 16
      %v3251 = vrot.slane %v3249, 4
      %v3252 = vshll.u32 %v3183, 16
      %v3254 = vrot.slane %v3252, 5
      %v3255 = vor.u32 %v3251, %v3254
      %v3256 = vsel %vm2336, %v3246, %v3255
      %v3258 = vshrl.u32 %v3184, 16
      %v3260 = vrot.slane %v3258, 4
      %v3261 = vshll.u32 %v3184, 16
      %v3263 = vrot.slane %v3261, 5
      %v3264 = vor.u32 %v3260, %v3263
      %v3265 = vsel %vm2336, %v3255, %v3264
      %v3267 = vshrl.u32 %v3185, 16
      %v3269 = vrot.slane %v3267, 4
      %v3270 = vshll.u32 %v3185, 16
      %v3272 = vrot.slane %v3270, 5
      %v3273 = vor.u32 %v3269, %v3272
      %v3274 = vsel %vm2336, %v3264, %v3273
      %v3276 = vshrl.u32 %v3186, 16
      %v3278 = vrot.slane %v3276, 4
      %v3279 = vshll.u32 %v3186, 16
      %v3281 = vrot.slane %v3279, 5
      %v3282 = vor.u32 %v3278, %v3281
      %v3283 = vsel %vm2336, %v3273, %v3282
      %v3308 = vunpack.c.l.b16 %v3188
      %v3309 = vunpack.c.l.b16 %v3189
      %v3310 = vunpack.c.l.b16 %v3190
      %v3311 = vunpack.c.l.b16 %v3191
      %v3312 = vunpack.c.l.b16 %v3192
      %v3313 = vunpack.c.l.b16 %v3193
      %v3314 = vunpack.c.l.b16 %v3194
      %v3315 = vunpack.c.l.b16 %v3195
      %v3316 = vunpack.c.l.b16 %v3196
      %v3317 = vunpack.c.l.b16 %v3197
      %v3318 = vunpack.c.l.b16 %v3198
      %v3319 = vunpack.c.l.b16 %v3199
      %v3320 = vunpack.c.l.b16 %v3200
      %v3321 = vunpack.c.l.b16 %v3201
      %v3322 = vunpack.c.l.b16 %v3202
      %v3323 = vunpack.c.l.b16 %v3203
      %v3324 = vpack.c.b16 %v3309, %v3308
      %v3325 = vpack.c.b16 %v3311, %v3310
      %v3326 = vpack.c.b16 %v3313, %v3312
      %v3327 = vpack.c.b16 %v3315, %v3314
      %v3328 = vpack.c.b16 %v3317, %v3316
      %v3329 = vpack.c.b16 %v3319, %v3318
      %v3330 = vpack.c.b16 %v3321, %v3320
      %v3331 = vpack.c.b16 %v3323, %v3322
      %3340 = vmatprep.subr.bf16.mxu0 0
      %3341 = vmatpush1.bf16.msra.mxu0 %v3324
      %3342 = vmatprep.subr.bf16.mxu0 0
      %3343 = vmatpush1.bf16.msra.mxu0 %v3325
      %3344 = vmatprep.subr.bf16.mxu0 0
      %3345 = vmatpush1.bf16.msra.mxu0 %v3326
      %3346 = vmatprep.subr.bf16.mxu0 0
      %3347 = vmatpush1.bf16.msra.mxu0 %v3327
      %3348 = vmatprep.subr.bf16.mxu0 0
      %3349 = vmatpush1.bf16.msra.mxu0 %v3328
      %3350 = vmatprep.subr.bf16.mxu0 0
      %3351 = vmatpush1.bf16.msra.mxu0 %v3329
      %3352 = vmatprep.subr.bf16.mxu0 0
      %3353 = vmatpush1.bf16.msra.mxu0 %v3330
      %3354 = vmatprep.subr.bf16.mxu0 0
      %3355 = vmatpush1.bf16.msra.mxu0 %v3331
      %3356 = vmatprep.subr.bf16.mxu0 0
      %3357 = vmatpush1.bf16.msra.mxu0 0
      %3358 = vmatprep.subr.bf16.mxu0 0
      %3359 = vmatpush1.bf16.msra.mxu0 0
      %3360 = vmatprep.subr.bf16.mxu0 0
      %3361 = vmatpush1.bf16.msra.mxu0 0
      %3362 = vmatprep.subr.bf16.mxu0 0
      %3363 = vmatpush1.bf16.msra.mxu0 0
      %3364 = vmatprep.subr.bf16.mxu0 0
      %3365 = vmatpush1.bf16.msra.mxu0 0
      %3366 = vmatprep.subr.bf16.mxu0 0
      %3367 = vmatpush1.bf16.msra.mxu0 0
      %3368 = vmatprep.subr.bf16.mxu0 0
      %3369 = vmatpush1.bf16.msra.mxu0 0
      %3370 = vmatprep.subr.bf16.mxu0 0
      %3371 = vmatpush1.bf16.msra.mxu0 0
      %3372 = vmatprep.mubr.bf16.mxu0 0
      %3373 = vmatmul.mubr.bf16.gmra.mrb[0].mxu0 %v3220
      %v3374 = vpop.f32.mrb[0].mxu0
      %v3375 = vadd.f32 0.0, %v3374
      %v3376 = vpop.f32.mrb[0].mxu0
      %v3377 = vpop.f32.mrb[0].mxu0
      %v3378 = vadd.f32 0.0, %v3377
      %v3379 = vpop.f32.mrb[0].mxu0
      %3380 = vmatprep.mubr.bf16.mxu0 0
      %3381 = vmatmul.mubr.bf16.gmra.mrb[0].mxu0 %v3229
      %v3382 = vpop.f32.mrb[0].mxu0
      %v3383 = vadd.f32 0.0, %v3382
      %v3384 = vpop.f32.mrb[0].mxu0
      %v3385 = vpop.f32.mrb[0].mxu0
      %v3386 = vadd.f32 0.0, %v3385
      %v3387 = vpop.f32.mrb[0].mxu0
      %3388 = vmatprep.mubr.bf16.mxu0 0
      %3389 = vmatmul.mubr.bf16.gmra.mrb[0].mxu0 %v3238
      %v3390 = vpop.f32.mrb[0].mxu0
      %v3391 = vadd.f32 0.0, %v3390
      %v3392 = vpop.f32.mrb[0].mxu0
      %v3393 = vpop.f32.mrb[0].mxu0
      %v3394 = vadd.f32 0.0, %v3393
      %v3395 = vpop.f32.mrb[0].mxu0
      %3396 = vmatprep.mubr.bf16.mxu0 0
      %3397 = vmatmul.mubr.bf16.gmra.mrb[0].mxu0 %v3247
      %v3398 = vpop.f32.mrb[0].mxu0
      %v3399 = vadd.f32 0.0, %v3398
      %v3400 = vpop.f32.mrb[0].mxu0
      %v3401 = vpop.f32.mrb[0].mxu0
      %v3402 = vadd.f32 0.0, %v3401
      %v3403 = vpop.f32.mrb[0].mxu0
      %3404 = vmatprep.mubr.bf16.mxu0 0
      %3405 = vmatmul.mubr.bf16.gmra.mrb[0].mxu0 %v3256
      %v3406 = vpop.f32.mrb[0].mxu0
      %v3407 = vadd.f32 0.0, %v3406
      %v3408 = vpop.f32.mrb[0].mxu0
      %v3409 = vpop.f32.mrb[0].mxu0
      %v3410 = vadd.f32 0.0, %v3409
      %v3411 = vpop.f32.mrb[0].mxu0
      %3412 = vmatprep.mubr.bf16.mxu0 0
      %3413 = vmatmul.mubr.bf16.gmra.mrb[0].mxu0 %v3265
      %v3414 = vpop.f32.mrb[0].mxu0
      %v3415 = vadd.f32 0.0, %v3414
      %v3416 = vpop.f32.mrb[0].mxu0
      %v3417 = vpop.f32.mrb[0].mxu0
      %v3418 = vadd.f32 0.0, %v3417
      %v3419 = vpop.f32.mrb[0].mxu0
      %3420 = vmatprep.mubr.bf16.mxu0 0
      %3421 = vmatmul.mubr.bf16.gmra.mrb[0].mxu0 %v3274
      %v3422 = vpop.f32.mrb[0].mxu0
      %v3423 = vadd.f32 0.0, %v3422
      %v3424 = vpop.f32.mrb[0].mxu0
      %v3425 = vpop.f32.mrb[0].mxu0
      %v3426 = vadd.f32 0.0, %v3425
      %v3427 = vpop.f32.mrb[0].mxu0
      %3428 = vmatprep.mubr.bf16.mxu0 0
      %3429 = vmatmul.mubr.bf16.gmra.mrb[0].mxu0 %v3283
      %v3430 = vpop.f32.mrb[0].mxu0
      %v3431 = vadd.f32 0.0, %v3430
      %v3432 = vpop.f32.mrb[0].mxu0
      %v3433 = vpop.f32.mrb[0].mxu0
      %v3434 = vadd.f32 0.0, %v3433
      %v3435 = vpop.f32.mrb[0].mxu0
      %3436 = vdwg.mxu0
      %v3437 = vld [vmem:[#allocation4] sm:$0xff]
      %v3438 = vld [vmem:[#allocation4 + $0x8] sm:$0xff]
      %v3439 = vld [vmem:[#allocation4 + $0x10] sm:$0xff]
      %v3440 = vld [vmem:[#allocation4 + $0x18] sm:$0xff]
      %v3441 = vld [vmem:[#allocation4 + $0x20] sm:$0xff]
      %v3442 = vld [vmem:[#allocation4 + $0x28] sm:$0xff]
      %v3443 = vld [vmem:[#allocation4 + $0x30] sm:$0xff]
      %v3444 = vld [vmem:[#allocation4 + $0x38] sm:$0xff]
      %v3445 = vld [vmem:[#allocation4 + $0x40] sm:$0xff]
      %v3446 = vld [vmem:[#allocation4 + $0x48] sm:$0xff]
      %v3447 = vld [vmem:[#allocation4 + $0x50] sm:$0xff]
      %v3448 = vld [vmem:[#allocation4 + $0x58] sm:$0xff]
      %v3449 = vld [vmem:[#allocation4 + $0x60] sm:$0xff]
      %v3450 = vld [vmem:[#allocation4 + $0x68] sm:$0xff]
      %v3451 = vld [vmem:[#allocation4 + $0x70] sm:$0xff]
      %v3452 = vld [vmem:[#allocation4 + $0x78] sm:$0xff]
      %v3453 = vadd.f32 %v3437, %v3375
      %v3454 = vadd.f32 %v3438, %v3378
      %v3455 = vadd.f32 %v3439, %v3383
      %v3456 = vadd.f32 %v3440, %v3386
      %v3457 = vadd.f32 %v3441, %v3391
      %v3458 = vadd.f32 %v3442, %v3394
      %v3459 = vadd.f32 %v3443, %v3399
      %v3460 = vadd.f32 %v3444, %v3402
      %v3461 = vadd.f32 %v3445, %v3407
      %v3462 = vadd.f32 %v3446, %v3410
      %v3463 = vadd.f32 %v3447, %v3415
      %v3464 = vadd.f32 %v3448, %v3418
      %v3465 = vadd.f32 %v3449, %v3423
      %v3466 = vadd.f32 %v3450, %v3426
      %v3467 = vadd.f32 %v3451, %v3431
      %v3468 = vadd.f32 %v3452, %v3434
      %3469 = vst [vmem:[#allocation4] sm:$0xff] %v3453
      %3470 = vst [vmem:[#allocation4 + $0x8] sm:$0xff] %v3454
      %3471 = vst [vmem:[#allocation4 + $0x10] sm:$0xff] %v3455
      %3472 = vst [vmem:[#allocation4 + $0x18] sm:$0xff] %v3456
      %3473 = vst [vmem:[#allocation4 + $0x20] sm:$0xff] %v3457
      %3474 = vst [vmem:[#allocation4 + $0x28] sm:$0xff] %v3458
      %3475 = vst [vmem:[#allocation4 + $0x30] sm:$0xff] %v3459
      %3476 = vst [vmem:[#allocation4 + $0x38] sm:$0xff] %v3460
      %3477 = vst [vmem:[#allocation4 + $0x40] sm:$0xff] %v3461
      %3478 = vst [vmem:[#allocation4 + $0x48] sm:$0xff] %v3462
      %3479 = vst [vmem:[#allocation4 + $0x50] sm:$0xff] %v3463
      %3480 = vst [vmem:[#allocation4 + $0x58] sm:$0xff] %v3464
      %3481 = vst [vmem:[#allocation4 + $0x60] sm:$0xff] %v3465
      %3482 = vst [vmem:[#allocation4 + $0x68] sm:$0xff] %v3466
      %3483 = vst [vmem:[#allocation4 + $0x70] sm:$0xff] %v3467
      %3484 = vst [vmem:[#allocation4 + $0x78] sm:$0xff] %v3468
      %v3485 = vld [vmem:[#allocation3 + $0x10] sm:$0xf8]
      %v3486 = vld [vmem:[#allocation3 + $0x18] sm:$0xff]
      %v3487 = vld [vmem:[#allocation3 + $0x20] sm:$0xff]
      %v3488 = vld [vmem:[#allocation3 + $0x28] sm:$0xff]
      %v3489 = vld [vmem:[#allocation3 + $0x30] sm:$0xff]
      %v3490 = vld [vmem:[#allocation3 + $0x38] sm:$0xff]
      %v3491 = vld [vmem:[#allocation3 + $0x40] sm:$0xff]
      %v3492 = vld [vmem:[#allocation3 + $0x48] sm:$0xff]
      %v3493 = vld [vmem:[#allocation3 + $0x50] sm:$0xf]
      %s3494 = scalar_lea.vmem %s7, 384
      %v3495 = vld [vmem:[%s3494] sm:$0xf]
      %v3496 = vld [vmem:[%s3494 + $0x4] sm:$0xf]
      %v3497 = vld [vmem:[%s3494 + $0x8] sm:$0xf]
      %v3498 = vld [vmem:[%s3494 + $0xc] sm:$0xf]
      %v3499 = vld [vmem:[%s3494 + $0x10] sm:$0xf]
      %v3500 = vld [vmem:[%s3494 + $0x14] sm:$0xf]
      %v3501 = vld [vmem:[%s3494 + $0x18] sm:$0xf]
      %v3502 = vld [vmem:[%s3494 + $0x1c] sm:$0xf]
      %v3503 = vld [vmem:[%s3494 + $0x20] sm:$0xf]
      %v3504 = vld [vmem:[%s3494 + $0x24] sm:$0xf]
      %v3505 = vld [vmem:[%s3494 + $0x28] sm:$0xf]
      %v3506 = vld [vmem:[%s3494 + $0x2c] sm:$0xf]
      %v3507 = vld [vmem:[%s3494 + $0x30] sm:$0xf]
      %v3508 = vld [vmem:[%s3494 + $0x34] sm:$0xf]
      %v3509 = vld [vmem:[%s3494 + $0x38] sm:$0xf]
      %v3510 = vld [vmem:[%s3494 + $0x3c] sm:$0xf]
      %v3512 = vshrl.u32 %v3485, 16
      %v3514 = vrot.slane %v3512, 3
      %v3515 = vshll.u32 %v3485, 16
      %v3517 = vrot.slane %v3515, 4
      %v3518 = vor.u32 %v3514, %v3517
      %v3520 = vshrl.u32 %v3486, 16
      %v3522 = vrot.slane %v3520, 3
      %v3523 = vshll.u32 %v3486, 16
      %v3525 = vrot.slane %v3523, 4
      %v3526 = vor.u32 %v3522, %v3525
      %v3527 = vsel %vm1807, %v3518, %v3526
      %v3529 = vshrl.u32 %v3487, 16
      %v3531 = vrot.slane %v3529, 3
      %v3532 = vshll.u32 %v3487, 16
      %v3534 = vrot.slane %v3532, 4
      %v3535 = vor.u32 %v3531, %v3534
      %v3536 = vsel %vm1807, %v3526, %v3535
      %v3538 = vshrl.u32 %v3488, 16
      %v3540 = vrot.slane %v3538, 3
      %v3541 = vshll.u32 %v3488, 16
      %v3543 = vrot.slane %v3541, 4
      %v3544 = vor.u32 %v3540, %v3543
      %v3545 = vsel %vm1807, %v3535, %v3544
      %v3547 = vshrl.u32 %v3489, 16
      %v3549 = vrot.slane %v3547, 3
      %v3550 = vshll.u32 %v3489, 16
      %v3552 = vrot.slane %v3550, 4
      %v3553 = vor.u32 %v3549, %v3552
      %v3554 = vsel %vm1807, %v3544, %v3553
      %v3556 = vshrl.u32 %v3490, 16
      %v3558 = vrot.slane %v3556, 3
      %v3559 = vshll.u32 %v3490, 16
      %v3561 = vrot.slane %v3559, 4
      %v3562 = vor.u32 %v3558, %v3561
      %v3563 = vsel %vm1807, %v3553, %v3562
      %v3565 = vshrl.u32 %v3491, 16
      %v3567 = vrot.slane %v3565, 3
      %v3568 = vshll.u32 %v3491, 16
      %v3570 = vrot.slane %v3568, 4
      %v3571 = vor.u32 %v3567, %v3570
      %v3572 = vsel %vm1807, %v3562, %v3571
      %v3574 = vshrl.u32 %v3492, 16
      %v3576 = vrot.slane %v3574, 3
      %v3577 = vshll.u32 %v3492, 16
      %v3579 = vrot.slane %v3577, 4
      %v3580 = vor.u32 %v3576, %v3579
      %v3581 = vsel %vm1807, %v3571, %v3580
      %v3583 = vshrl.u32 %v3493, 16
      %v3585 = vrot.slane %v3583, 3
      %v3586 = vshll.u32 %v3493, 16
      %v3588 = vrot.slane %v3586, 4
      %v3589 = vor.u32 %v3585, %v3588
      %v3590 = vsel %vm1807, %v3580, %v3589
      %v3615 = vunpack.c.l.b16 %v3495
      %v3616 = vunpack.c.l.b16 %v3496
      %v3617 = vunpack.c.l.b16 %v3497
      %v3618 = vunpack.c.l.b16 %v3498
      %v3619 = vunpack.c.l.b16 %v3499
      %v3620 = vunpack.c.l.b16 %v3500
      %v3621 = vunpack.c.l.b16 %v3501
      %v3622 = vunpack.c.l.b16 %v3502
      %v3623 = vunpack.c.l.b16 %v3503
      %v3624 = vunpack.c.l.b16 %v3504
      %v3625 = vunpack.c.l.b16 %v3505
      %v3626 = vunpack.c.l.b16 %v3506
      %v3627 = vunpack.c.l.b16 %v3507
      %v3628 = vunpack.c.l.b16 %v3508
      %v3629 = vunpack.c.l.b16 %v3509
      %v3630 = vunpack.c.l.b16 %v3510
      %v3631 = vpack.c.b16 %v3616, %v3615
      %v3632 = vpack.c.b16 %v3618, %v3617
      %v3633 = vpack.c.b16 %v3620, %v3619
      %v3634 = vpack.c.b16 %v3622, %v3621
      %v3635 = vpack.c.b16 %v3624, %v3623
      %v3636 = vpack.c.b16 %v3626, %v3625
      %v3637 = vpack.c.b16 %v3628, %v3627
      %v3638 = vpack.c.b16 %v3630, %v3629
      %3647 = vmatprep.subr.bf16.mxu0 0
      %3648 = vmatpush1.bf16.msra.mxu0 %v3631
      %3649 = vmatprep.subr.bf16.mxu0 0
      %3650 = vmatpush1.bf16.msra.mxu0 %v3632
      %3651 = vmatprep.subr.bf16.mxu0 0
      %3652 = vmatpush1.bf16.msra.mxu0 %v3633
      %3653 = vmatprep.subr.bf16.mxu0 0
      %3654 = vmatpush1.bf16.msra.mxu0 %v3634
      %3655 = vmatprep.subr.bf16.mxu0 0
      %3656 = vmatpush1.bf16.msra.mxu0 %v3635
      %3657 = vmatprep.subr.bf16.mxu0 0
      %3658 = vmatpush1.bf16.msra.mxu0 %v3636
      %3659 = vmatprep.subr.bf16.mxu0 0
      %3660 = vmatpush1.bf16.msra.mxu0 %v3637
      %3661 = vmatprep.subr.bf16.mxu0 0
      %3662 = vmatpush1.bf16.msra.mxu0 %v3638
      %3663 = vmatprep.subr.bf16.mxu0 0
      %3664 = vmatpush1.bf16.msra.mxu0 0
      %3665 = vmatprep.subr.bf16.mxu0 0
      %3666 = vmatpush1.bf16.msra.mxu0 0
      %3667 = vmatprep.subr.bf16.mxu0 0
      %3668 = vmatpush1.bf16.msra.mxu0 0
      %3669 = vmatprep.subr.bf16.mxu0 0
      %3670 = vmatpush1.bf16.msra.mxu0 0
      %3671 = vmatprep.subr.bf16.mxu0 0
      %3672 = vmatpush1.bf16.msra.mxu0 0
      %3673 = vmatprep.subr.bf16.mxu0 0
      %3674 = vmatpush1.bf16.msra.mxu0 0
      %3675 = vmatprep.subr.bf16.mxu0 0
      %3676 = vmatpush1.bf16.msra.mxu0 0
      %3677 = vmatprep.subr.bf16.mxu0 0
      %3678 = vmatpush1.bf16.msra.mxu0 0
      %3679 = vmatprep.mubr.bf16.mxu0 0
      %3680 = vmatmul.mubr.bf16.gmra.mrb[0].mxu0 %v3527
      %v3681 = vpop.f32.mrb[0].mxu0
      %v3682 = vadd.f32 0.0, %v3681
      %v3683 = vpop.f32.mrb[0].mxu0
      %v3684 = vpop.f32.mrb[0].mxu0
      %v3685 = vadd.f32 0.0, %v3684
      %v3686 = vpop.f32.mrb[0].mxu0
      %3687 = vmatprep.mubr.bf16.mxu0 0
      %3688 = vmatmul.mubr.bf16.gmra.mrb[0].mxu0 %v3536
      %v3689 = vpop.f32.mrb[0].mxu0
      %v3690 = vadd.f32 0.0, %v3689
      %v3691 = vpop.f32.mrb[0].mxu0
      %v3692 = vpop.f32.mrb[0].mxu0
      %v3693 = vadd.f32 0.0, %v3692
      %v3694 = vpop.f32.mrb[0].mxu0
      %3695 = vmatprep.mubr.bf16.mxu0 0
      %3696 = vmatmul.mubr.bf16.gmra.mrb[0].mxu0 %v3545
      %v3697 = vpop.f32.mrb[0].mxu0
      %v3698 = vadd.f32 0.0, %v3697
      %v3699 = vpop.f32.mrb[0].mxu0
      %v3700 = vpop.f32.mrb[0].mxu0
      %v3701 = vadd.f32 0.0, %v3700
      %v3702 = vpop.f32.mrb[0].mxu0
      %3703 = vmatprep.mubr.bf16.mxu0 0
      %3704 = vmatmul.mubr.bf16.gmra.mrb[0].mxu0 %v3554
      %v3705 = vpop.f32.mrb[0].mxu0
      %v3706 = vadd.f32 0.0, %v3705
      %v3707 = vpop.f32.mrb[0].mxu0
      %v3708 = vpop.f32.mrb[0].mxu0
      %v3709 = vadd.f32 0.0, %v3708
      %v3710 = vpop.f32.mrb[0].mxu0
      %3711 = vmatprep.mubr.bf16.mxu0 0
      %3712 = vmatmul.mubr.bf16.gmra.mrb[0].mxu0 %v3563
      %v3713 = vpop.f32.mrb[0].mxu0
      %v3714 = vadd.f32 0.0, %v3713
      %v3715 = vpop.f32.mrb[0].mxu0
      %v3716 = vpop.f32.mrb[0].mxu0
      %v3717 = vadd.f32 0.0, %v3716
      %v3718 = vpop.f32.mrb[0].mxu0
      %3719 = vmatprep.mubr.bf16.mxu0 0
      %3720 = vmatmul.mubr.bf16.gmra.mrb[0].mxu0 %v3572
      %v3721 = vpop.f32.mrb[0].mxu0
      %v3722 = vadd.f32 0.0, %v3721
      %v3723 = vpop.f32.mrb[0].mxu0
      %v3724 = vpop.f32.mrb[0].mxu0
      %v3725 = vadd.f32 0.0, %v3724
      %v3726 = vpop.f32.mrb[0].mxu0
      %3727 = vmatprep.mubr.bf16.mxu0 0
      %3728 = vmatmul.mubr.bf16.gmra.mrb[0].mxu0 %v3581
      %v3729 = vpop.f32.mrb[0].mxu0
      %v3730 = vadd.f32 0.0, %v3729
      %v3731 = vpop.f32.mrb[0].mxu0
      %v3732 = vpop.f32.mrb[0].mxu0
      %v3733 = vadd.f32 0.0, %v3732
      %v3734 = vpop.f32.mrb[0].mxu0
      %3735 = vmatprep.mubr.bf16.mxu0 0
      %3736 = vmatmul.mubr.bf16.gmra.mrb[0].mxu0 %v3590
      %v3737 = vpop.f32.mrb[0].mxu0
      %v3738 = vadd.f32 0.0, %v3737
      %v3739 = vpop.f32.mrb[0].mxu0
      %v3740 = vpop.f32.mrb[0].mxu0
      %v3741 = vadd.f32 0.0, %v3740
      %v3742 = vpop.f32.mrb[0].mxu0
      %3743 = vdwg.mxu0
      %v3744 = vld [vmem:[#allocation4] sm:$0xff]
      %v3745 = vld [vmem:[#allocation4 + $0x8] sm:$0xff]
      %v3746 = vld [vmem:[#allocation4 + $0x10] sm:$0xff]
      %v3747 = vld [vmem:[#allocation4 + $0x18] sm:$0xff]
      %v3748 = vld [vmem:[#allocation4 + $0x20] sm:$0xff]
      %v3749 = vld [vmem:[#allocation4 + $0x28] sm:$0xff]
      %v3750 = vld [vmem:[#allocation4 + $0x30] sm:$0xff]
      %v3751 = vld [vmem:[#allocation4 + $0x38] sm:$0xff]
      %v3752 = vld [vmem:[#allocation4 + $0x40] sm:$0xff]
      %v3753 = vld [vmem:[#allocation4 + $0x48] sm:$0xff]
      %v3754 = vld [vmem:[#allocation4 + $0x50] sm:$0xff]
      %v3755 = vld [vmem:[#allocation4 + $0x58] sm:$0xff]
      %v3756 = vld [vmem:[#allocation4 + $0x60] sm:$0xff]
      %v3757 = vld [vmem:[#allocation4 + $0x68] sm:$0xff]
      %v3758 = vld [vmem:[#allocation4 + $0x70] sm:$0xff]
      %v3759 = vld [vmem:[#allocation4 + $0x78] sm:$0xff]
      %v3760 = vadd.f32 %v3744, %v3682
      %v3761 = vadd.f32 %v3745, %v3685
      %v3762 = vadd.f32 %v3746, %v3690
      %v3763 = vadd.f32 %v3747, %v3693
      %v3764 = vadd.f32 %v3748, %v3698
      %v3765 = vadd.f32 %v3749, %v3701
      %v3766 = vadd.f32 %v3750, %v3706
      %v3767 = vadd.f32 %v3751, %v3709
      %v3768 = vadd.f32 %v3752, %v3714
      %v3769 = vadd.f32 %v3753, %v3717
      %v3770 = vadd.f32 %v3754, %v3722
      %v3771 = vadd.f32 %v3755, %v3725
      %v3772 = vadd.f32 %v3756, %v3730
      %v3773 = vadd.f32 %v3757, %v3733
      %v3774 = vadd.f32 %v3758, %v3738
      %v3775 = vadd.f32 %v3759, %v3741
      %3776 = vst [vmem:[#allocation4] sm:$0xff] %v3760
      %3777 = vst [vmem:[#allocation4 + $0x8] sm:$0xff] %v3761
      %3778 = vst [vmem:[#allocation4 + $0x10] sm:$0xff] %v3762
      %3779 = vst [vmem:[#allocation4 + $0x18] sm:$0xff] %v3763
      %3780 = vst [vmem:[#allocation4 + $0x20] sm:$0xff] %v3764
      %3781 = vst [vmem:[#allocation4 + $0x28] sm:$0xff] %v3765
      %3782 = vst [vmem:[#allocation4 + $0x30] sm:$0xff] %v3766
      %3783 = vst [vmem:[#allocation4 + $0x38] sm:$0xff] %v3767
      %3784 = vst [vmem:[#allocation4 + $0x40] sm:$0xff] %v3768
      %3785 = vst [vmem:[#allocation4 + $0x48] sm:$0xff] %v3769
      %3786 = vst [vmem:[#allocation4 + $0x50] sm:$0xff] %v3770
      %3787 = vst [vmem:[#allocation4 + $0x58] sm:$0xff] %v3771
      %3788 = vst [vmem:[#allocation4 + $0x60] sm:$0xff] %v3772
      %3789 = vst [vmem:[#allocation4 + $0x68] sm:$0xff] %v3773
      %3790 = vst [vmem:[#allocation4 + $0x70] sm:$0xff] %v3774
      %3791 = vst [vmem:[#allocation4 + $0x78] sm:$0xff] %v3775
      %v3792 = vld [vmem:[#allocation3 + $0x10] sm:$0xf0]
      %v3793 = vld [vmem:[#allocation3 + $0x18] sm:$0xff]
      %v3794 = vld [vmem:[#allocation3 + $0x20] sm:$0xff]
      %v3795 = vld [vmem:[#allocation3 + $0x28] sm:$0xff]
      %v3796 = vld [vmem:[#allocation3 + $0x30] sm:$0xff]
      %v3797 = vld [vmem:[#allocation3 + $0x38] sm:$0xff]
      %v3798 = vld [vmem:[#allocation3 + $0x40] sm:$0xff]
      %v3799 = vld [vmem:[#allocation3 + $0x48] sm:$0xff]
      %v3800 = vld [vmem:[#allocation3 + $0x50] sm:$0xf]
      %s3801 = scalar_lea.vmem %s7, 448
      %v3802 = vld [vmem:[%s3801] sm:$0xf]
      %v3803 = vld [vmem:[%s3801 + $0x4] sm:$0xf]
      %v3804 = vld [vmem:[%s3801 + $0x8] sm:$0xf]
      %v3805 = vld [vmem:[%s3801 + $0xc] sm:$0xf]
      %v3806 = vld [vmem:[%s3801 + $0x10] sm:$0xf]
      %v3807 = vld [vmem:[%s3801 + $0x14] sm:$0xf]
      %v3808 = vld [vmem:[%s3801 + $0x18] sm:$0xf]
      %v3809 = vld [vmem:[%s3801 + $0x1c] sm:$0xf]
      %v3810 = vld [vmem:[%s3801 + $0x20] sm:$0xf]
      %v3811 = vld [vmem:[%s3801 + $0x24] sm:$0xf]
      %v3812 = vld [vmem:[%s3801 + $0x28] sm:$0xf]
      %v3813 = vld [vmem:[%s3801 + $0x2c] sm:$0xf]
      %v3814 = vld [vmem:[%s3801 + $0x30] sm:$0xf]
      %v3815 = vld [vmem:[%s3801 + $0x34] sm:$0xf]
      %v3816 = vld [vmem:[%s3801 + $0x38] sm:$0xf]
      %v3817 = vld [vmem:[%s3801 + $0x3c] sm:$0xf]
      %v3827 = vrot.slane %v3792, 4
      %v3828 = vrot.slane %v3793, 4
      %v3829 = vsel %vm1748, %v3827, %v3828
      %v3830 = vrot.slane %v3794, 4
      %v3831 = vsel %vm1748, %v3828, %v3830
      %v3832 = vrot.slane %v3795, 4
      %v3833 = vsel %vm1748, %v3830, %v3832
      %v3834 = vrot.slane %v3796, 4
      %v3835 = vsel %vm1748, %v3832, %v3834
      %v3836 = vrot.slane %v3797, 4
      %v3837 = vsel %vm1748, %v3834, %v3836
      %v3838 = vrot.slane %v3798, 4
      %v3839 = vsel %vm1748, %v3836, %v3838
      %v3840 = vrot.slane %v3799, 4
      %v3841 = vsel %vm1748, %v3838, %v3840
      %v3842 = vrot.slane %v3800, 4
      %v3843 = vsel %vm1748, %v3840, %v3842
      %v3868 = vunpack.c.l.b16 %v3802
      %v3869 = vunpack.c.l.b16 %v3803
      %v3870 = vunpack.c.l.b16 %v3804
      %v3871 = vunpack.c.l.b16 %v3805
      %v3872 = vunpack.c.l.b16 %v3806
      %v3873 = vunpack.c.l.b16 %v3807
      %v3874 = vunpack.c.l.b16 %v3808
      %v3875 = vunpack.c.l.b16 %v3809
      %v3876 = vunpack.c.l.b16 %v3810
      %v3877 = vunpack.c.l.b16 %v3811
      %v3878 = vunpack.c.l.b16 %v3812
      %v3879 = vunpack.c.l.b16 %v3813
      %v3880 = vunpack.c.l.b16 %v3814
      %v3881 = vunpack.c.l.b16 %v3815
      %v3882 = vunpack.c.l.b16 %v3816
      %v3883 = vunpack.c.l.b16 %v3817
      %v3884 = vpack.c.b16 %v3869, %v3868
      %v3885 = vpack.c.b16 %v3871, %v3870
      %v3886 = vpack.c.b16 %v3873, %v3872
      %v3887 = vpack.c.b16 %v3875, %v3874
      %v3888 = vpack.c.b16 %v3877, %v3876
      %v3889 = vpack.c.b16 %v3879, %v3878
      %v3890 = vpack.c.b16 %v3881, %v3880
      %v3891 = vpack.c.b16 %v3883, %v3882
      %3900 = vmatprep.subr.bf16.mxu0 0
      %3901 = vmatpush1.bf16.msra.mxu0 %v3884
      %3902 = vmatprep.subr.bf16.mxu0 0
      %3903 = vmatpush1.bf16.msra.mxu0 %v3885
      %3904 = vmatprep.subr.bf16.mxu0 0
      %3905 = vmatpush1.bf16.msra.mxu0 %v3886
      %3906 = vmatprep.subr.bf16.mxu0 0
      %3907 = vmatpush1.bf16.msra.mxu0 %v3887
      %3908 = vmatprep.subr.bf16.mxu0 0
      %3909 = vmatpush1.bf16.msra.mxu0 %v3888
      %3910 = vmatprep.subr.bf16.mxu0 0
      %3911 = vmatpush1.bf16.msra.mxu0 %v3889
      %3912 = vmatprep.subr.bf16.mxu0 0
      %3913 = vmatpush1.bf16.msra.mxu0 %v3890
      %3914 = vmatprep.subr.bf16.mxu0 0
      %3915 = vmatpush1.bf16.msra.mxu0 %v3891
      %3916 = vmatprep.subr.bf16.mxu0 0
      %3917 = vmatpush1.bf16.msra.mxu0 0
      %3918 = vmatprep.subr.bf16.mxu0 0
      %3919 = vmatpush1.bf16.msra.mxu0 0
      %3920 = vmatprep.subr.bf16.mxu0 0
      %3921 = vmatpush1.bf16.msra.mxu0 0
      %3922 = vmatprep.subr.bf16.mxu0 0
      %3923 = vmatpush1.bf16.msra.mxu0 0
      %3924 = vmatprep.subr.bf16.mxu0 0
      %3925 = vmatpush1.bf16.msra.mxu0 0
      %3926 = vmatprep.subr.bf16.mxu0 0
      %3927 = vmatpush1.bf16.msra.mxu0 0
      %3928 = vmatprep.subr.bf16.mxu0 0
      %3929 = vmatpush1.bf16.msra.mxu0 0
      %3930 = vmatprep.subr.bf16.mxu0 0
      %3931 = vmatpush1.bf16.msra.mxu0 0
      %3932 = vmatprep.mubr.bf16.mxu0 0
      %3933 = vmatmul.mubr.bf16.gmra.mrb[0].mxu0 %v3829
      %v3934 = vpop.f32.mrb[0].mxu0
      %v3935 = vadd.f32 0.0, %v3934
      %v3936 = vpop.f32.mrb[0].mxu0
      %v3937 = vpop.f32.mrb[0].mxu0
      %v3938 = vadd.f32 0.0, %v3937
      %v3939 = vpop.f32.mrb[0].mxu0
      %3940 = vmatprep.mubr.bf16.mxu0 0
      %3941 = vmatmul.mubr.bf16.gmra.mrb[0].mxu0 %v3831
      %v3942 = vpop.f32.mrb[0].mxu0
      %v3943 = vadd.f32 0.0, %v3942
      %v3944 = vpop.f32.mrb[0].mxu0
      %v3945 = vpop.f32.mrb[0].mxu0
      %v3946 = vadd.f32 0.0, %v3945
      %v3947 = vpop.f32.mrb[0].mxu0
      %3948 = vmatprep.mubr.bf16.mxu0 0
      %3949 = vmatmul.mubr.bf16.gmra.mrb[0].mxu0 %v3833
      %v3950 = vpop.f32.mrb[0].mxu0
      %v3951 = vadd.f32 0.0, %v3950
      %v3952 = vpop.f32.mrb[0].mxu0
      %v3953 = vpop.f32.mrb[0].mxu0
      %v3954 = vadd.f32 0.0, %v3953
      %v3955 = vpop.f32.mrb[0].mxu0
      %3956 = vmatprep.mubr.bf16.mxu0 0
      %3957 = vmatmul.mubr.bf16.gmra.mrb[0].mxu0 %v3835
      %v3958 = vpop.f32.mrb[0].mxu0
      %v3959 = vadd.f32 0.0, %v3958
      %v3960 = vpop.f32.mrb[0].mxu0
      %v3961 = vpop.f32.mrb[0].mxu0
      %v3962 = vadd.f32 0.0, %v3961
      %v3963 = vpop.f32.mrb[0].mxu0
      %3964 = vmatprep.mubr.bf16.mxu0 0
      %3965 = vmatmul.mubr.bf16.gmra.mrb[0].mxu0 %v3837
      %v3966 = vpop.f32.mrb[0].mxu0
      %v3967 = vadd.f32 0.0, %v3966
      %v3968 = vpop.f32.mrb[0].mxu0
      %v3969 = vpop.f32.mrb[0].mxu0
      %v3970 = vadd.f32 0.0, %v3969
      %v3971 = vpop.f32.mrb[0].mxu0
      %3972 = vmatprep.mubr.bf16.mxu0 0
      %3973 = vmatmul.mubr.bf16.gmra.mrb[0].mxu0 %v3839
      %v3974 = vpop.f32.mrb[0].mxu0
      %v3975 = vadd.f32 0.0, %v3974
      %v3976 = vpop.f32.mrb[0].mxu0
      %v3977 = vpop.f32.mrb[0].mxu0
      %v3978 = vadd.f32 0.0, %v3977
      %v3979 = vpop.f32.mrb[0].mxu0
      %3980 = vmatprep.mubr.bf16.mxu0 0
      %3981 = vmatmul.mubr.bf16.gmra.mrb[0].mxu0 %v3841
      %v3982 = vpop.f32.mrb[0].mxu0
      %v3983 = vadd.f32 0.0, %v3982
      %v3984 = vpop.f32.mrb[0].mxu0
      %v3985 = vpop.f32.mrb[0].mxu0
      %v3986 = vadd.f32 0.0, %v3985
      %v3987 = vpop.f32.mrb[0].mxu0
      %3988 = vmatprep.mubr.bf16.mxu0 0
      %3989 = vmatmul.mubr.bf16.gmra.mrb[0].mxu0 %v3843
      %v3990 = vpop.f32.mrb[0].mxu0
      %v3991 = vadd.f32 0.0, %v3990
      %v3992 = vpop.f32.mrb[0].mxu0
      %v3993 = vpop.f32.mrb[0].mxu0
      %v3994 = vadd.f32 0.0, %v3993
      %v3995 = vpop.f32.mrb[0].mxu0
      %3996 = vdwg.mxu0
      %v3997 = vld [vmem:[#allocation4] sm:$0xff]
      %v3998 = vld [vmem:[#allocation4 + $0x8] sm:$0xff]
      %v3999 = vld [vmem:[#allocation4 + $0x10] sm:$0xff]
      %v4000 = vld [vmem:[#allocation4 + $0x18] sm:$0xff]
      %v4001 = vld [vmem:[#allocation4 + $0x20] sm:$0xff]
      %v4002 = vld [vmem:[#allocation4 + $0x28] sm:$0xff]
      %v4003 = vld [vmem:[#allocation4 + $0x30] sm:$0xff]
      %v4004 = vld [vmem:[#allocation4 + $0x38] sm:$0xff]
      %v4005 = vld [vmem:[#allocation4 + $0x40] sm:$0xff]
      %v4006 = vld [vmem:[#allocation4 + $0x48] sm:$0xff]
      %v4007 = vld [vmem:[#allocation4 + $0x50] sm:$0xff]
      %v4008 = vld [vmem:[#allocation4 + $0x58] sm:$0xff]
      %v4009 = vld [vmem:[#allocation4 + $0x60] sm:$0xff]
      %v4010 = vld [vmem:[#allocation4 + $0x68] sm:$0xff]
      %v4011 = vld [vmem:[#allocation4 + $0x70] sm:$0xff]
      %v4012 = vld [vmem:[#allocation4 + $0x78] sm:$0xff]
      %v4013 = vadd.f32 %v3997, %v3935
      %v4014 = vadd.f32 %v3998, %v3938
      %v4015 = vadd.f32 %v3999, %v3943
      %v4016 = vadd.f32 %v4000, %v3946
      %v4017 = vadd.f32 %v4001, %v3951
      %v4018 = vadd.f32 %v4002, %v3954
      %v4019 = vadd.f32 %v4003, %v3959
      %v4020 = vadd.f32 %v4004, %v3962
      %v4021 = vadd.f32 %v4005, %v3967
      %v4022 = vadd.f32 %v4006, %v3970
      %v4023 = vadd.f32 %v4007, %v3975
      %v4024 = vadd.f32 %v4008, %v3978
      %v4025 = vadd.f32 %v4009, %v3983
      %v4026 = vadd.f32 %v4010, %v3986
      %v4027 = vadd.f32 %v4011, %v3991
      %v4028 = vadd.f32 %v4012, %v3994
      %4029 = vst [vmem:[#allocation4] sm:$0xff] %v4013
      %4030 = vst [vmem:[#allocation4 + $0x8] sm:$0xff] %v4014
      %4031 = vst [vmem:[#allocation4 + $0x10] sm:$0xff] %v4015
      %4032 = vst [vmem:[#allocation4 + $0x18] sm:$0xff] %v4016
      %4033 = vst [vmem:[#allocation4 + $0x20] sm:$0xff] %v4017
      %4034 = vst [vmem:[#allocation4 + $0x28] sm:$0xff] %v4018
      %4035 = vst [vmem:[#allocation4 + $0x30] sm:$0xff] %v4019
      %4036 = vst [vmem:[#allocation4 + $0x38] sm:$0xff] %v4020
      %4037 = vst [vmem:[#allocation4 + $0x40] sm:$0xff] %v4021
      %4038 = vst [vmem:[#allocation4 + $0x48] sm:$0xff] %v4022
      %4039 = vst [vmem:[#allocation4 + $0x50] sm:$0xff] %v4023
      %4040 = vst [vmem:[#allocation4 + $0x58] sm:$0xff] %v4024
      %4041 = vst [vmem:[#allocation4 + $0x60] sm:$0xff] %v4025
      %4042 = vst [vmem:[#allocation4 + $0x68] sm:$0xff] %v4026
      %4043 = vst [vmem:[#allocation4 + $0x70] sm:$0xff] %v4027
      %4044 = vst [vmem:[#allocation4 + $0x78] sm:$0xff] %v4028
      %v4045 = vld [vmem:[#allocation3 + $0x10] sm:$0xf0]
      %v4046 = vld [vmem:[#allocation3 + $0x18] sm:$0xff]
      %v4047 = vld [vmem:[#allocation3 + $0x20] sm:$0xff]
      %v4048 = vld [vmem:[#allocation3 + $0x28] sm:$0xff]
      %v4049 = vld [vmem:[#allocation3 + $0x30] sm:$0xff]
      %v4050 = vld [vmem:[#allocation3 + $0x38] sm:$0xff]
      %v4051 = vld [vmem:[#allocation3 + $0x40] sm:$0xff]
      %v4052 = vld [vmem:[#allocation3 + $0x48] sm:$0xff]
      %v4053 = vld [vmem:[#allocation3 + $0x50] sm:$0x1f]
      %s4054 = scalar_lea.vmem %s7, 512
      %v4055 = vld [vmem:[%s4054] sm:$0xf]
      %v4056 = vld [vmem:[%s4054 + $0x4] sm:$0xf]
      %v4057 = vld [vmem:[%s4054 + $0x8] sm:$0xf]
      %v4058 = vld [vmem:[%s4054 + $0xc] sm:$0xf]
      %v4059 = vld [vmem:[%s4054 + $0x10] sm:$0xf]
      %v4060 = vld [vmem:[%s4054 + $0x14] sm:$0xf]
      %v4061 = vld [vmem:[%s4054 + $0x18] sm:$0xf]
      %v4062 = vld [vmem:[%s4054 + $0x1c] sm:$0xf]
      %v4063 = vld [vmem:[%s4054 + $0x20] sm:$0xf]
      %v4064 = vld [vmem:[%s4054 + $0x24] sm:$0xf]
      %v4065 = vld [vmem:[%s4054 + $0x28] sm:$0xf]
      %v4066 = vld [vmem:[%s4054 + $0x2c] sm:$0xf]
      %v4067 = vld [vmem:[%s4054 + $0x30] sm:$0xf]
      %v4068 = vld [vmem:[%s4054 + $0x34] sm:$0xf]
      %v4069 = vld [vmem:[%s4054 + $0x38] sm:$0xf]
      %v4070 = vld [vmem:[%s4054 + $0x3c] sm:$0xf]
      %v4072 = vshrl.u32 %v4045, 16
      %v4074 = vrot.slane %v4072, 4
      %v4075 = vshll.u32 %v4045, 16
      %v4077 = vrot.slane %v4075, 5
      %v4078 = vor.u32 %v4074, %v4077
      %v4080 = vshrl.u32 %v4046, 16
      %v4082 = vrot.slane %v4080, 4
      %v4083 = vshll.u32 %v4046, 16
      %v4085 = vrot.slane %v4083, 5
      %v4086 = vor.u32 %v4082, %v4085
      %v4087 = vsel %vm2336, %v4078, %v4086
      %v4089 = vshrl.u32 %v4047, 16
      %v4091 = vrot.slane %v4089, 4
      %v4092 = vshll.u32 %v4047, 16
      %v4094 = vrot.slane %v4092, 5
      %v4095 = vor.u32 %v4091, %v4094
      %v4096 = vsel %vm2336, %v4086, %v4095
      %v4098 = vshrl.u32 %v4048, 16
      %v4100 = vrot.slane %v4098, 4
      %v4101 = vshll.u32 %v4048, 16
      %v4103 = vrot.slane %v4101, 5
      %v4104 = vor.u32 %v4100, %v4103
      %v4105 = vsel %vm2336, %v4095, %v4104
      %v4107 = vshrl.u32 %v4049, 16
      %v4109 = vrot.slane %v4107, 4
      %v4110 = vshll.u32 %v4049, 16
      %v4112 = vrot.slane %v4110, 5
      %v4113 = vor.u32 %v4109, %v4112
      %v4114 = vsel %vm2336, %v4104, %v4113
      %v4116 = vshrl.u32 %v4050, 16
      %v4118 = vrot.slane %v4116, 4
      %v4119 = vshll.u32 %v4050, 16
      %v4121 = vrot.slane %v4119, 5
      %v4122 = vor.u32 %v4118, %v4121
      %v4123 = vsel %vm2336, %v4113, %v4122
      %v4125 = vshrl.u32 %v4051, 16
      %v4127 = vrot.slane %v4125, 4
      %v4128 = vshll.u32 %v4051, 16
      %v4130 = vrot.slane %v4128, 5
      %v4131 = vor.u32 %v4127, %v4130
      %v4132 = vsel %vm2336, %v4122, %v4131
      %v4134 = vshrl.u32 %v4052, 16
      %v4136 = vrot.slane %v4134, 4
      %v4137 = vshll.u32 %v4052, 16
      %v4139 = vrot.slane %v4137, 5
      %v4140 = vor.u32 %v4136, %v4139
      %v4141 = vsel %vm2336, %v4131, %v4140
      %v4143 = vshrl.u32 %v4053, 16
      %v4145 = vrot.slane %v4143, 4
      %v4146 = vshll.u32 %v4053, 16
      %v4148 = vrot.slane %v4146, 5
      %v4149 = vor.u32 %v4145, %v4148
      %v4150 = vsel %vm2336, %v4140, %v4149
      %v4175 = vunpack.c.l.b16 %v4055
      %v4176 = vunpack.c.l.b16 %v4056
      %v4177 = vunpack.c.l.b16 %v4057
      %v4178 = vunpack.c.l.b16 %v4058
      %v4179 = vunpack.c.l.b16 %v4059
      %v4180 = vunpack.c.l.b16 %v4060
      %v4181 = vunpack.c.l.b16 %v4061
      %v4182 = vunpack.c.l.b16 %v4062
      %v4183 = vunpack.c.l.b16 %v4063
      %v4184 = vunpack.c.l.b16 %v4064
      %v4185 = vunpack.c.l.b16 %v4065
      %v4186 = vunpack.c.l.b16 %v4066
      %v4187 = vunpack.c.l.b16 %v4067
      %v4188 = vunpack.c.l.b16 %v4068
      %v4189 = vunpack.c.l.b16 %v4069
      %v4190 = vunpack.c.l.b16 %v4070
      %v4191 = vpack.c.b16 %v4176, %v4175
      %v4192 = vpack.c.b16 %v4178, %v4177
      %v4193 = vpack.c.b16 %v4180, %v4179
      %v4194 = vpack.c.b16 %v4182, %v4181
      %v4195 = vpack.c.b16 %v4184, %v4183
      %v4196 = vpack.c.b16 %v4186, %v4185
      %v4197 = vpack.c.b16 %v4188, %v4187
      %v4198 = vpack.c.b16 %v4190, %v4189
      %4207 = vmatprep.subr.bf16.mxu0 0
      %4208 = vmatpush1.bf16.msra.mxu0 %v4191
      %4209 = vmatprep.subr.bf16.mxu0 0
      %4210 = vmatpush1.bf16.msra.mxu0 %v4192
      %4211 = vmatprep.subr.bf16.mxu0 0
      %4212 = vmatpush1.bf16.msra.mxu0 %v4193
      %4213 = vmatprep.subr.bf16.mxu0 0
      %4214 = vmatpush1.bf16.msra.mxu0 %v4194
      %4215 = vmatprep.subr.bf16.mxu0 0
      %4216 = vmatpush1.bf16.msra.mxu0 %v4195
      %4217 = vmatprep.subr.bf16.mxu0 0
      %4218 = vmatpush1.bf16.msra.mxu0 %v4196
      %4219 = vmatprep.subr.bf16.mxu0 0
      %4220 = vmatpush1.bf16.msra.mxu0 %v4197
      %4221 = vmatprep.subr.bf16.mxu0 0
      %4222 = vmatpush1.bf16.msra.mxu0 %v4198
      %4223 = vmatprep.subr.bf16.mxu0 0
      %4224 = vmatpush1.bf16.msra.mxu0 0
      %4225 = vmatprep.subr.bf16.mxu0 0
      %4226 = vmatpush1.bf16.msra.mxu0 0
      %4227 = vmatprep.subr.bf16.mxu0 0
      %4228 = vmatpush1.bf16.msra.mxu0 0
      %4229 = vmatprep.subr.bf16.mxu0 0
      %4230 = vmatpush1.bf16.msra.mxu0 0
      %4231 = vmatprep.subr.bf16.mxu0 0
      %4232 = vmatpush1.bf16.msra.mxu0 0
      %4233 = vmatprep.subr.bf16.mxu0 0
      %4234 = vmatpush1.bf16.msra.mxu0 0
      %4235 = vmatprep.subr.bf16.mxu0 0
      %4236 = vmatpush1.bf16.msra.mxu0 0
      %4237 = vmatprep.subr.bf16.mxu0 0
      %4238 = vmatpush1.bf16.msra.mxu0 0
      %4239 = vmatprep.mubr.bf16.mxu0 0
      %4240 = vmatmul.mubr.bf16.gmra.mrb[0].mxu0 %v4087
      %v4241 = vpop.f32.mrb[0].mxu0
      %v4242 = vadd.f32 0.0, %v4241
      %v4243 = vpop.f32.mrb[0].mxu0
      %v4244 = vpop.f32.mrb[0].mxu0
      %v4245 = vadd.f32 0.0, %v4244
      %v4246 = vpop.f32.mrb[0].mxu0
      %4247 = vmatprep.mubr.bf16.mxu0 0
      %4248 = vmatmul.mubr.bf16.gmra.mrb[0].mxu0 %v4096
      %v4249 = vpop.f32.mrb[0].mxu0
      %v4250 = vadd.f32 0.0, %v4249
      %v4251 = vpop.f32.mrb[0].mxu0
      %v4252 = vpop.f32.mrb[0].mxu0
      %v4253 = vadd.f32 0.0, %v4252
      %v4254 = vpop.f32.mrb[0].mxu0
      %4255 = vmatprep.mubr.bf16.mxu0 0
      %4256 = vmatmul.mubr.bf16.gmra.mrb[0].mxu0 %v4105
      %v4257 = vpop.f32.mrb[0].mxu0
      %v4258 = vadd.f32 0.0, %v4257
      %v4259 = vpop.f32.mrb[0].mxu0
      %v4260 = vpop.f32.mrb[0].mxu0
      %v4261 = vadd.f32 0.0, %v4260
      %v4262 = vpop.f32.mrb[0].mxu0
      %4263 = vmatprep.mubr.bf16.mxu0 0
      %4264 = vmatmul.mubr.bf16.gmra.mrb[0].mxu0 %v4114
      %v4265 = vpop.f32.mrb[0].mxu0
      %v4266 = vadd.f32 0.0, %v4265
      %v4267 = vpop.f32.mrb[0].mxu0
      %v4268 = vpop.f32.mrb[0].mxu0
      %v4269 = vadd.f32 0.0, %v4268
      %v4270 = vpop.f32.mrb[0].mxu0
      %4271 = vmatprep.mubr.bf16.mxu0 0
      %4272 = vmatmul.mubr.bf16.gmra.mrb[0].mxu0 %v4123
      %v4273 = vpop.f32.mrb[0].mxu0
      %v4274 = vadd.f32 0.0, %v4273
      %v4275 = vpop.f32.mrb[0].mxu0
      %v4276 = vpop.f32.mrb[0].mxu0
      %v4277 = vadd.f32 0.0, %v4276
      %v4278 = vpop.f32.mrb[0].mxu0
      %4279 = vmatprep.mubr.bf16.mxu0 0
      %4280 = vmatmul.mubr.bf16.gmra.mrb[0].mxu0 %v4132
      %v4281 = vpop.f32.mrb[0].mxu0
      %v4282 = vadd.f32 0.0, %v4281
      %v4283 = vpop.f32.mrb[0].mxu0
      %v4284 = vpop.f32.mrb[0].mxu0
      %v4285 = vadd.f32 0.0, %v4284
      %v4286 = vpop.f32.mrb[0].mxu0
      %4287 = vmatprep.mubr.bf16.mxu0 0
      %4288 = vmatmul.mubr.bf16.gmra.mrb[0].mxu0 %v4141
      %v4289 = vpop.f32.mrb[0].mxu0
      %v4290 = vadd.f32 0.0, %v4289
      %v4291 = vpop.f32.mrb[0].mxu0
      %v4292 = vpop.f32.mrb[0].mxu0
      %v4293 = vadd.f32 0.0, %v4292
      %v4294 = vpop.f32.mrb[0].mxu0
      %4295 = vmatprep.mubr.bf16.mxu0 0
      %4296 = vmatmul.mubr.bf16.gmra.mrb[0].mxu0 %v4150
      %v4297 = vpop.f32.mrb[0].mxu0
      %v4298 = vadd.f32 0.0, %v4297
      %v4299 = vpop.f32.mrb[0].mxu0
      %v4300 = vpop.f32.mrb[0].mxu0
      %v4301 = vadd.f32 0.0, %v4300
      %v4302 = vpop.f32.mrb[0].mxu0
      %4303 = vdwg.mxu0
      %v4304 = vld [vmem:[#allocation4] sm:$0xff]
      %v4305 = vld [vmem:[#allocation4 + $0x8] sm:$0xff]
      %v4306 = vld [vmem:[#allocation4 + $0x10] sm:$0xff]
      %v4307 = vld [vmem:[#allocation4 + $0x18] sm:$0xff]
      %v4308 = vld [vmem:[#allocation4 + $0x20] sm:$0xff]
      %v4309 = vld [vmem:[#allocation4 + $0x28] sm:$0xff]
      %v4310 = vld [vmem:[#allocation4 + $0x30] sm:$0xff]
      %v4311 = vld [vmem:[#allocation4 + $0x38] sm:$0xff]
      %v4312 = vld [vmem:[#allocation4 + $0x40] sm:$0xff]
      %v4313 = vld [vmem:[#allocation4 + $0x48] sm:$0xff]
      %v4314 = vld [vmem:[#allocation4 + $0x50] sm:$0xff]
      %v4315 = vld [vmem:[#allocation4 + $0x58] sm:$0xff]
      %v4316 = vld [vmem:[#allocation4 + $0x60] sm:$0xff]
      %v4317 = vld [vmem:[#allocation4 + $0x68] sm:$0xff]
      %v4318 = vld [vmem:[#allocation4 + $0x70] sm:$0xff]
      %v4319 = vld [vmem:[#allocation4 + $0x78] sm:$0xff]
      %v4320 = vadd.f32 %v4304, %v4242
      %v4321 = vadd.f32 %v4305, %v4245
      %v4322 = vadd.f32 %v4306, %v4250
      %v4323 = vadd.f32 %v4307, %v4253
      %v4324 = vadd.f32 %v4308, %v4258
      %v4325 = vadd.f32 %v4309, %v4261
      %v4326 = vadd.f32 %v4310, %v4266
      %v4327 = vadd.f32 %v4311, %v4269
      %v4328 = vadd.f32 %v4312, %v4274
      %v4329 = vadd.f32 %v4313, %v4277
      %v4330 = vadd.f32 %v4314, %v4282
      %v4331 = vadd.f32 %v4315, %v4285
      %v4332 = vadd.f32 %v4316, %v4290
      %v4333 = vadd.f32 %v4317, %v4293
      %v4334 = vadd.f32 %v4318, %v4298
      %v4335 = vadd.f32 %v4319, %v4301
      %4336 = vst [vmem:[#allocation4] sm:$0xff] %v4320
      %4337 = vst [vmem:[#allocation4 + $0x8] sm:$0xff] %v4321
      %4338 = vst [vmem:[#allocation4 + $0x10] sm:$0xff] %v4322
      %4339 = vst [vmem:[#allocation4 + $0x18] sm:$0xff] %v4323
      %4340 = vst [vmem:[#allocation4 + $0x20] sm:$0xff] %v4324
      %4341 = vst [vmem:[#allocation4 + $0x28] sm:$0xff] %v4325
      %4342 = vst [vmem:[#allocation4 + $0x30] sm:$0xff] %v4326
      %4343 = vst [vmem:[#allocation4 + $0x38] sm:$0xff] %v4327
      %4344 = vst [vmem:[#allocation4 + $0x40] sm:$0xff] %v4328
      %4345 = vst [vmem:[#allocation4 + $0x48] sm:$0xff] %v4329
      %4346 = vst [vmem:[#allocation4 + $0x50] sm:$0xff] %v4330
      %4347 = vst [vmem:[#allocation4 + $0x58] sm:$0xff] %v4331
      %4348 = vst [vmem:[#allocation4 + $0x60] sm:$0xff] %v4332
      %4349 = vst [vmem:[#allocation4 + $0x68] sm:$0xff] %v4333
      %4350 = vst [vmem:[#allocation4 + $0x70] sm:$0xff] %v4334
      %4351 = vst [vmem:[#allocation4 + $0x78] sm:$0xff] %v4335
      %v4352 = vld [vmem:[%s414] sm:$0xf]
      %v4353 = vld [vmem:[%s414 + $0x4] sm:$0xf]
      %v4354 = vld [vmem:[%s414 + $0x8] sm:$0xf]
      %v4355 = vld [vmem:[%s414 + $0xc] sm:$0xf]
      %v4356 = vld [vmem:[%s414 + $0x10] sm:$0xf]
      %v4357 = vld [vmem:[%s414 + $0x14] sm:$0xf]
      %v4358 = vld [vmem:[%s414 + $0x18] sm:$0xf]
      %v4359 = vld [vmem:[%s414 + $0x1c] sm:$0xf]
      %v4360 = vld [vmem:[%s414 + $0x20] sm:$0xf]
      %v4361 = vld [vmem:[%s414 + $0x24] sm:$0xf]
      %v4362 = vld [vmem:[%s414 + $0x28] sm:$0xf]
      %v4363 = vld [vmem:[%s414 + $0x2c] sm:$0xf]
      %v4364 = vld [vmem:[%s414 + $0x30] sm:$0xf]
      %v4365 = vld [vmem:[%s414 + $0x34] sm:$0xf]
      %v4366 = vld [vmem:[%s414 + $0x38] sm:$0xf]
      %v4367 = vld [vmem:[%s414 + $0x3c] sm:$0xf]
      %v4368 = vld [vmem:[#allocation4] sm:$0xff]
      %v4369 = vld [vmem:[#allocation4 + $0x8] sm:$0xff]
      %v4370 = vld [vmem:[#allocation4 + $0x10] sm:$0xff]
      %v4371 = vld [vmem:[#allocation4 + $0x18] sm:$0xff]
      %v4372 = vld [vmem:[#allocation4 + $0x20] sm:$0xff]
      %v4373 = vld [vmem:[#allocation4 + $0x28] sm:$0xff]
      %v4374 = vld [vmem:[#allocation4 + $0x30] sm:$0xff]
      %v4375 = vld [vmem:[#allocation4 + $0x38] sm:$0xff]
      %v4376 = vld [vmem:[#allocation4 + $0x40] sm:$0xff]
      %v4377 = vld [vmem:[#allocation4 + $0x48] sm:$0xff]
      %v4378 = vld [vmem:[#allocation4 + $0x50] sm:$0xff]
      %v4379 = vld [vmem:[#allocation4 + $0x58] sm:$0xff]
      %v4380 = vld [vmem:[#allocation4 + $0x60] sm:$0xff]
      %v4381 = vld [vmem:[#allocation4 + $0x68] sm:$0xff]
      %v4382 = vld [vmem:[#allocation4 + $0x70] sm:$0xff]
      %v4383 = vld [vmem:[#allocation4 + $0x78] sm:$0xff]
      %v4384 = vld [vmem:[%s8] sm:$0x1]
      %v4386 = vlaneseq
      %v4387 = vshrl.u32 %v4386, 7
      %v4388 = vsub.s32 0, %v4387
      %v4389 = vrot.slane %v4384, %v4388
      %v4391 = vadd.f32 %v4368, %v4389
      %v4392 = vadd.f32 %v4369, %v4389
      %v4393 = vadd.f32 %v4370, %v4389
      %v4394 = vadd.f32 %v4371, %v4389
      %v4395 = vadd.f32 %v4372, %v4389
      %v4396 = vadd.f32 %v4373, %v4389
      %v4397 = vadd.f32 %v4374, %v4389
      %v4398 = vadd.f32 %v4375, %v4389
      %v4399 = vadd.f32 %v4376, %v4389
      %v4400 = vadd.f32 %v4377, %v4389
      %v4401 = vadd.f32 %v4378, %v4389
      %v4402 = vadd.f32 %v4379, %v4389
      %v4403 = vadd.f32 %v4380, %v4389
      %v4404 = vadd.f32 %v4381, %v4389
      %v4405 = vadd.f32 %v4382, %v4389
      %v4406 = vadd.f32 %v4383, %v4389
      %v4407 = vld [vmem:[%s9] sm:$0x3]
      %v4424 = vunpack.c.l.b16 %v4352
      %v4425 = vunpack.c.l.b16 %v4353
      %v4426 = vunpack.c.l.b16 %v4354
      %v4427 = vunpack.c.l.b16 %v4355
      %v4428 = vunpack.c.l.b16 %v4356
      %v4429 = vunpack.c.l.b16 %v4357
      %v4430 = vunpack.c.l.b16 %v4358
      %v4431 = vunpack.c.l.b16 %v4359
      %v4432 = vunpack.c.l.b16 %v4360
      %v4433 = vunpack.c.l.b16 %v4361
      %v4434 = vunpack.c.l.b16 %v4362
      %v4435 = vunpack.c.l.b16 %v4363
      %v4436 = vunpack.c.l.b16 %v4364
      %v4437 = vunpack.c.l.b16 %v4365
      %v4438 = vunpack.c.l.b16 %v4366
      %v4439 = vunpack.c.l.b16 %v4367
      %v4440 = vpack.c.b16 %v4425, %v4424
      %v4441 = vpack.c.b16 %v4427, %v4426
      %v4442 = vpack.c.b16 %v4429, %v4428
      %v4443 = vpack.c.b16 %v4431, %v4430
      %v4444 = vpack.c.b16 %v4433, %v4432
      %v4445 = vpack.c.b16 %v4435, %v4434
      %v4446 = vpack.c.b16 %v4437, %v4436
      %v4447 = vpack.c.b16 %v4439, %v4438
      %v4449 = vsel %vm485, %v4440, 0
      %v4452 = vsel %vm485, %v4441, 0
      %v4455 = vsel %vm485, %v4442, 0
      %v4458 = vsel %vm485, %v4443, 0
      %v4461 = vsel %vm485, %v4444, 0
      %v4464 = vsel %vm485, %v4445, 0
      %v4467 = vsel %vm485, %v4446, 0
      %v4470 = vsel %vm485, %v4447, 0
      %v4473 = vsel %vm1483, %v4407, 0
      %4475 = vmatprep.subr.bf16.mxu0 0
      %4476 = vmatpush1.bf16.msra.mxu0 %v4473
      %4477 = vmatprep.subr.bf16.mxu0 0
      %4478 = vmatpush1.bf16.msra.mxu0 0
      %4479 = vmatprep.subr.bf16.mxu0 0
      %4480 = vmatpush1.bf16.msra.mxu0 0
      %4481 = vmatprep.subr.bf16.mxu0 0
      %4482 = vmatpush1.bf16.msra.mxu0 0
      %4483 = vmatprep.subr.bf16.mxu0 0
      %4484 = vmatpush1.bf16.msra.mxu0 0
      %4485 = vmatprep.subr.bf16.mxu0 0
      %4486 = vmatpush1.bf16.msra.mxu0 0
      %4487 = vmatprep.subr.bf16.mxu0 0
      %4488 = vmatpush1.bf16.msra.mxu0 0
      %4489 = vmatprep.subr.bf16.mxu0 0
      %4490 = vmatpush1.bf16.msra.mxu0 0
      %4491 = vmatprep.subr.bf16.mxu0 0
      %4492 = vmatpush1.bf16.msra.mxu0 0
      %4493 = vmatprep.subr.bf16.mxu0 0
      %4494 = vmatpush1.bf16.msra.mxu0 0
      %4495 = vmatprep.subr.bf16.mxu0 0
      %4496 = vmatpush1.bf16.msra.mxu0 0
      %4497 = vmatprep.subr.bf16.mxu0 0
      %4498 = vmatpush1.bf16.msra.mxu0 0
      %4499 = vmatprep.subr.bf16.mxu0 0
      %4500 = vmatpush1.bf16.msra.mxu0 0
      %4501 = vmatprep.subr.bf16.mxu0 0
      %4502 = vmatpush1.bf16.msra.mxu0 0
      %4503 = vmatprep.subr.bf16.mxu0 0
      %4504 = vmatpush1.bf16.msra.mxu0 0
      %4505 = vmatprep.subr.bf16.mxu0 0
      %4506 = vmatpush1.bf16.msra.mxu0 0
      %4507 = vmatprep.mubr.bf16.mxu0 0
      %4508 = vmatmul.mubr.bf16.gmra.mrb[0].mxu0 %v4449
      %v4509 = vpop.f32.mrb[0].mxu0
      %v4510 = vadd.f32 0.0, %v4509
      %v4511 = vpop.f32.mrb[0].mxu0
      %v4512 = vpop.f32.mrb[0].mxu0
      %v4513 = vadd.f32 0.0, %v4512
      %v4514 = vpop.f32.mrb[0].mxu0
      %4515 = vmatprep.mubr.bf16.mxu0 0
      %4516 = vmatmul.mubr.bf16.gmra.mrb[0].mxu0 %v4452
      %v4517 = vpop.f32.mrb[0].mxu0
      %v4518 = vadd.f32 0.0, %v4517
      %v4519 = vpop.f32.mrb[0].mxu0
      %v4520 = vpop.f32.mrb[0].mxu0
      %v4521 = vadd.f32 0.0, %v4520
      %v4522 = vpop.f32.mrb[0].mxu0
      %4523 = vmatprep.mubr.bf16.mxu0 0
      %4524 = vmatmul.mubr.bf16.gmra.mrb[0].mxu0 %v4455
      %v4525 = vpop.f32.mrb[0].mxu0
      %v4526 = vadd.f32 0.0, %v4525
      %v4527 = vpop.f32.mrb[0].mxu0
      %v4528 = vpop.f32.mrb[0].mxu0
      %v4529 = vadd.f32 0.0, %v4528
      %v4530 = vpop.f32.mrb[0].mxu0
      %4531 = vmatprep.mubr.bf16.mxu0 0
      %4532 = vmatmul.mubr.bf16.gmra.mrb[0].mxu0 %v4458
      %v4533 = vpop.f32.mrb[0].mxu0
      %v4534 = vadd.f32 0.0, %v4533
      %v4535 = vpop.f32.mrb[0].mxu0
      %v4536 = vpop.f32.mrb[0].mxu0
      %v4537 = vadd.f32 0.0, %v4536
      %v4538 = vpop.f32.mrb[0].mxu0
      %4539 = vmatprep.mubr.bf16.mxu0 0
      %4540 = vmatmul.mubr.bf16.gmra.mrb[0].mxu0 %v4461
      %v4541 = vpop.f32.mrb[0].mxu0
      %v4542 = vadd.f32 0.0, %v4541
      %v4543 = vpop.f32.mrb[0].mxu0
      %v4544 = vpop.f32.mrb[0].mxu0
      %v4545 = vadd.f32 0.0, %v4544
      %v4546 = vpop.f32.mrb[0].mxu0
      %4547 = vmatprep.mubr.bf16.mxu0 0
      %4548 = vmatmul.mubr.bf16.gmra.mrb[0].mxu0 %v4464
      %v4549 = vpop.f32.mrb[0].mxu0
      %v4550 = vadd.f32 0.0, %v4549
      %v4551 = vpop.f32.mrb[0].mxu0
      %v4552 = vpop.f32.mrb[0].mxu0
      %v4553 = vadd.f32 0.0, %v4552
      %v4554 = vpop.f32.mrb[0].mxu0
      %4555 = vmatprep.mubr.bf16.mxu0 0
      %4556 = vmatmul.mubr.bf16.gmra.mrb[0].mxu0 %v4467
      %v4557 = vpop.f32.mrb[0].mxu0
      %v4558 = vadd.f32 0.0, %v4557
      %v4559 = vpop.f32.mrb[0].mxu0
      %v4560 = vpop.f32.mrb[0].mxu0
      %v4561 = vadd.f32 0.0, %v4560
      %v4562 = vpop.f32.mrb[0].mxu0
      %4563 = vmatprep.mubr.bf16.mxu0 0
      %4564 = vmatmul.mubr.bf16.gmra.mrb[0].mxu0 %v4470
      %v4565 = vpop.f32.mrb[0].mxu0
      %v4566 = vadd.f32 0.0, %v4565
      %v4567 = vpop.f32.mrb[0].mxu0
      %v4568 = vpop.f32.mrb[0].mxu0
      %v4569 = vadd.f32 0.0, %v4568
      %v4570 = vpop.f32.mrb[0].mxu0
      %4571 = vdwg.mxu0
      %v4572 = vadd.f32 %v4391, %v4510
      %v4573 = vadd.f32 %v4392, %v4513
      %v4574 = vadd.f32 %v4393, %v4518
      %v4575 = vadd.f32 %v4394, %v4521
      %v4576 = vadd.f32 %v4395, %v4526
      %v4577 = vadd.f32 %v4396, %v4529
      %v4578 = vadd.f32 %v4397, %v4534
      %v4579 = vadd.f32 %v4398, %v4537
      %v4580 = vadd.f32 %v4399, %v4542
      %v4581 = vadd.f32 %v4400, %v4545
      %v4582 = vadd.f32 %v4401, %v4550
      %v4583 = vadd.f32 %v4402, %v4553
      %v4584 = vadd.f32 %v4403, %v4558
      %v4585 = vadd.f32 %v4404, %v4561
      %v4586 = vadd.f32 %v4405, %v4566
      %v4587 = vadd.f32 %v4406, %v4569
      %v4588 = vmax.f32 %v4572, 0.0
      %v4589 = vmax.f32 %v4573, 0.0
      %v4590 = vmax.f32 %v4574, 0.0
      %v4591 = vmax.f32 %v4575, 0.0
      %v4592 = vmax.f32 %v4576, 0.0
      %v4593 = vmax.f32 %v4577, 0.0
      %v4594 = vmax.f32 %v4578, 0.0
      %v4595 = vmax.f32 %v4579, 0.0
      %v4596 = vmax.f32 %v4580, 0.0
      %v4597 = vmax.f32 %v4581, 0.0
      %v4598 = vmax.f32 %v4582, 0.0
      %v4599 = vmax.f32 %v4583, 0.0
      %v4600 = vmax.f32 %v4584, 0.0
      %v4601 = vmax.f32 %v4585, 0.0
      %v4602 = vmax.f32 %v4586, 0.0
      %v4603 = vmax.f32 %v4587, 0.0
      %4604 = vst [vmem:[%s419] sm:$0xff] %v4588
      %4605 = vst [vmem:[%s419 + $0x8] sm:$0xff] %v4589
      %4606 = vst [vmem:[%s419 + $0x10] sm:$0xff] %v4590
      %4607 = vst [vmem:[%s419 + $0x18] sm:$0xff] %v4591
      %4608 = vst [vmem:[%s419 + $0x20] sm:$0xff] %v4592
      %4609 = vst [vmem:[%s419 + $0x28] sm:$0xff] %v4593
      %4610 = vst [vmem:[%s419 + $0x30] sm:$0xff] %v4594
      %4611 = vst [vmem:[%s419 + $0x38] sm:$0xff] %v4595
      %4612 = vst [vmem:[%s419 + $0x40] sm:$0xff] %v4596
      %4613 = vst [vmem:[%s419 + $0x48] sm:$0xff] %v4597
      %4614 = vst [vmem:[%s419 + $0x50] sm:$0xff] %v4598
      %4615 = vst [vmem:[%s419 + $0x58] sm:$0xff] %v4599
      %4616 = vst [vmem:[%s419 + $0x60] sm:$0xff] %v4600
      %4617 = vst [vmem:[%s419 + $0x68] sm:$0xff] %v4601
      %4618 = vst [vmem:[%s419 + $0x70] sm:$0xff] %v4602
      %4619 = vst [vmem:[%s419 + $0x78] sm:$0xff] %v4603
      %p4620 = scmp.lt.s32.totalorder %s21, 1
      %s4621 = scalar_select %p4620, %s21, 1
      %s4622 = smul.addr %s4621, 16
      %s4623 = smul.addr %s4622, 8
      %s4624 = scalar_lea.vmem %s10, %s4623
      // Predicated region
      $region61: #{iresidual_block_forward.1} parent=59 // pred_check
        %p4625 = pneg %p269
      $region62: #{iresidual_block_forward.1} parent=59 // pred_check_branch
        %4627 = sbr.rel (%p4625) target = $region64
      $region63: #{iresidual_block_forward.1} parent=59 // pred_region
        _
      $region64: #{iresidual_block_forward.1} parent=59 // pred_fallthru
        _
    $region60: #{iresidual_block_forward.1} parent=5 // pred_fallthru
      _
    %p4628 = scmp.le.s32.totalorder 2, %s16
    // Predicated region
    $region65: #{iresidual_block_forward.1} parent=5 // pred_check
      %p4629 = pneg %p4628
    $region66: #{iresidual_block_forward.1} parent=5 // pred_check_branch
      %4631 = sbr.rel (%p4629) target = $region68
    $region67: #{iresidual_block_forward.1} parent=5 // pred_region
      %s4632 = ssub.s32 %s16, 2
      // Predicated region
      $region69: #{iresidual_block_forward.1} parent=67 // pred_check
        %p4633 = pneg %p275
      $region70: #{iresidual_block_forward.1} parent=67 // pred_check_branch
        %4635 = sbr.rel (%p4633) target = $region72
      $region71: #{iresidual_block_forward.1} parent=67 // pred_region
        %p4636 = scmp.lt.s32.totalorder %s22, 1
        %s4637 = scalar_select %p4636, %s22, 1
        %s4638 = smul.addr %s4637, 16
        %s4639 = smul.addr %s4638, 8
        %s4640 = scalar_lea.vmem %s10, %s4639
      $region72: #{iresidual_block_forward.1} parent=67 // pred_fallthru
        _
    $region68: #{iresidual_block_forward.1} parent=5 // pred_fallthru
      _
  $region6: #{iresidual_block_forward.1} parent=0 // loop_footer
    %s20 = sadd.s32 1, %s16
  $region7: #{iresidual_block_forward.1} parent=0 // loop_footer_branch
    %15 = sbr.rel target = $region3
  $region8: #{iresidual_block_forward.1} parent=0 // loop_exit
    _

</llo_original>
